<compile_context>
chip_gen: v5e
topology: v5e:2x2
jax: 0.10.0
libtpu: 0.0.40
codegen_flags: <defaults>
</compile_context>

<pallas_src>
import jax
import jax.numpy as jnp
from jax import lax
from jax.experimental import pallas as pl
from jax.experimental.pallas import tpu as pltpu

# small, deterministic problem sizes
T, B = 8, 4          # seq_len, batch
VOCAB = 50           # input_dim
VPAD = 128           # vocab padded to one lane tile for the in-kernel one-hot gather
E = 32               # emb_dim
H = 32               # hid_dim
BP = 8               # batch padded to a full sublane width (pad rows dropped at the end)
LANE = 128           # lane-tile width; fused gate buffers are 2*LANE wide


def _gru_step(gi, h, wh, bhn):
    """One GRU cell update (PyTorch gate order r, z, n).

    gi  : [BP, 3H] precomputed input gates = x @ W_ih + b_ih (+ b_hh folded for r,z)
    h   : [BP, H]  previous hidden state
    wh  : [H, 3H]  recurrent weight, pre-transposed
    bhn : [BP, H]  recurrent bias of the n gate, pre-broadcast (must stay inside
                   r * (W_hn h + b_hn) to match PyTorch, so it is NOT folded).
    """
    gh = jnp.dot(h, wh, preferred_element_type=jnp.float32)              # [BP, 3H]
    rz = jax.nn.sigmoid(gi[:, 0:2 * H] + gh[:, 0:2 * H])                 # fused r|z sigmoid
    r = rz[:, 0:H]
    z = rz[:, H:2 * H]
    n = jnp.tanh(gi[:, 2 * H:3 * H] + r * (gh[:, 2 * H:3 * H] + bhn))
    return n + z * (h - n)                                               # == (1-z)*n + z*h


def encoder_kernel(ids_ref, tab_ref,
                   w0_ref, b0_ref,
                   w1t_ref, w1b_ref, b1_ref,
                   wh0f_ref, wh0b_ref, wh1f_ref, wh1b_ref,
                   bhn_ref,
                   fcw_ref, fcb_ref,
                   hid_ref,
                   g_ref, l0f_ref, l0b_ref):
    # ---- fused embedding gather: one-hot @ table on the MXU ----
    ids = ids_ref[...]                                                    # [T*BP, 1] int32
    onehot = (lax.broadcasted_iota(jnp.int32, (T * BP, VPAD), 1) == ids
              ).astype(jnp.float32)                                       # [T*BP, VPAD]
    emb = jnp.dot(onehot, tab_ref[...], preferred_element_type=jnp.float32)  # [T*BP, E]
    # TODO(synk): training-mode dropout (Bernoulli mask on emb) not implemented; eval identity.

    bhn = bhn_ref[...]                                                    # [BP, 4H]
    h_init = jnp.zeros((BP, H), jnp.float32)

    # ---- layer 0: ONE fused input-gate GEMM (fwd gates lanes 0:96, bwd 128:224) ----
    g_ref[...] = jnp.dot(emb, w0_ref[...],
                         preferred_element_type=jnp.float32) + b0_ref[...]

    wh0f = wh0f_ref[...]
    wh0b = wh0b_ref[...]
    bhn0f = bhn[:, 0 * H:1 * H]
    bhn0b = bhn[:, 1 * H:2 * H]

    # layer-0 recurrence: fwd + bwd chains interleaved, fully unrolled
    hf, hb = h_init, h_init
    for i in range(T):
        tf, tb = i, T - 1 - i
        hf = _gru_step(g_ref[tf * BP:(tf + 1) * BP, 0:3 * H], hf, wh0f, bhn0f)
        hb = _gru_step(g_ref[tb * BP:(tb + 1) * BP, LANE:LANE + 3 * H], hb, wh0b, bhn0b)
        l0f_ref[tf * BP:(tf + 1) * BP, :] = hf                            # full-width stores,
        l0b_ref[tb * BP:(tb + 1) * BP, :] = hb                            # no lane offsets
    h0, h1 = hf, hb                                                       # layer-0 final hiddens

    # ---- layer 1: fused input-gate GEMMs over the two staged layer-0 halves ----
    g_ref[...] = (jnp.dot(l0f_ref[...], w1t_ref[...], preferred_element_type=jnp.float32)
                  + jnp.dot(l0b_ref[...], w1b_ref[...], preferred_element_type=jnp.float32)
                  + b1_ref[...])

    # load layer-1 recurrent weights only now (shorter live ranges across the unroll)
    wh1f = wh1f_ref[...]
    wh1b = wh1b_ref[...]
    bhn1f = bhn[:, 2 * H:3 * H]
    bhn1b = bhn[:, 3 * H:4 * H]

    hf, hb = h_init, h_init
    for i in range(T):
        tf, tb = i, T - 1 - i
        hf = _gru_step(g_ref[tf * BP:(tf + 1) * BP, 0:3 * H], hf, wh1f, bhn1f)
        hb = _gru_step(g_ref[tb * BP:(tb + 1) * BP, LANE:LANE + 3 * H], hb, wh1b, bhn1b)
    h2, h3 = hf, hb                                                       # layer-1 final hiddens

    # ---- p = cat(h3, h2, h1, h0); hid = relu(p @ Wfc + b) as ONE matmul ----
    p = jnp.concatenate([h3, h2, h1, h0], axis=1)                         # [BP, 4H]
    hid = jnp.dot(p, fcw_ref[...], preferred_element_type=jnp.float32) + fcb_ref[...]
    hid_ref[...] = jnp.maximum(hid, 0.0)                                  # ReLU


def pack_params(p):
    """One-time repack of PyTorch-layout weights into the kernel's fused layout."""
    def pack_layer(wi_f, bi_f, bh_f, wi_b, bi_b, bh_b):
        in_dim = wi_f.shape[0]
        w = jnp.zeros((in_dim, 2 * LANE), jnp.float32)
        w = w.at[:, 0:3 * H].set(wi_f).at[:, LANE:LANE + 3 * H].set(wi_b)
        # fold the r,z halves of the recurrent bias into the input-gate bias
        bf = jnp.concatenate([bi_f[:, :2 * H] + bh_f[:, :2 * H], bi_f[:, 2 * H:]], axis=1)
        bb = jnp.concatenate([bi_b[:, :2 * H] + bh_b[:, :2 * H], bi_b[:, 2 * H:]], axis=1)
        b = jnp.zeros((1, 2 * LANE), jnp.float32)
        b = b.at[:, 0:3 * H].set(bf).at[:, LANE:LANE + 3 * H].set(bb)
        return w, b

    w0, b0 = pack_layer(p["wi0f"], p["bi0f"], p["bh0f"],
                        p["wi0b"], p["bi0b"], p["bh0b"])
    w1, b1 = pack_layer(p["wi1f"], p["bi1f"], p["bh1f"],
                        p["wi1b"], p["bi1b"], p["bh1b"])
    bhn = jnp.concatenate([p["bh0f"][:, 2 * H:], p["bh0b"][:, 2 * H:],
                           p["bh1f"][:, 2 * H:], p["bh1b"][:, 2 * H:]], axis=1)  # [1, 4H]
    tab = jnp.zeros((VPAD, E), jnp.float32).at[:VOCAB, :].set(p["embedding"])
    return {
        "tab": tab,
        "w0": w0, "b0": b0,
        "w1t": w1[0:H, :], "w1b": w1[H:2 * H, :], "b1": b1,       # split rows: fwd-half / bwd-half of l0
        "wh0f": p["wh0f"], "wh0b": p["wh0b"], "wh1f": p["wh1f"], "wh1b": p["wh1b"],
        "bhn": jnp.broadcast_to(bhn, (BP, 4 * H)),                # pre-broadcast b_hn (no in-loop broadcast)
        "fcw": p["fcw"], "fcb": p["fcb"],
    }


@jax.jit
def encoder_forward(src, q):
    # only glue left outside the kernel: pad batch 4->8 and flatten ids to [T*BP, 1]
    ids = jnp.pad(src, ((0, 0), (0, BP - B))).reshape(T * BP, 1).astype(jnp.int32)

    vmem = pl.BlockSpec(memory_space=pltpu.MemorySpace.VMEM)
    args = (ids, q["tab"],
            q["w0"], q["b0"],
            q["w1t"], q["w1b"], q["b1"],
            q["wh0f"], q["wh0b"], q["wh1f"], q["wh1b"],
            q["bhn"],
            q["fcw"], q["fcb"])
    hid = pl.pallas_call(
        encoder_kernel,
        out_shape=jax.ShapeDtypeStruct((BP, H), jnp.float32),
        in_specs=[vmem] * len(args),
        out_specs=vmem,
        scratch_shapes=[pltpu.VMEM((T * BP, 2 * LANE), jnp.float32),  # fused input gates (both dirs)
                        pltpu.VMEM((T * BP, H), jnp.float32),         # layer-0 fwd outputs
                        pltpu.VMEM((T * BP, H), jnp.float32)],        # layer-0 bwd outputs
    )(*args)
    # torch.chunk(hidden, 2, dim=1) -> (syntax, content); drop padded batch rows
    return hid[:B, :H // 2], hid[:B, H // 2:]


# ---------------- pure-JAX reference (same math, no Pallas) ----------------
def _gru_cell_ref(x, h, wi, wh, bi, bh):
    gi = x @ wi + bi
    gh = h @ wh + bh
    r = jax.nn.sigmoid(gi[:, :H] + gh[:, :H])
    z = jax.nn.sigmoid(gi[:, H:2 * H] + gh[:, H:2 * H])
    n = jnp.tanh(gi[:, 2 * H:] + r * gh[:, 2 * H:])
    return (1.0 - z) * n + z * h


def encoder_ref(src, p):
    emb = p["embedding"][src].astype(jnp.float32)
    h = jnp.zeros((B, H)); outs_f = []
    for t in range(T):
        h = _gru_cell_ref(emb[t], h, p["wi0f"], p["wh0f"], p["bi0f"], p["bh0f"])
        outs_f.append(h)
    h0 = h
    h = jnp.zeros((B, H)); outs_b = [None] * T
    for t in range(T - 1, -1, -1):
        h = _gru_cell_ref(emb[t], h, p["wi0b"], p["wh0b"], p["bi0b"], p["bh0b"])
        outs_b[t] = h
    h1 = h
    l0 = [jnp.concatenate([outs_f[t], outs_b[t]], axis=1) for t in range(T)]
    h = jnp.zeros((B, H))
    for t in range(T):
        h = _gru_cell_ref(l0[t], h, p["wi1f"], p["wh1f"], p["bi1f"], p["bh1f"])
    h2 = h
    h = jnp.zeros((B, H))
    for t in range(T - 1, -1, -1):
        h = _gru_cell_ref(l0[t], h, p["wi1b"], p["wh1b"], p["bi1b"], p["bh1b"])
    h3 = h
    pcat = jnp.concatenate([h3, h2, h1, h0], axis=1)                      # [B, 4H]
    hid = jax.nn.relu(pcat @ p["fcw"] + p["fcb"])
    return hid[:, :H // 2], hid[:, H // 2:]


def init_params(key):
    ks = jax.random.split(key, 32)
    s = 1.0 / float(jnp.sqrt(jnp.float32(H)))

    def u(k, shape):
        return jax.random.uniform(k, shape, jnp.float32, -s, s)

    i = iter(range(1, 32))
    params = {"embedding": 0.1 * jax.random.normal(ks[0], (VOCAB, E), jnp.float32)}
    # layer 0 (input E), layer 1 (input 2H); weights stored pre-transposed, biases [1, 3H]
    for name, in_dim in (("0f", E), ("0b", E), ("1f", 2 * H), ("1b", 2 * H)):
        params["wi" + name] = u(ks[next(i)], (in_dim, 3 * H))
        params["wh" + name] = u(ks[next(i)], (H, 3 * H))
        params["bi" + name] = u(ks[next(i)], (1, 3 * H))
        params["bh" + name] = u(ks[next(i)], (1, 3 * H))
    params["fcw"] = u(ks[next(i)], (4 * H, H))                            # Linear(4H, H), transposed
    params["fcb"] = u(ks[next(i)], (1, H))
    return params


if __name__ == "__main__":
    key = jax.random.PRNGKey(0)
    k_src, k_par = jax.random.split(key)
    src = jax.random.randint(k_src, (T, B), 0, VOCAB, dtype=jnp.int32)    # [T, B] token ids
    params = init_params(k_par)
    packed = pack_params(params)                                          # one-time repack

    syn, con = encoder_forward(src, packed)
    jax.block_until_ready((syn, con))

    syn_ref, con_ref = encoder_ref(src, params)
    assert syn.shape == (B, H // 2) and con.shape == (B, H // 2)
    # f32 MXU dots are multi-pass bf16; observed error << 1e-5, tolerance kept with margin
    assert bool(jnp.allclose(syn, syn_ref, atol=1e-4, rtol=1e-4))
    assert bool(jnp.allclose(con, con_ref, atol=1e-4, rtol=1e-4))
    print("KERNEL_OK")
</pallas_src>

<mosaic_0001>
module attributes {stable_mosaic.version = 11 : i64} {
  func.func @encoder_kernel(%arg0: memref<64x1xi32, #tpu.memory_space<vmem>>, %arg1: memref<128x32xf32, #tpu.memory_space<vmem>>, %arg2: memref<32x256xf32, #tpu.memory_space<vmem>>, %arg3: memref<1x256xf32, #tpu.memory_space<vmem>>, %arg4: memref<32x256xf32, #tpu.memory_space<vmem>>, %arg5: memref<32x256xf32, #tpu.memory_space<vmem>>, %arg6: memref<1x256xf32, #tpu.memory_space<vmem>>, %arg7: memref<32x96xf32, #tpu.memory_space<vmem>>, %arg8: memref<32x96xf32, #tpu.memory_space<vmem>>, %arg9: memref<32x96xf32, #tpu.memory_space<vmem>>, %arg10: memref<32x96xf32, #tpu.memory_space<vmem>>, %arg11: memref<8x128xf32, #tpu.memory_space<vmem>>, %arg12: memref<128x32xf32, #tpu.memory_space<vmem>>, %arg13: memref<1x32xf32, #tpu.memory_space<vmem>>, %arg14: memref<8x32xf32, #tpu.memory_space<vmem>>, %arg15: memref<64x256xf32, #tpu.memory_space<vmem>>, %arg16: memref<64x32xf32, #tpu.memory_space<vmem>>, %arg17: memref<64x32xf32, #tpu.memory_space<vmem>>) attributes {dimension_semantics = [], scalar_prefetch = 0 : i64, scratch_operands = 3 : i64, tpu.core_type = #tpu.core_type<tc>} {
    %c0 = arith.constant 0 : index
    %c0_0 = arith.constant 0 : index
    %0 = vector.load %arg0[%c0, %c0_0] : memref<64x1xi32, #tpu.memory_space<vmem>>, vector<64x1xi32>
    %1 = tpu.iota {dimensions = array<i32: 1>} : vector<64x128xi32>
    %2 = vector.broadcast %0 : vector<64x1xi32> to vector<64x128xi32>
    %3 = arith.cmpi eq, %1, %2 : vector<64x128xi32>
    %4 = arith.extui %3 : vector<64x128xi1> to vector<64x128xi32>
    %5 = arith.sitofp %4 : vector<64x128xi32> to vector<64x128xf32>
    %c0_1 = arith.constant 0 : index
    %c0_2 = arith.constant 0 : index
    %6 = vector.load %arg1[%c0_1, %c0_2] : memref<128x32xf32, #tpu.memory_space<vmem>>, vector<128x32xf32>
    %cst = arith.constant dense<0.000000e+00> : vector<64x32xf32>
    %7 = tpu.matmul %5, %6, %cst {dimension_numbers = #tpu.dot_dimension_numbers<[1], [0], [0], [1], [0, 0, 1, 1], [], []>} : vector<64x128xf32>, vector<128x32xf32>, vector<64x32xf32> -> vector<64x32xf32>
    %c0_3 = arith.constant 0 : index
    %c0_4 = arith.constant 0 : index
    %8 = vector.load %arg11[%c0_3, %c0_4] : memref<8x128xf32, #tpu.memory_space<vmem>>, vector<8x128xf32>
    %cst_5 = arith.constant 0.000000e+00 : f32
    %9 = vector.broadcast %cst_5 : f32 to vector<8x32xf32>
    %c0_6 = arith.constant 0 : index
    %c0_7 = arith.constant 0 : index
    %10 = vector.load %arg2[%c0_6, %c0_7] : memref<32x256xf32, #tpu.memory_space<vmem>>, vector<32x256xf32>
    %cst_8 = arith.constant dense<0.000000e+00> : vector<64x256xf32>
    %11 = tpu.matmul %7, %10, %cst_8 {dimension_numbers = #tpu.dot_dimension_numbers<[1], [0], [0], [1], [0, 0, 1, 1], [], []>} : vector<64x32xf32>, vector<32x256xf32>, vector<64x256xf32> -> vector<64x256xf32>
    %c0_9 = arith.constant 0 : index
    %c0_10 = arith.constant 0 : index
    %12 = vector.load %arg3[%c0_9, %c0_10] : memref<1x256xf32, #tpu.memory_space<vmem>>, vector<1x256xf32>
    %13 = vector.broadcast %12 : vector<1x256xf32> to vector<64x256xf32>
    %14 = arith.addf %11, %13 : vector<64x256xf32>
    %c0_11 = arith.constant 0 : index
    %c0_12 = arith.constant 0 : index
    %15 = vector.load %arg15[%c0_11, %c0_12] : memref<64x256xf32, #tpu.memory_space<vmem>>, vector<64x256xf32>
    tpu.vector_store %arg15[%c0_11, %c0_12], %14 {strides = array<i32>} : memref<64x256xf32, #tpu.memory_space<vmem>>, vector<64x256xf32>,
    %c0_13 = arith.constant 0 : index
    %c0_14 = arith.constant 0 : index
    %16 = vector.load %arg7[%c0_13, %c0_14] : memref<32x96xf32, #tpu.memory_space<vmem>>, vector<32x96xf32>
    %c0_15 = arith.constant 0 : index
    %c0_16 = arith.constant 0 : index
    %17 = vector.load %arg8[%c0_15, %c0_16] : memref<32x96xf32, #tpu.memory_space<vmem>>, vector<32x96xf32>
    %18 = vector.extract_strided_slice %8 {offsets = [0, 0], sizes = [8, 32], strides = [1, 1]} : vector<8x128xf32> to vector<8x32xf32>
    %19 = vector.extract_strided_slice %8 {offsets = [0, 32], sizes = [8, 32], strides = [1, 1]} : vector<8x128xf32> to vector<8x32xf32>
    %c0_17 = arith.constant 0 : index
    %c0_18 = arith.constant 0 : index
    %20 = vector.load %arg15[%c0_17, %c0_18] : memref<64x256xf32, #tpu.memory_space<vmem>>, vector<8x96xf32>
    %cst_19 = arith.constant dense<0.000000e+00> : vector<8x96xf32>
    %21 = tpu.matmul %9, %16, %cst_19 {dimension_numbers = #tpu.dot_dimension_numbers<[1], [0], [0], [1], [0, 0, 1, 1], [], []>} : vector<8x32xf32>, vector<32x96xf32>, vector<8x96xf32> -> vector<8x96xf32>
    %22 = vector.extract_strided_slice %20 {offsets = [0, 0], sizes = [8, 64], strides = [1, 1]} : vector<8x96xf32> to vector<8x64xf32>
    %23 = vector.extract_strided_slice %21 {offsets = [0, 0], sizes = [8, 64], strides = [1, 1]} : vector<8x96xf32> to vector<8x64xf32>
    %24 = arith.addf %22, %23 : vector<8x64xf32>
    %25 = arith.negf %24 : vector<8x64xf32>
    %26 = math.exp %25 : vector<8x64xf32>
    %cst_20 = arith.constant 1.000000e+00 : f32
    %27 = vector.broadcast %cst_20 : f32 to vector<8x64xf32>
    %28 = arith.addf %27, %26 : vector<8x64xf32>
    %29 = arith.divf %27, %28 : vector<8x64xf32>
    %30 = vector.extract_strided_slice %29 {offsets = [0, 0], sizes = [8, 32], strides = [1, 1]} : vector<8x64xf32> to vector<8x32xf32>
    %31 = vector.extract_strided_slice %29 {offsets = [0, 32], sizes = [8, 32], strides = [1, 1]} : vector<8x64xf32> to vector<8x32xf32>
    %32 = vector.extract_strided_slice %20 {offsets = [0, 64], sizes = [8, 32], strides = [1, 1]} : vector<8x96xf32> to vector<8x32xf32>
    %33 = vector.extract_strided_slice %21 {offsets = [0, 64], sizes = [8, 32], strides = [1, 1]} : vector<8x96xf32> to vector<8x32xf32>
    %34 = arith.addf %33, %18 : vector<8x32xf32>
    %35 = arith.mulf %30, %34 : vector<8x32xf32>
    %36 = arith.addf %32, %35 : vector<8x32xf32>
    %37 = math.tanh %36 : vector<8x32xf32>
    %38 = arith.subf %9, %37 : vector<8x32xf32>
    %39 = arith.mulf %31, %38 : vector<8x32xf32>
    %40 = arith.addf %37, %39 : vector<8x32xf32>
    %c56 = arith.constant 56 : index
    %c128 = arith.constant 128 : index
    %41 = vector.load %arg15[%c56, %c128] : memref<64x256xf32, #tpu.memory_space<vmem>>, vector<8x96xf32>
    %cst_21 = arith.constant dense<0.000000e+00> : vector<8x96xf32>
    %42 = tpu.matmul %9, %17, %cst_21 {dimension_numbers = #tpu.dot_dimension_numbers<[1], [0], [0], [1], [0, 0, 1, 1], [], []>} : vector<8x32xf32>, vector<32x96xf32>, vector<8x96xf32> -> vector<8x96xf32>
    %43 = vector.extract_strided_slice %41 {offsets = [0, 0], sizes = [8, 64], strides = [1, 1]} : vector<8x96xf32> to vector<8x64xf32>
    %44 = vector.extract_strided_slice %42 {offsets = [0, 0], sizes = [8, 64], strides = [1, 1]} : vector<8x96xf32> to vector<8x64xf32>
    %45 = arith.addf %43, %44 : vector<8x64xf32>
    %46 = arith.negf %45 : vector<8x64xf32>
    %47 = math.exp %46 : vector<8x64xf32>
    %cst_22 = arith.constant 1.000000e+00 : f32
    %48 = vector.broadcast %cst_22 : f32 to vector<8x64xf32>
    %49 = arith.addf %48, %47 : vector<8x64xf32>
    %50 = arith.divf %48, %49 : vector<8x64xf32>
    %51 = vector.extract_strided_slice %50 {offsets = [0, 0], sizes = [8, 32], strides = [1, 1]} : vector<8x64xf32> to vector<8x32xf32>
    %52 = vector.extract_strided_slice %50 {offsets = [0, 32], sizes = [8, 32], strides = [1, 1]} : vector<8x64xf32> to vector<8x32xf32>
    %53 = vector.extract_strided_slice %41 {offsets = [0, 64], sizes = [8, 32], strides = [1, 1]} : vector<8x96xf32> to vector<8x32xf32>
    %54 = vector.extract_strided_slice %42 {offsets = [0, 64], sizes = [8, 32], strides = [1, 1]} : vector<8x96xf32> to vector<8x32xf32>
    %55 = arith.addf %54, %19 : vector<8x32xf32>
    %56 = arith.mulf %51, %55 : vector<8x32xf32>
    %57 = arith.addf %53, %56 : vector<8x32xf32>
    %58 = math.tanh %57 : vector<8x32xf32>
    %59 = arith.subf %9, %58 : vector<8x32xf32>
    %60 = arith.mulf %52, %59 : vector<8x32xf32>
    %61 = arith.addf %58, %60 : vector<8x32xf32>
    %c0_23 = arith.constant 0 : index
    %c0_24 = arith.constant 0 : index
    %62 = vector.load %arg16[%c0_23, %c0_24] : memref<64x32xf32, #tpu.memory_space<vmem>>, vector<8x32xf32>
    tpu.vector_store %arg16[%c0_23, %c0_24], %40 {strides = array<i32>} : memref<64x32xf32, #tpu.memory_space<vmem>>, vector<8x32xf32>,
    %c56_25 = arith.constant 56 : index
    %c0_26 = arith.constant 0 : index
    %63 = vector.load %arg17[%c56_25, %c0_26] : memref<64x32xf32, #tpu.memory_space<vmem>>, vector<8x32xf32>
    tpu.vector_store %arg17[%c56_25, %c0_26], %61 {strides = array<i32>} : memref<64x32xf32, #tpu.memory_space<vmem>>, vector<8x32xf32>,
    %c8 = arith.constant 8 : index
    %c0_27 = arith.constant 0 : index
    %64 = vector.load %arg15[%c8, %c0_27] : memref<64x256xf32, #tpu.memory_space<vmem>>, vector<8x96xf32>
    %cst_28 = arith.constant dense<0.000000e+00> : vector<8x96xf32>
    %65 = tpu.matmul %40, %16, %cst_28 {dimension_numbers = #tpu.dot_dimension_numbers<[1], [0], [0], [1], [0, 0, 1, 1], [], []>} : vector<8x32xf32>, vector<32x96xf32>, vector<8x96xf32> -> vector<8x96xf32>
    %66 = vector.extract_strided_slice %64 {offsets = [0, 0], sizes = [8, 64], strides = [1, 1]} : vector<8x96xf32> to vector<8x64xf32>
    %67 = vector.extract_strided_slice %65 {offsets = [0, 0], sizes = [8, 64], strides = [1, 1]} : vector<8x96xf32> to vector<8x64xf32>
    %68 = arith.addf %66, %67 : vector<8x64xf32>
    %69 = arith.negf %68 : vector<8x64xf32>
    %70 = math.exp %69 : vector<8x64xf32>
    %cst_29 = arith.constant 1.000000e+00 : f32
    %71 = vector.broadcast %cst_29 : f32 to vector<8x64xf32>
    %72 = arith.addf %71, %70 : vector<8x64xf32>
    %73 = arith.divf %71, %72 : vector<8x64xf32>
    %74 = vector.extract_strided_slice %73 {offsets = [0, 0], sizes = [8, 32], strides = [1, 1]} : vector<8x64xf32> to vector<8x32xf32>
    %75 = vector.extract_strided_slice %73 {offsets = [0, 32], sizes = [8, 32], strides = [1, 1]} : vector<8x64xf32> to vector<8x32xf32>
    %76 = vector.extract_strided_slice %64 {offsets = [0, 64], sizes = [8, 32], strides = [1, 1]} : vector<8x96xf32> to vector<8x32xf32>
    %77 = vector.extract_strided_slice %65 {offsets = [0, 64], sizes = [8, 32], strides = [1, 1]} : vector<8x96xf32> to vector<8x32xf32>
    %78 = arith.addf %77, %18 : vector<8x32xf32>
    %79 = arith.mulf %74, %78 : vector<8x32xf32>
    %80 = arith.addf %76, %79 : vector<8x32xf32>
    %81 = math.tanh %80 : vector<8x32xf32>
    %82 = arith.subf %40, %81 : vector<8x32xf32>
    %83 = arith.mulf %75, %82 : vector<8x32xf32>
    %84 = arith.addf %81, %83 : vector<8x32xf32>
    %c48 = arith.constant 48 : index
    %c128_30 = arith.constant 128 : index
    %85 = vector.load %arg15[%c48, %c128_30] : memref<64x256xf32, #tpu.memory_space<vmem>>, vector<8x96xf32>
    %cst_31 = arith.constant dense<0.000000e+00> : vector<8x96xf32>
    %86 = tpu.matmul %61, %17, %cst_31 {dimension_numbers = #tpu.dot_dimension_numbers<[1], [0], [0], [1], [0, 0, 1, 1], [], []>} : vector<8x32xf32>, vector<32x96xf32>, vector<8x96xf32> -> vector<8x96xf32>
    %87 = vector.extract_strided_slice %85 {offsets = [0, 0], sizes = [8, 64], strides = [1, 1]} : vector<8x96xf32> to vector<8x64xf32>
    %88 = vector.extract_strided_slice %86 {offsets = [0, 0], sizes = [8, 64], strides = [1, 1]} : vector<8x96xf32> to vector<8x64xf32>
    %89 = arith.addf %87, %88 : vector<8x64xf32>
    %90 = arith.negf %89 : vector<8x64xf32>
    %91 = math.exp %90 : vector<8x64xf32>
    %cst_32 = arith.constant 1.000000e+00 : f32
    %92 = vector.broadcast %cst_32 : f32 to vector<8x64xf32>
    %93 = arith.addf %92, %91 : vector<8x64xf32>
    %94 = arith.divf %92, %93 : vector<8x64xf32>
    %95 = vector.extract_strided_slice %94 {offsets = [0, 0], sizes = [8, 32], strides = [1, 1]} : vector<8x64xf32> to vector<8x32xf32>
    %96 = vector.extract_strided_slice %94 {offsets = [0, 32], sizes = [8, 32], strides = [1, 1]} : vector<8x64xf32> to vector<8x32xf32>
    %97 = vector.extract_strided_slice %85 {offsets = [0, 64], sizes = [8, 32], strides = [1, 1]} : vector<8x96xf32> to vector<8x32xf32>
    %98 = vector.extract_strided_slice %86 {offsets = [0, 64], sizes = [8, 32], strides = [1, 1]} : vector<8x96xf32> to vector<8x32xf32>
    %99 = arith.addf %98, %19 : vector<8x32xf32>
    %100 = arith.mulf %95, %99 : vector<8x32xf32>
    %101 = arith.addf %97, %100 : vector<8x32xf32>
    %102 = math.tanh %101 : vector<8x32xf32>
    %103 = arith.subf %61, %102 : vector<8x32xf32>
    %104 = arith.mulf %96, %103 : vector<8x32xf32>
    %105 = arith.addf %102, %104 : vector<8x32xf32>
    %c8_33 = arith.constant 8 : index
    %c0_34 = arith.constant 0 : index
    %106 = vector.load %arg16[%c8_33, %c0_34] : memref<64x32xf32, #tpu.memory_space<vmem>>, vector<8x32xf32>
    tpu.vector_store %arg16[%c8_33, %c0_34], %84 {strides = array<i32>} : memref<64x32xf32, #tpu.memory_space<vmem>>, vector<8x32xf32>,
    %c48_35 = arith.constant 48 : index
    %c0_36 = arith.constant 0 : index
    %107 = vector.load %arg17[%c48_35, %c0_36] : memref<64x32xf32, #tpu.memory_space<vmem>>, vector<8x32xf32>
    tpu.vector_store %arg17[%c48_35, %c0_36], %105 {strides = array<i32>} : memref<64x32xf32, #tpu.memory_space<vmem>>, vector<8x32xf32>,
    %c16 = arith.constant 16 : index
    %c0_37 = arith.constant 0 : index
    %108 = vector.load %arg15[%c16, %c0_37] : memref<64x256xf32, #tpu.memory_space<vmem>>, vector<8x96xf32>
    %cst_38 = arith.constant dense<0.000000e+00> : vector<8x96xf32>
    %109 = tpu.matmul %84, %16, %cst_38 {dimension_numbers = #tpu.dot_dimension_numbers<[1], [0], [0], [1], [0, 0, 1, 1], [], []>} : vector<8x32xf32>, vector<32x96xf32>, vector<8x96xf32> -> vector<8x96xf32>
    %110 = vector.extract_strided_slice %108 {offsets = [0, 0], sizes = [8, 64], strides = [1, 1]} : vector<8x96xf32> to vector<8x64xf32>
    %111 = vector.extract_strided_slice %109 {offsets = [0, 0], sizes = [8, 64], strides = [1, 1]} : vector<8x96xf32> to vector<8x64xf32>
    %112 = arith.addf %110, %111 : vector<8x64xf32>
    %113 = arith.negf %112 : vector<8x64xf32>
    %114 = math.exp %113 : vector<8x64xf32>
    %cst_39 = arith.constant 1.000000e+00 : f32
    %115 = vector.broadcast %cst_39 : f32 to vector<8x64xf32>
    %116 = arith.addf %115, %114 : vector<8x64xf32>
    %117 = arith.divf %115, %116 : vector<8x64xf32>
    %118 = vector.extract_strided_slice %117 {offsets = [0, 0], sizes = [8, 32], strides = [1, 1]} : vector<8x64xf32> to vector<8x32xf32>
    %119 = vector.extract_strided_slice %117 {offsets = [0, 32], sizes = [8, 32], strides = [1, 1]} : vector<8x64xf32> to vector<8x32xf32>
    %120 = vector.extract_strided_slice %108 {offsets = [0, 64], sizes = [8, 32], strides = [1, 1]} : vector<8x96xf32> to vector<8x32xf32>
    %121 = vector.extract_strided_slice %109 {offsets = [0, 64], sizes = [8, 32], strides = [1, 1]} : vector<8x96xf32> to vector<8x32xf32>
    %122 = arith.addf %121, %18 : vector<8x32xf32>
    %123 = arith.mulf %118, %122 : vector<8x32xf32>
    %124 = arith.addf %120, %123 : vector<8x32xf32>
    %125 = math.tanh %124 : vector<8x32xf32>
    %126 = arith.subf %84, %125 : vector<8x32xf32>
    %127 = arith.mulf %119, %126 : vector<8x32xf32>
    %128 = arith.addf %125, %127 : vector<8x32xf32>
    %c40 = arith.constant 40 : index
    %c128_40 = arith.constant 128 : index
    %129 = vector.load %arg15[%c40, %c128_40] : memref<64x256xf32, #tpu.memory_space<vmem>>, vector<8x96xf32>
    %cst_41 = arith.constant dense<0.000000e+00> : vector<8x96xf32>
    %130 = tpu.matmul %105, %17, %cst_41 {dimension_numbers = #tpu.dot_dimension_numbers<[1], [0], [0], [1], [0, 0, 1, 1], [], []>} : vector<8x32xf32>, vector<32x96xf32>, vector<8x96xf32> -> vector<8x96xf32>
    %131 = vector.extract_strided_slice %129 {offsets = [0, 0], sizes = [8, 64], strides = [1, 1]} : vector<8x96xf32> to vector<8x64xf32>
    %132 = vector.extract_strided_slice %130 {offsets = [0, 0], sizes = [8, 64], strides = [1, 1]} : vector<8x96xf32> to vector<8x64xf32>
    %133 = arith.addf %131, %132 : vector<8x64xf32>
    %134 = arith.negf %133 : vector<8x64xf32>
    %135 = math.exp %134 : vector<8x64xf32>
    %cst_42 = arith.constant 1.000000e+00 : f32
    %136 = vector.broadcast %cst_42 : f32 to vector<8x64xf32>
    %137 = arith.addf %136, %135 : vector<8x64xf32>
    %138 = arith.divf %136, %137 : vector<8x64xf32>
    %139 = vector.extract_strided_slice %138 {offsets = [0, 0], sizes = [8, 32], strides = [1, 1]} : vector<8x64xf32> to vector<8x32xf32>
    %140 = vector.extract_strided_slice %138 {offsets = [0, 32], sizes = [8, 32], strides = [1, 1]} : vector<8x64xf32> to vector<8x32xf32>
    %141 = vector.extract_strided_slice %129 {offsets = [0, 64], sizes = [8, 32], strides = [1, 1]} : vector<8x96xf32> to vector<8x32xf32>
    %142 = vector.extract_strided_slice %130 {offsets = [0, 64], sizes = [8, 32], strides = [1, 1]} : vector<8x96xf32> to vector<8x32xf32>
    %143 = arith.addf %142, %19 : vector<8x32xf32>
    %144 = arith.mulf %139, %143 : vector<8x32xf32>
    %145 = arith.addf %141, %144 : vector<8x32xf32>
    %146 = math.tanh %145 : vector<8x32xf32>
    %147 = arith.subf %105, %146 : vector<8x32xf32>
    %148 = arith.mulf %140, %147 : vector<8x32xf32>
    %149 = arith.addf %146, %148 : vector<8x32xf32>
    %c16_43 = arith.constant 16 : index
    %c0_44 = arith.constant 0 : index
    %150 = vector.load %arg16[%c16_43, %c0_44] : memref<64x32xf32, #tpu.memory_space<vmem>>, vector<8x32xf32>
    tpu.vector_store %arg16[%c16_43, %c0_44], %128 {strides = array<i32>} : memref<64x32xf32, #tpu.memory_space<vmem>>, vector<8x32xf32>,
    %c40_45 = arith.constant 40 : index
    %c0_46 = arith.constant 0 : index
    %151 = vector.load %arg17[%c40_45, %c0_46] : memref<64x32xf32, #tpu.memory_space<vmem>>, vector<8x32xf32>
    tpu.vector_store %arg17[%c40_45, %c0_46], %149 {strides = array<i32>} : memref<64x32xf32, #tpu.memory_space<vmem>>, vector<8x32xf32>,
    %c24 = arith.constant 24 : index
    %c0_47 = arith.constant 0 : index
    %152 = vector.load %arg15[%c24, %c0_47] : memref<64x256xf32, #tpu.memory_space<vmem>>, vector<8x96xf32>
    %cst_48 = arith.constant dense<0.000000e+00> : vector<8x96xf32>
    %153 = tpu.matmul %128, %16, %cst_48 {dimension_numbers = #tpu.dot_dimension_numbers<[1], [0], [0], [1], [0, 0, 1, 1], [], []>} : vector<8x32xf32>, vector<32x96xf32>, vector<8x96xf32> -> vector<8x96xf32>
    %154 = vector.extract_strided_slice %152 {offsets = [0, 0], sizes = [8, 64], strides = [1, 1]} : vector<8x96xf32> to vector<8x64xf32>
    %155 = vector.extract_strided_slice %153 {offsets = [0, 0], sizes = [8, 64], strides = [1, 1]} : vector<8x96xf32> to vector<8x64xf32>
    %156 = arith.addf %154, %155 : vector<8x64xf32>
    %157 = arith.negf %156 : vector<8x64xf32>
    %158 = math.exp %157 : vector<8x64xf32>
    %cst_49 = arith.constant 1.000000e+00 : f32
    %159 = vector.broadcast %cst_49 : f32 to vector<8x64xf32>
    %160 = arith.addf %159, %158 : vector<8x64xf32>
    %161 = arith.divf %159, %160 : vector<8x64xf32>
    %162 = vector.extract_strided_slice %161 {offsets = [0, 0], sizes = [8, 32], strides = [1, 1]} : vector<8x64xf32> to vector<8x32xf32>
    %163 = vector.extract_strided_slice %161 {offsets = [0, 32], sizes = [8, 32], strides = [1, 1]} : vector<8x64xf32> to vector<8x32xf32>
    %164 = vector.extract_strided_slice %152 {offsets = [0, 64], sizes = [8, 32], strides = [1, 1]} : vector<8x96xf32> to vector<8x32xf32>
    %165 = vector.extract_strided_slice %153 {offsets = [0, 64], sizes = [8, 32], strides = [1, 1]} : vector<8x96xf32> to vector<8x32xf32>
    %166 = arith.addf %165, %18 : vector<8x32xf32>
    %167 = arith.mulf %162, %166 : vector<8x32xf32>
    %168 = arith.addf %164, %167 : vector<8x32xf32>
    %169 = math.tanh %168 : vector<8x32xf32>
    %170 = arith.subf %128, %169 : vector<8x32xf32>
    %171 = arith.mulf %163, %170 : vector<8x32xf32>
    %172 = arith.addf %169, %171 : vector<8x32xf32>
    %c32 = arith.constant 32 : index
    %c128_50 = arith.constant 128 : index
    %173 = vector.load %arg15[%c32, %c128_50] : memref<64x256xf32, #tpu.memory_space<vmem>>, vector<8x96xf32>
    %cst_51 = arith.constant dense<0.000000e+00> : vector<8x96xf32>
    %174 = tpu.matmul %149, %17, %cst_51 {dimension_numbers = #tpu.dot_dimension_numbers<[1], [0], [0], [1], [0, 0, 1, 1], [], []>} : vector<8x32xf32>, vector<32x96xf32>, vector<8x96xf32> -> vector<8x96xf32>
    %175 = vector.extract_strided_slice %173 {offsets = [0, 0], sizes = [8, 64], strides = [1, 1]} : vector<8x96xf32> to vector<8x64xf32>
    %176 = vector.extract_strided_slice %174 {offsets = [0, 0], sizes = [8, 64], strides = [1, 1]} : vector<8x96xf32> to vector<8x64xf32>
    %177 = arith.addf %175, %176 : vector<8x64xf32>
    %178 = arith.negf %177 : vector<8x64xf32>
    %179 = math.exp %178 : vector<8x64xf32>
    %cst_52 = arith.constant 1.000000e+00 : f32
    %180 = vector.broadcast %cst_52 : f32 to vector<8x64xf32>
    %181 = arith.addf %180, %179 : vector<8x64xf32>
    %182 = arith.divf %180, %181 : vector<8x64xf32>
    %183 = vector.extract_strided_slice %182 {offsets = [0, 0], sizes = [8, 32], strides = [1, 1]} : vector<8x64xf32> to vector<8x32xf32>
    %184 = vector.extract_strided_slice %182 {offsets = [0, 32], sizes = [8, 32], strides = [1, 1]} : vector<8x64xf32> to vector<8x32xf32>
    %185 = vector.extract_strided_slice %173 {offsets = [0, 64], sizes = [8, 32], strides = [1, 1]} : vector<8x96xf32> to vector<8x32xf32>
    %186 = vector.extract_strided_slice %174 {offsets = [0, 64], sizes = [8, 32], strides = [1, 1]} : vector<8x96xf32> to vector<8x32xf32>
    %187 = arith.addf %186, %19 : vector<8x32xf32>
    %188 = arith.mulf %183, %187 : vector<8x32xf32>
    %189 = arith.addf %185, %188 : vector<8x32xf32>
    %190 = math.tanh %189 : vector<8x32xf32>
    %191 = arith.subf %149, %190 : vector<8x32xf32>
    %192 = arith.mulf %184, %191 : vector<8x32xf32>
    %193 = arith.addf %190, %192 : vector<8x32xf32>
    %c24_53 = arith.constant 24 : index
    %c0_54 = arith.constant 0 : index
    %194 = vector.load %arg16[%c24_53, %c0_54] : memref<64x32xf32, #tpu.memory_space<vmem>>, vector<8x32xf32>
    tpu.vector_store %arg16[%c24_53, %c0_54], %172 {strides = array<i32>} : memref<64x32xf32, #tpu.memory_space<vmem>>, vector<8x32xf32>,
    %c32_55 = arith.constant 32 : index
    %c0_56 = arith.constant 0 : index
    %195 = vector.load %arg17[%c32_55, %c0_56] : memref<64x32xf32, #tpu.memory_space<vmem>>, vector<8x32xf32>
    tpu.vector_store %arg17[%c32_55, %c0_56], %193 {strides = array<i32>} : memref<64x32xf32, #tpu.memory_space<vmem>>, vector<8x32xf32>,
    %c32_57 = arith.constant 32 : index
    %c0_58 = arith.constant 0 : index
    %196 = vector.load %arg15[%c32_57, %c0_58] : memref<64x256xf32, #tpu.memory_space<vmem>>, vector<8x96xf32>
    %cst_59 = arith.constant dense<0.000000e+00> : vector<8x96xf32>
    %197 = tpu.matmul %172, %16, %cst_59 {dimension_numbers = #tpu.dot_dimension_numbers<[1], [0], [0], [1], [0, 0, 1, 1], [], []>} : vector<8x32xf32>, vector<32x96xf32>, vector<8x96xf32> -> vector<8x96xf32>
    %198 = vector.extract_strided_slice %196 {offsets = [0, 0], sizes = [8, 64], strides = [1, 1]} : vector<8x96xf32> to vector<8x64xf32>
    %199 = vector.extract_strided_slice %197 {offsets = [0, 0], sizes = [8, 64], strides = [1, 1]} : vector<8x96xf32> to vector<8x64xf32>
    %200 = arith.addf %198, %199 : vector<8x64xf32>
    %201 = arith.negf %200 : vector<8x64xf32>
    %202 = math.exp %201 : vector<8x64xf32>
    %cst_60 = arith.constant 1.000000e+00 : f32
    %203 = vector.broadcast %cst_60 : f32 to vector<8x64xf32>
    %204 = arith.addf %203, %202 : vector<8x64xf32>
    %205 = arith.divf %203, %204 : vector<8x64xf32>
    %206 = vector.extract_strided_slice %205 {offsets = [0, 0], sizes = [8, 32], strides = [1, 1]} : vector<8x64xf32> to vector<8x32xf32>
    %207 = vector.extract_strided_slice %205 {offsets = [0, 32], sizes = [8, 32], strides = [1, 1]} : vector<8x64xf32> to vector<8x32xf32>
    %208 = vector.extract_strided_slice %196 {offsets = [0, 64], sizes = [8, 32], strides = [1, 1]} : vector<8x96xf32> to vector<8x32xf32>
    %209 = vector.extract_strided_slice %197 {offsets = [0, 64], sizes = [8, 32], strides = [1, 1]} : vector<8x96xf32> to vector<8x32xf32>
    %210 = arith.addf %209, %18 : vector<8x32xf32>
    %211 = arith.mulf %206, %210 : vector<8x32xf32>
    %212 = arith.addf %208, %211 : vector<8x32xf32>
    %213 = math.tanh %212 : vector<8x32xf32>
    %214 = arith.subf %172, %213 : vector<8x32xf32>
    %215 = arith.mulf %207, %214 : vector<8x32xf32>
    %216 = arith.addf %213, %215 : vector<8x32xf32>
    %c24_61 = arith.constant 24 : index
    %c128_62 = arith.constant 128 : index
    %217 = vector.load %arg15[%c24_61, %c128_62] : memref<64x256xf32, #tpu.memory_space<vmem>>, vector<8x96xf32>
    %cst_63 = arith.constant dense<0.000000e+00> : vector<8x96xf32>
    %218 = tpu.matmul %193, %17, %cst_63 {dimension_numbers = #tpu.dot_dimension_numbers<[1], [0], [0], [1], [0, 0, 1, 1], [], []>} : vector<8x32xf32>, vector<32x96xf32>, vector<8x96xf32> -> vector<8x96xf32>
    %219 = vector.extract_strided_slice %217 {offsets = [0, 0], sizes = [8, 64], strides = [1, 1]} : vector<8x96xf32> to vector<8x64xf32>
    %220 = vector.extract_strided_slice %218 {offsets = [0, 0], sizes = [8, 64], strides = [1, 1]} : vector<8x96xf32> to vector<8x64xf32>
    %221 = arith.addf %219, %220 : vector<8x64xf32>
    %222 = arith.negf %221 : vector<8x64xf32>
    %223 = math.exp %222 : vector<8x64xf32>
    %cst_64 = arith.constant 1.000000e+00 : f32
    %224 = vector.broadcast %cst_64 : f32 to vector<8x64xf32>
    %225 = arith.addf %224, %223 : vector<8x64xf32>
    %226 = arith.divf %224, %225 : vector<8x64xf32>
    %227 = vector.extract_strided_slice %226 {offsets = [0, 0], sizes = [8, 32], strides = [1, 1]} : vector<8x64xf32> to vector<8x32xf32>
    %228 = vector.extract_strided_slice %226 {offsets = [0, 32], sizes = [8, 32], strides = [1, 1]} : vector<8x64xf32> to vector<8x32xf32>
    %229 = vector.extract_strided_slice %217 {offsets = [0, 64], sizes = [8, 32], strides = [1, 1]} : vector<8x96xf32> to vector<8x32xf32>
    %230 = vector.extract_strided_slice %218 {offsets = [0, 64], sizes = [8, 32], strides = [1, 1]} : vector<8x96xf32> to vector<8x32xf32>
    %231 = arith.addf %230, %19 : vector<8x32xf32>
    %232 = arith.mulf %227, %231 : vector<8x32xf32>
    %233 = arith.addf %229, %232 : vector<8x32xf32>
    %234 = math.tanh %233 : vector<8x32xf32>
    %235 = arith.subf %193, %234 : vector<8x32xf32>
    %236 = arith.mulf %228, %235 : vector<8x32xf32>
    %237 = arith.addf %234, %236 : vector<8x32xf32>
    %c32_65 = arith.constant 32 : index
    %c0_66 = arith.constant 0 : index
    %238 = vector.load %arg16[%c32_65, %c0_66] : memref<64x32xf32, #tpu.memory_space<vmem>>, vector<8x32xf32>
    tpu.vector_store %arg16[%c32_65, %c0_66], %216 {strides = array<i32>} : memref<64x32xf32, #tpu.memory_space<vmem>>, vector<8x32xf32>,
    %c24_67 = arith.constant 24 : index
    %c0_68 = arith.constant 0 : index
    %239 = vector.load %arg17[%c24_67, %c0_68] : memref<64x32xf32, #tpu.memory_space<vmem>>, vector<8x32xf32>
    tpu.vector_store %arg17[%c24_67, %c0_68], %237 {strides = array<i32>} : memref<64x32xf32, #tpu.memory_space<vmem>>, vector<8x32xf32>,
    %c40_69 = arith.constant 40 : index
    %c0_70 = arith.constant 0 : index
    %240 = vector.load %arg15[%c40_69, %c0_70] : memref<64x256xf32, #tpu.memory_space<vmem>>, vector<8x96xf32>
    %cst_71 = arith.constant dense<0.000000e+00> : vector<8x96xf32>
    %241 = tpu.matmul %216, %16, %cst_71 {dimension_numbers = #tpu.dot_dimension_numbers<[1], [0], [0], [1], [0, 0, 1, 1], [], []>} : vector<8x32xf32>, vector<32x96xf32>, vector<8x96xf32> -> vector<8x96xf32>
    %242 = vector.extract_strided_slice %240 {offsets = [0, 0], sizes = [8, 64], strides = [1, 1]} : vector<8x96xf32> to vector<8x64xf32>
    %243 = vector.extract_strided_slice %241 {offsets = [0, 0], sizes = [8, 64], strides = [1, 1]} : vector<8x96xf32> to vector<8x64xf32>
    %244 = arith.addf %242, %243 : vector<8x64xf32>
    %245 = arith.negf %244 : vector<8x64xf32>
    %246 = math.exp %245 : vector<8x64xf32>
    %cst_72 = arith.constant 1.000000e+00 : f32
    %247 = vector.broadcast %cst_72 : f32 to vector<8x64xf32>
    %248 = arith.addf %247, %246 : vector<8x64xf32>
    %249 = arith.divf %247, %248 : vector<8x64xf32>
    %250 = vector.extract_strided_slice %249 {offsets = [0, 0], sizes = [8, 32], strides = [1, 1]} : vector<8x64xf32> to vector<8x32xf32>
    %251 = vector.extract_strided_slice %249 {offsets = [0, 32], sizes = [8, 32], strides = [1, 1]} : vector<8x64xf32> to vector<8x32xf32>
    %252 = vector.extract_strided_slice %240 {offsets = [0, 64], sizes = [8, 32], strides = [1, 1]} : vector<8x96xf32> to vector<8x32xf32>
    %253 = vector.extract_strided_slice %241 {offsets = [0, 64], sizes = [8, 32], strides = [1, 1]} : vector<8x96xf32> to vector<8x32xf32>
    %254 = arith.addf %253, %18 : vector<8x32xf32>
    %255 = arith.mulf %250, %254 : vector<8x32xf32>
    %256 = arith.addf %252, %255 : vector<8x32xf32>
    %257 = math.tanh %256 : vector<8x32xf32>
    %258 = arith.subf %216, %257 : vector<8x32xf32>
    %259 = arith.mulf %251, %258 : vector<8x32xf32>
    %260 = arith.addf %257, %259 : vector<8x32xf32>
    %c16_73 = arith.constant 16 : index
    %c128_74 = arith.constant 128 : index
    %261 = vector.load %arg15[%c16_73, %c128_74] : memref<64x256xf32, #tpu.memory_space<vmem>>, vector<8x96xf32>
    %cst_75 = arith.constant dense<0.000000e+00> : vector<8x96xf32>
    %262 = tpu.matmul %237, %17, %cst_75 {dimension_numbers = #tpu.dot_dimension_numbers<[1], [0], [0], [1], [0, 0, 1, 1], [], []>} : vector<8x32xf32>, vector<32x96xf32>, vector<8x96xf32> -> vector<8x96xf32>
    %263 = vector.extract_strided_slice %261 {offsets = [0, 0], sizes = [8, 64], strides = [1, 1]} : vector<8x96xf32> to vector<8x64xf32>
    %264 = vector.extract_strided_slice %262 {offsets = [0, 0], sizes = [8, 64], strides = [1, 1]} : vector<8x96xf32> to vector<8x64xf32>
    %265 = arith.addf %263, %264 : vector<8x64xf32>
    %266 = arith.negf %265 : vector<8x64xf32>
    %267 = math.exp %266 : vector<8x64xf32>
    %cst_76 = arith.constant 1.000000e+00 : f32
    %268 = vector.broadcast %cst_76 : f32 to vector<8x64xf32>
    %269 = arith.addf %268, %267 : vector<8x64xf32>
    %270 = arith.divf %268, %269 : vector<8x64xf32>
    %271 = vector.extract_strided_slice %270 {offsets = [0, 0], sizes = [8, 32], strides = [1, 1]} : vector<8x64xf32> to vector<8x32xf32>
    %272 = vector.extract_strided_slice %270 {offsets = [0, 32], sizes = [8, 32], strides = [1, 1]} : vector<8x64xf32> to vector<8x32xf32>
    %273 = vector.extract_strided_slice %261 {offsets = [0, 64], sizes = [8, 32], strides = [1, 1]} : vector<8x96xf32> to vector<8x32xf32>
    %274 = vector.extract_strided_slice %262 {offsets = [0, 64], sizes = [8, 32], strides = [1, 1]} : vector<8x96xf32> to vector<8x32xf32>
    %275 = arith.addf %274, %19 : vector<8x32xf32>
    %276 = arith.mulf %271, %275 : vector<8x32xf32>
    %277 = arith.addf %273, %276 : vector<8x32xf32>
    %278 = math.tanh %277 : vector<8x32xf32>
    %279 = arith.subf %237, %278 : vector<8x32xf32>
    %280 = arith.mulf %272, %279 : vector<8x32xf32>
    %281 = arith.addf %278, %280 : vector<8x32xf32>
    %c40_77 = arith.constant 40 : index
    %c0_78 = arith.constant 0 : index
    %282 = vector.load %arg16[%c40_77, %c0_78] : memref<64x32xf32, #tpu.memory_space<vmem>>, vector<8x32xf32>
    tpu.vector_store %arg16[%c40_77, %c0_78], %260 {strides = array<i32>} : memref<64x32xf32, #tpu.memory_space<vmem>>, vector<8x32xf32>,
    %c16_79 = arith.constant 16 : index
    %c0_80 = arith.constant 0 : index
    %283 = vector.load %arg17[%c16_79, %c0_80] : memref<64x32xf32, #tpu.memory_space<vmem>>, vector<8x32xf32>
    tpu.vector_store %arg17[%c16_79, %c0_80], %281 {strides = array<i32>} : memref<64x32xf32, #tpu.memory_space<vmem>>, vector<8x32xf32>,
    %c48_81 = arith.constant 48 : index
    %c0_82 = arith.constant 0 : index
    %284 = vector.load %arg15[%c48_81, %c0_82] : memref<64x256xf32, #tpu.memory_space<vmem>>, vector<8x96xf32>
    %cst_83 = arith.constant dense<0.000000e+00> : vector<8x96xf32>
    %285 = tpu.matmul %260, %16, %cst_83 {dimension_numbers = #tpu.dot_dimension_numbers<[1], [0], [0], [1], [0, 0, 1, 1], [], []>} : vector<8x32xf32>, vector<32x96xf32>, vector<8x96xf32> -> vector<8x96xf32>
    %286 = vector.extract_strided_slice %284 {offsets = [0, 0], sizes = [8, 64], strides = [1, 1]} : vector<8x96xf32> to vector<8x64xf32>
    %287 = vector.extract_strided_slice %285 {offsets = [0, 0], sizes = [8, 64], strides = [1, 1]} : vector<8x96xf32> to vector<8x64xf32>
    %288 = arith.addf %286, %287 : vector<8x64xf32>
    %289 = arith.negf %288 : vector<8x64xf32>
    %290 = math.exp %289 : vector<8x64xf32>
    %cst_84 = arith.constant 1.000000e+00 : f32
    %291 = vector.broadcast %cst_84 : f32 to vector<8x64xf32>
    %292 = arith.addf %291, %290 : vector<8x64xf32>
    %293 = arith.divf %291, %292 : vector<8x64xf32>
    %294 = vector.extract_strided_slice %293 {offsets = [0, 0], sizes = [8, 32], strides = [1, 1]} : vector<8x64xf32> to vector<8x32xf32>
    %295 = vector.extract_strided_slice %293 {offsets = [0, 32], sizes = [8, 32], strides = [1, 1]} : vector<8x64xf32> to vector<8x32xf32>
    %296 = vector.extract_strided_slice %284 {offsets = [0, 64], sizes = [8, 32], strides = [1, 1]} : vector<8x96xf32> to vector<8x32xf32>
    %297 = vector.extract_strided_slice %285 {offsets = [0, 64], sizes = [8, 32], strides = [1, 1]} : vector<8x96xf32> to vector<8x32xf32>
    %298 = arith.addf %297, %18 : vector<8x32xf32>
    %299 = arith.mulf %294, %298 : vector<8x32xf32>
    %300 = arith.addf %296, %299 : vector<8x32xf32>
    %301 = math.tanh %300 : vector<8x32xf32>
    %302 = arith.subf %260, %301 : vector<8x32xf32>
    %303 = arith.mulf %295, %302 : vector<8x32xf32>
    %304 = arith.addf %301, %303 : vector<8x32xf32>
    %c8_85 = arith.constant 8 : index
    %c128_86 = arith.constant 128 : index
    %305 = vector.load %arg15[%c8_85, %c128_86] : memref<64x256xf32, #tpu.memory_space<vmem>>, vector<8x96xf32>
    %cst_87 = arith.constant dense<0.000000e+00> : vector<8x96xf32>
    %306 = tpu.matmul %281, %17, %cst_87 {dimension_numbers = #tpu.dot_dimension_numbers<[1], [0], [0], [1], [0, 0, 1, 1], [], []>} : vector<8x32xf32>, vector<32x96xf32>, vector<8x96xf32> -> vector<8x96xf32>
    %307 = vector.extract_strided_slice %305 {offsets = [0, 0], sizes = [8, 64], strides = [1, 1]} : vector<8x96xf32> to vector<8x64xf32>
    %308 = vector.extract_strided_slice %306 {offsets = [0, 0], sizes = [8, 64], strides = [1, 1]} : vector<8x96xf32> to vector<8x64xf32>
    %309 = arith.addf %307, %308 : vector<8x64xf32>
    %310 = arith.negf %309 : vector<8x64xf32>
    %311 = math.exp %310 : vector<8x64xf32>
    %cst_88 = arith.constant 1.000000e+00 : f32
    %312 = vector.broadcast %cst_88 : f32 to vector<8x64xf32>
    %313 = arith.addf %312, %311 : vector<8x64xf32>
    %314 = arith.divf %312, %313 : vector<8x64xf32>
    %315 = vector.extract_strided_slice %314 {offsets = [0, 0], sizes = [8, 32], strides = [1, 1]} : vector<8x64xf32> to vector<8x32xf32>
    %316 = vector.extract_strided_slice %314 {offsets = [0, 32], sizes = [8, 32], strides = [1, 1]} : vector<8x64xf32> to vector<8x32xf32>
    %317 = vector.extract_strided_slice %305 {offsets = [0, 64], sizes = [8, 32], strides = [1, 1]} : vector<8x96xf32> to vector<8x32xf32>
    %318 = vector.extract_strided_slice %306 {offsets = [0, 64], sizes = [8, 32], strides = [1, 1]} : vector<8x96xf32> to vector<8x32xf32>
    %319 = arith.addf %318, %19 : vector<8x32xf32>
    %320 = arith.mulf %315, %319 : vector<8x32xf32>
    %321 = arith.addf %317, %320 : vector<8x32xf32>
    %322 = math.tanh %321 : vector<8x32xf32>
    %323 = arith.subf %281, %322 : vector<8x32xf32>
    %324 = arith.mulf %316, %323 : vector<8x32xf32>
    %325 = arith.addf %322, %324 : vector<8x32xf32>
    %c48_89 = arith.constant 48 : index
    %c0_90 = arith.constant 0 : index
    %326 = vector.load %arg16[%c48_89, %c0_90] : memref<64x32xf32, #tpu.memory_space<vmem>>, vector<8x32xf32>
    tpu.vector_store %arg16[%c48_89, %c0_90], %304 {strides = array<i32>} : memref<64x32xf32, #tpu.memory_space<vmem>>, vector<8x32xf32>,
    %c8_91 = arith.constant 8 : index
    %c0_92 = arith.constant 0 : index
    %327 = vector.load %arg17[%c8_91, %c0_92] : memref<64x32xf32, #tpu.memory_space<vmem>>, vector<8x32xf32>
    tpu.vector_store %arg17[%c8_91, %c0_92], %325 {strides = array<i32>} : memref<64x32xf32, #tpu.memory_space<vmem>>, vector<8x32xf32>,
    %c56_93 = arith.constant 56 : index
    %c0_94 = arith.constant 0 : index
    %328 = vector.load %arg15[%c56_93, %c0_94] : memref<64x256xf32, #tpu.memory_space<vmem>>, vector<8x96xf32>
    %cst_95 = arith.constant dense<0.000000e+00> : vector<8x96xf32>
    %329 = tpu.matmul %304, %16, %cst_95 {dimension_numbers = #tpu.dot_dimension_numbers<[1], [0], [0], [1], [0, 0, 1, 1], [], []>} : vector<8x32xf32>, vector<32x96xf32>, vector<8x96xf32> -> vector<8x96xf32>
    %330 = vector.extract_strided_slice %328 {offsets = [0, 0], sizes = [8, 64], strides = [1, 1]} : vector<8x96xf32> to vector<8x64xf32>
    %331 = vector.extract_strided_slice %329 {offsets = [0, 0], sizes = [8, 64], strides = [1, 1]} : vector<8x96xf32> to vector<8x64xf32>
    %332 = arith.addf %330, %331 : vector<8x64xf32>
    %333 = arith.negf %332 : vector<8x64xf32>
    %334 = math.exp %333 : vector<8x64xf32>
    %cst_96 = arith.constant 1.000000e+00 : f32
    %335 = vector.broadcast %cst_96 : f32 to vector<8x64xf32>
    %336 = arith.addf %335, %334 : vector<8x64xf32>
    %337 = arith.divf %335, %336 : vector<8x64xf32>
    %338 = vector.extract_strided_slice %337 {offsets = [0, 0], sizes = [8, 32], strides = [1, 1]} : vector<8x64xf32> to vector<8x32xf32>
    %339 = vector.extract_strided_slice %337 {offsets = [0, 32], sizes = [8, 32], strides = [1, 1]} : vector<8x64xf32> to vector<8x32xf32>
    %340 = vector.extract_strided_slice %328 {offsets = [0, 64], sizes = [8, 32], strides = [1, 1]} : vector<8x96xf32> to vector<8x32xf32>
    %341 = vector.extract_strided_slice %329 {offsets = [0, 64], sizes = [8, 32], strides = [1, 1]} : vector<8x96xf32> to vector<8x32xf32>
    %342 = arith.addf %341, %18 : vector<8x32xf32>
    %343 = arith.mulf %338, %342 : vector<8x32xf32>
    %344 = arith.addf %340, %343 : vector<8x32xf32>
    %345 = math.tanh %344 : vector<8x32xf32>
    %346 = arith.subf %304, %345 : vector<8x32xf32>
    %347 = arith.mulf %339, %346 : vector<8x32xf32>
    %348 = arith.addf %345, %347 : vector<8x32xf32>
    %c0_97 = arith.constant 0 : index
    %c128_98 = arith.constant 128 : index
    %349 = vector.load %arg15[%c0_97, %c128_98] : memref<64x256xf32, #tpu.memory_space<vmem>>, vector<8x96xf32>
    %cst_99 = arith.constant dense<0.000000e+00> : vector<8x96xf32>
    %350 = tpu.matmul %325, %17, %cst_99 {dimension_numbers = #tpu.dot_dimension_numbers<[1], [0], [0], [1], [0, 0, 1, 1], [], []>} : vector<8x32xf32>, vector<32x96xf32>, vector<8x96xf32> -> vector<8x96xf32>
    %351 = vector.extract_strided_slice %349 {offsets = [0, 0], sizes = [8, 64], strides = [1, 1]} : vector<8x96xf32> to vector<8x64xf32>
    %352 = vector.extract_strided_slice %350 {offsets = [0, 0], sizes = [8, 64], strides = [1, 1]} : vector<8x96xf32> to vector<8x64xf32>
    %353 = arith.addf %351, %352 : vector<8x64xf32>
    %354 = arith.negf %353 : vector<8x64xf32>
    %355 = math.exp %354 : vector<8x64xf32>
    %cst_100 = arith.constant 1.000000e+00 : f32
    %356 = vector.broadcast %cst_100 : f32 to vector<8x64xf32>
    %357 = arith.addf %356, %355 : vector<8x64xf32>
    %358 = arith.divf %356, %357 : vector<8x64xf32>
    %359 = vector.extract_strided_slice %358 {offsets = [0, 0], sizes = [8, 32], strides = [1, 1]} : vector<8x64xf32> to vector<8x32xf32>
    %360 = vector.extract_strided_slice %358 {offsets = [0, 32], sizes = [8, 32], strides = [1, 1]} : vector<8x64xf32> to vector<8x32xf32>
    %361 = vector.extract_strided_slice %349 {offsets = [0, 64], sizes = [8, 32], strides = [1, 1]} : vector<8x96xf32> to vector<8x32xf32>
    %362 = vector.extract_strided_slice %350 {offsets = [0, 64], sizes = [8, 32], strides = [1, 1]} : vector<8x96xf32> to vector<8x32xf32>
    %363 = arith.addf %362, %19 : vector<8x32xf32>
    %364 = arith.mulf %359, %363 : vector<8x32xf32>
    %365 = arith.addf %361, %364 : vector<8x32xf32>
    %366 = math.tanh %365 : vector<8x32xf32>
    %367 = arith.subf %325, %366 : vector<8x32xf32>
    %368 = arith.mulf %360, %367 : vector<8x32xf32>
    %369 = arith.addf %366, %368 : vector<8x32xf32>
    %c56_101 = arith.constant 56 : index
    %c0_102 = arith.constant 0 : index
    %370 = vector.load %arg16[%c56_101, %c0_102] : memref<64x32xf32, #tpu.memory_space<vmem>>, vector<8x32xf32>
    tpu.vector_store %arg16[%c56_101, %c0_102], %348 {strides = array<i32>} : memref<64x32xf32, #tpu.memory_space<vmem>>, vector<8x32xf32>,
    %c0_103 = arith.constant 0 : index
    %c0_104 = arith.constant 0 : index
    %371 = vector.load %arg17[%c0_103, %c0_104] : memref<64x32xf32, #tpu.memory_space<vmem>>, vector<8x32xf32>
    tpu.vector_store %arg17[%c0_103, %c0_104], %369 {strides = array<i32>} : memref<64x32xf32, #tpu.memory_space<vmem>>, vector<8x32xf32>,
    %c0_105 = arith.constant 0 : index
    %c0_106 = arith.constant 0 : index
    %372 = vector.load %arg16[%c0_105, %c0_106] : memref<64x32xf32, #tpu.memory_space<vmem>>, vector<64x32xf32>
    %c0_107 = arith.constant 0 : index
    %c0_108 = arith.constant 0 : index
    %373 = vector.load %arg4[%c0_107, %c0_108] : memref<32x256xf32, #tpu.memory_space<vmem>>, vector<32x256xf32>
    %cst_109 = arith.constant dense<0.000000e+00> : vector<64x256xf32>
    %374 = tpu.matmul %372, %373, %cst_109 {dimension_numbers = #tpu.dot_dimension_numbers<[1], [0], [0], [1], [0, 0, 1, 1], [], []>} : vector<64x32xf32>, vector<32x256xf32>, vector<64x256xf32> -> vector<64x256xf32>
    %c0_110 = arith.constant 0 : index
    %c0_111 = arith.constant 0 : index
    %375 = vector.load %arg17[%c0_110, %c0_111] : memref<64x32xf32, #tpu.memory_space<vmem>>, vector<64x32xf32>
    %c0_112 = arith.constant 0 : index
    %c0_113 = arith.constant 0 : index
    %376 = vector.load %arg5[%c0_112, %c0_113] : memref<32x256xf32, #tpu.memory_space<vmem>>, vector<32x256xf32>
    %cst_114 = arith.constant dense<0.000000e+00> : vector<64x256xf32>
    %377 = tpu.matmul %375, %376, %cst_114 {dimension_numbers = #tpu.dot_dimension_numbers<[1], [0], [0], [1], [0, 0, 1, 1], [], []>} : vector<64x32xf32>, vector<32x256xf32>, vector<64x256xf32> -> vector<64x256xf32>
    %378 = arith.addf %374, %377 : vector<64x256xf32>
    %c0_115 = arith.constant 0 : index
    %c0_116 = arith.constant 0 : index
    %379 = vector.load %arg6[%c0_115, %c0_116] : memref<1x256xf32, #tpu.memory_space<vmem>>, vector<1x256xf32>
    %380 = vector.broadcast %379 : vector<1x256xf32> to vector<64x256xf32>
    %381 = arith.addf %378, %380 : vector<64x256xf32>
    %c0_117 = arith.constant 0 : index
    %c0_118 = arith.constant 0 : index
    %382 = vector.load %arg15[%c0_117, %c0_118] : memref<64x256xf32, #tpu.memory_space<vmem>>, vector<64x256xf32>
    tpu.vector_store %arg15[%c0_117, %c0_118], %381 {strides = array<i32>} : memref<64x256xf32, #tpu.memory_space<vmem>>, vector<64x256xf32>,
    %c0_119 = arith.constant 0 : index
    %c0_120 = arith.constant 0 : index
    %383 = vector.load %arg9[%c0_119, %c0_120] : memref<32x96xf32, #tpu.memory_space<vmem>>, vector<32x96xf32>
    %c0_121 = arith.constant 0 : index
    %c0_122 = arith.constant 0 : index
    %384 = vector.load %arg10[%c0_121, %c0_122] : memref<32x96xf32, #tpu.memory_space<vmem>>, vector<32x96xf32>
    %385 = vector.extract_strided_slice %8 {offsets = [0, 64], sizes = [8, 32], strides = [1, 1]} : vector<8x128xf32> to vector<8x32xf32>
    %386 = vector.extract_strided_slice %8 {offsets = [0, 96], sizes = [8, 32], strides = [1, 1]} : vector<8x128xf32> to vector<8x32xf32>
    %c0_123 = arith.constant 0 : index
    %c0_124 = arith.constant 0 : index
    %387 = vector.load %arg15[%c0_123, %c0_124] : memref<64x256xf32, #tpu.memory_space<vmem>>, vector<8x96xf32>
    %cst_125 = arith.constant dense<0.000000e+00> : vector<8x96xf32>
    %388 = tpu.matmul %9, %383, %cst_125 {dimension_numbers = #tpu.dot_dimension_numbers<[1], [0], [0], [1], [0, 0, 1, 1], [], []>} : vector<8x32xf32>, vector<32x96xf32>, vector<8x96xf32> -> vector<8x96xf32>
    %389 = vector.extract_strided_slice %387 {offsets = [0, 0], sizes = [8, 64], strides = [1, 1]} : vector<8x96xf32> to vector<8x64xf32>
    %390 = vector.extract_strided_slice %388 {offsets = [0, 0], sizes = [8, 64], strides = [1, 1]} : vector<8x96xf32> to vector<8x64xf32>
    %391 = arith.addf %389, %390 : vector<8x64xf32>
    %392 = arith.negf %391 : vector<8x64xf32>
    %393 = math.exp %392 : vector<8x64xf32>
    %cst_126 = arith.constant 1.000000e+00 : f32
    %394 = vector.broadcast %cst_126 : f32 to vector<8x64xf32>
    %395 = arith.addf %394, %393 : vector<8x64xf32>
    %396 = arith.divf %394, %395 : vector<8x64xf32>
    %397 = vector.extract_strided_slice %396 {offsets = [0, 0], sizes = [8, 32], strides = [1, 1]} : vector<8x64xf32> to vector<8x32xf32>
    %398 = vector.extract_strided_slice %396 {offsets = [0, 32], sizes = [8, 32], strides = [1, 1]} : vector<8x64xf32> to vector<8x32xf32>
    %399 = vector.extract_strided_slice %387 {offsets = [0, 64], sizes = [8, 32], strides = [1, 1]} : vector<8x96xf32> to vector<8x32xf32>
    %400 = vector.extract_strided_slice %388 {offsets = [0, 64], sizes = [8, 32], strides = [1, 1]} : vector<8x96xf32> to vector<8x32xf32>
    %401 = arith.addf %400, %385 : vector<8x32xf32>
    %402 = arith.mulf %397, %401 : vector<8x32xf32>
    %403 = arith.addf %399, %402 : vector<8x32xf32>
    %404 = math.tanh %403 : vector<8x32xf32>
    %405 = arith.subf %9, %404 : vector<8x32xf32>
    %406 = arith.mulf %398, %405 : vector<8x32xf32>
    %407 = arith.addf %404, %406 : vector<8x32xf32>
    %c56_127 = arith.constant 56 : index
    %c128_128 = arith.constant 128 : index
    %408 = vector.load %arg15[%c56_127, %c128_128] : memref<64x256xf32, #tpu.memory_space<vmem>>, vector<8x96xf32>
    %cst_129 = arith.constant dense<0.000000e+00> : vector<8x96xf32>
    %409 = tpu.matmul %9, %384, %cst_129 {dimension_numbers = #tpu.dot_dimension_numbers<[1], [0], [0], [1], [0, 0, 1, 1], [], []>} : vector<8x32xf32>, vector<32x96xf32>, vector<8x96xf32> -> vector<8x96xf32>
    %410 = vector.extract_strided_slice %408 {offsets = [0, 0], sizes = [8, 64], strides = [1, 1]} : vector<8x96xf32> to vector<8x64xf32>
    %411 = vector.extract_strided_slice %409 {offsets = [0, 0], sizes = [8, 64], strides = [1, 1]} : vector<8x96xf32> to vector<8x64xf32>
    %412 = arith.addf %410, %411 : vector<8x64xf32>
    %413 = arith.negf %412 : vector<8x64xf32>
    %414 = math.exp %413 : vector<8x64xf32>
    %cst_130 = arith.constant 1.000000e+00 : f32
    %415 = vector.broadcast %cst_130 : f32 to vector<8x64xf32>
    %416 = arith.addf %415, %414 : vector<8x64xf32>
    %417 = arith.divf %415, %416 : vector<8x64xf32>
    %418 = vector.extract_strided_slice %417 {offsets = [0, 0], sizes = [8, 32], strides = [1, 1]} : vector<8x64xf32> to vector<8x32xf32>
    %419 = vector.extract_strided_slice %417 {offsets = [0, 32], sizes = [8, 32], strides = [1, 1]} : vector<8x64xf32> to vector<8x32xf32>
    %420 = vector.extract_strided_slice %408 {offsets = [0, 64], sizes = [8, 32], strides = [1, 1]} : vector<8x96xf32> to vector<8x32xf32>
    %421 = vector.extract_strided_slice %409 {offsets = [0, 64], sizes = [8, 32], strides = [1, 1]} : vector<8x96xf32> to vector<8x32xf32>
    %422 = arith.addf %421, %386 : vector<8x32xf32>
    %423 = arith.mulf %418, %422 : vector<8x32xf32>
    %424 = arith.addf %420, %423 : vector<8x32xf32>
    %425 = math.tanh %424 : vector<8x32xf32>
    %426 = arith.subf %9, %425 : vector<8x32xf32>
    %427 = arith.mulf %419, %426 : vector<8x32xf32>
    %428 = arith.addf %425, %427 : vector<8x32xf32>
    %c8_131 = arith.constant 8 : index
    %c0_132 = arith.constant 0 : index
    %429 = vector.load %arg15[%c8_131, %c0_132] : memref<64x256xf32, #tpu.memory_space<vmem>>, vector<8x96xf32>
    %cst_133 = arith.constant dense<0.000000e+00> : vector<8x96xf32>
    %430 = tpu.matmul %407, %383, %cst_133 {dimension_numbers = #tpu.dot_dimension_numbers<[1], [0], [0], [1], [0, 0, 1, 1], [], []>} : vector<8x32xf32>, vector<32x96xf32>, vector<8x96xf32> -> vector<8x96xf32>
    %431 = vector.extract_strided_slice %429 {offsets = [0, 0], sizes = [8, 64], strides = [1, 1]} : vector<8x96xf32> to vector<8x64xf32>
    %432 = vector.extract_strided_slice %430 {offsets = [0, 0], sizes = [8, 64], strides = [1, 1]} : vector<8x96xf32> to vector<8x64xf32>
    %433 = arith.addf %431, %432 : vector<8x64xf32>
    %434 = arith.negf %433 : vector<8x64xf32>
    %435 = math.exp %434 : vector<8x64xf32>
    %cst_134 = arith.constant 1.000000e+00 : f32
    %436 = vector.broadcast %cst_134 : f32 to vector<8x64xf32>
    %437 = arith.addf %436, %435 : vector<8x64xf32>
    %438 = arith.divf %436, %437 : vector<8x64xf32>
    %439 = vector.extract_strided_slice %438 {offsets = [0, 0], sizes = [8, 32], strides = [1, 1]} : vector<8x64xf32> to vector<8x32xf32>
    %440 = vector.extract_strided_slice %438 {offsets = [0, 32], sizes = [8, 32], strides = [1, 1]} : vector<8x64xf32> to vector<8x32xf32>
    %441 = vector.extract_strided_slice %429 {offsets = [0, 64], sizes = [8, 32], strides = [1, 1]} : vector<8x96xf32> to vector<8x32xf32>
    %442 = vector.extract_strided_slice %430 {offsets = [0, 64], sizes = [8, 32], strides = [1, 1]} : vector<8x96xf32> to vector<8x32xf32>
    %443 = arith.addf %442, %385 : vector<8x32xf32>
    %444 = arith.mulf %439, %443 : vector<8x32xf32>
    %445 = arith.addf %441, %444 : vector<8x32xf32>
    %446 = math.tanh %445 : vector<8x32xf32>
    %447 = arith.subf %407, %446 : vector<8x32xf32>
    %448 = arith.mulf %440, %447 : vector<8x32xf32>
    %449 = arith.addf %446, %448 : vector<8x32xf32>
    %c48_135 = arith.constant 48 : index
    %c128_136 = arith.constant 128 : index
    %450 = vector.load %arg15[%c48_135, %c128_136] : memref<64x256xf32, #tpu.memory_space<vmem>>, vector<8x96xf32>
    %cst_137 = arith.constant dense<0.000000e+00> : vector<8x96xf32>
    %451 = tpu.matmul %428, %384, %cst_137 {dimension_numbers = #tpu.dot_dimension_numbers<[1], [0], [0], [1], [0, 0, 1, 1], [], []>} : vector<8x32xf32>, vector<32x96xf32>, vector<8x96xf32> -> vector<8x96xf32>
    %452 = vector.extract_strided_slice %450 {offsets = [0, 0], sizes = [8, 64], strides = [1, 1]} : vector<8x96xf32> to vector<8x64xf32>
    %453 = vector.extract_strided_slice %451 {offsets = [0, 0], sizes = [8, 64], strides = [1, 1]} : vector<8x96xf32> to vector<8x64xf32>
    %454 = arith.addf %452, %453 : vector<8x64xf32>
    %455 = arith.negf %454 : vector<8x64xf32>
    %456 = math.exp %455 : vector<8x64xf32>
    %cst_138 = arith.constant 1.000000e+00 : f32
    %457 = vector.broadcast %cst_138 : f32 to vector<8x64xf32>
    %458 = arith.addf %457, %456 : vector<8x64xf32>
    %459 = arith.divf %457, %458 : vector<8x64xf32>
    %460 = vector.extract_strided_slice %459 {offsets = [0, 0], sizes = [8, 32], strides = [1, 1]} : vector<8x64xf32> to vector<8x32xf32>
    %461 = vector.extract_strided_slice %459 {offsets = [0, 32], sizes = [8, 32], strides = [1, 1]} : vector<8x64xf32> to vector<8x32xf32>
    %462 = vector.extract_strided_slice %450 {offsets = [0, 64], sizes = [8, 32], strides = [1, 1]} : vector<8x96xf32> to vector<8x32xf32>
    %463 = vector.extract_strided_slice %451 {offsets = [0, 64], sizes = [8, 32], strides = [1, 1]} : vector<8x96xf32> to vector<8x32xf32>
    %464 = arith.addf %463, %386 : vector<8x32xf32>
    %465 = arith.mulf %460, %464 : vector<8x32xf32>
    %466 = arith.addf %462, %465 : vector<8x32xf32>
    %467 = math.tanh %466 : vector<8x32xf32>
    %468 = arith.subf %428, %467 : vector<8x32xf32>
    %469 = arith.mulf %461, %468 : vector<8x32xf32>
    %470 = arith.addf %467, %469 : vector<8x32xf32>
    %c16_139 = arith.constant 16 : index
    %c0_140 = arith.constant 0 : index
    %471 = vector.load %arg15[%c16_139, %c0_140] : memref<64x256xf32, #tpu.memory_space<vmem>>, vector<8x96xf32>
    %cst_141 = arith.constant dense<0.000000e+00> : vector<8x96xf32>
    %472 = tpu.matmul %449, %383, %cst_141 {dimension_numbers = #tpu.dot_dimension_numbers<[1], [0], [0], [1], [0, 0, 1, 1], [], []>} : vector<8x32xf32>, vector<32x96xf32>, vector<8x96xf32> -> vector<8x96xf32>
    %473 = vector.extract_strided_slice %471 {offsets = [0, 0], sizes = [8, 64], strides = [1, 1]} : vector<8x96xf32> to vector<8x64xf32>
    %474 = vector.extract_strided_slice %472 {offsets = [0, 0], sizes = [8, 64], strides = [1, 1]} : vector<8x96xf32> to vector<8x64xf32>
    %475 = arith.addf %473, %474 : vector<8x64xf32>
    %476 = arith.negf %475 : vector<8x64xf32>
    %477 = math.exp %476 : vector<8x64xf32>
    %cst_142 = arith.constant 1.000000e+00 : f32
    %478 = vector.broadcast %cst_142 : f32 to vector<8x64xf32>
    %479 = arith.addf %478, %477 : vector<8x64xf32>
    %480 = arith.divf %478, %479 : vector<8x64xf32>
    %481 = vector.extract_strided_slice %480 {offsets = [0, 0], sizes = [8, 32], strides = [1, 1]} : vector<8x64xf32> to vector<8x32xf32>
    %482 = vector.extract_strided_slice %480 {offsets = [0, 32], sizes = [8, 32], strides = [1, 1]} : vector<8x64xf32> to vector<8x32xf32>
    %483 = vector.extract_strided_slice %471 {offsets = [0, 64], sizes = [8, 32], strides = [1, 1]} : vector<8x96xf32> to vector<8x32xf32>
    %484 = vector.extract_strided_slice %472 {offsets = [0, 64], sizes = [8, 32], strides = [1, 1]} : vector<8x96xf32> to vector<8x32xf32>
    %485 = arith.addf %484, %385 : vector<8x32xf32>
    %486 = arith.mulf %481, %485 : vector<8x32xf32>
    %487 = arith.addf %483, %486 : vector<8x32xf32>
    %488 = math.tanh %487 : vector<8x32xf32>
    %489 = arith.subf %449, %488 : vector<8x32xf32>
    %490 = arith.mulf %482, %489 : vector<8x32xf32>
    %491 = arith.addf %488, %490 : vector<8x32xf32>
    %c40_143 = arith.constant 40 : index
    %c128_144 = arith.constant 128 : index
    %492 = vector.load %arg15[%c40_143, %c128_144] : memref<64x256xf32, #tpu.memory_space<vmem>>, vector<8x96xf32>
    %cst_145 = arith.constant dense<0.000000e+00> : vector<8x96xf32>
    %493 = tpu.matmul %470, %384, %cst_145 {dimension_numbers = #tpu.dot_dimension_numbers<[1], [0], [0], [1], [0, 0, 1, 1], [], []>} : vector<8x32xf32>, vector<32x96xf32>, vector<8x96xf32> -> vector<8x96xf32>
    %494 = vector.extract_strided_slice %492 {offsets = [0, 0], sizes = [8, 64], strides = [1, 1]} : vector<8x96xf32> to vector<8x64xf32>
    %495 = vector.extract_strided_slice %493 {offsets = [0, 0], sizes = [8, 64], strides = [1, 1]} : vector<8x96xf32> to vector<8x64xf32>
    %496 = arith.addf %494, %495 : vector<8x64xf32>
    %497 = arith.negf %496 : vector<8x64xf32>
    %498 = math.exp %497 : vector<8x64xf32>
    %cst_146 = arith.constant 1.000000e+00 : f32
    %499 = vector.broadcast %cst_146 : f32 to vector<8x64xf32>
    %500 = arith.addf %499, %498 : vector<8x64xf32>
    %501 = arith.divf %499, %500 : vector<8x64xf32>
    %502 = vector.extract_strided_slice %501 {offsets = [0, 0], sizes = [8, 32], strides = [1, 1]} : vector<8x64xf32> to vector<8x32xf32>
    %503 = vector.extract_strided_slice %501 {offsets = [0, 32], sizes = [8, 32], strides = [1, 1]} : vector<8x64xf32> to vector<8x32xf32>
    %504 = vector.extract_strided_slice %492 {offsets = [0, 64], sizes = [8, 32], strides = [1, 1]} : vector<8x96xf32> to vector<8x32xf32>
    %505 = vector.extract_strided_slice %493 {offsets = [0, 64], sizes = [8, 32], strides = [1, 1]} : vector<8x96xf32> to vector<8x32xf32>
    %506 = arith.addf %505, %386 : vector<8x32xf32>
    %507 = arith.mulf %502, %506 : vector<8x32xf32>
    %508 = arith.addf %504, %507 : vector<8x32xf32>
    %509 = math.tanh %508 : vector<8x32xf32>
    %510 = arith.subf %470, %509 : vector<8x32xf32>
    %511 = arith.mulf %503, %510 : vector<8x32xf32>
    %512 = arith.addf %509, %511 : vector<8x32xf32>
    %c24_147 = arith.constant 24 : index
    %c0_148 = arith.constant 0 : index
    %513 = vector.load %arg15[%c24_147, %c0_148] : memref<64x256xf32, #tpu.memory_space<vmem>>, vector<8x96xf32>
    %cst_149 = arith.constant dense<0.000000e+00> : vector<8x96xf32>
    %514 = tpu.matmul %491, %383, %cst_149 {dimension_numbers = #tpu.dot_dimension_numbers<[1], [0], [0], [1], [0, 0, 1, 1], [], []>} : vector<8x32xf32>, vector<32x96xf32>, vector<8x96xf32> -> vector<8x96xf32>
    %515 = vector.extract_strided_slice %513 {offsets = [0, 0], sizes = [8, 64], strides = [1, 1]} : vector<8x96xf32> to vector<8x64xf32>
    %516 = vector.extract_strided_slice %514 {offsets = [0, 0], sizes = [8, 64], strides = [1, 1]} : vector<8x96xf32> to vector<8x64xf32>
    %517 = arith.addf %515, %516 : vector<8x64xf32>
    %518 = arith.negf %517 : vector<8x64xf32>
    %519 = math.exp %518 : vector<8x64xf32>
    %cst_150 = arith.constant 1.000000e+00 : f32
    %520 = vector.broadcast %cst_150 : f32 to vector<8x64xf32>
    %521 = arith.addf %520, %519 : vector<8x64xf32>
    %522 = arith.divf %520, %521 : vector<8x64xf32>
    %523 = vector.extract_strided_slice %522 {offsets = [0, 0], sizes = [8, 32], strides = [1, 1]} : vector<8x64xf32> to vector<8x32xf32>
    %524 = vector.extract_strided_slice %522 {offsets = [0, 32], sizes = [8, 32], strides = [1, 1]} : vector<8x64xf32> to vector<8x32xf32>
    %525 = vector.extract_strided_slice %513 {offsets = [0, 64], sizes = [8, 32], strides = [1, 1]} : vector<8x96xf32> to vector<8x32xf32>
    %526 = vector.extract_strided_slice %514 {offsets = [0, 64], sizes = [8, 32], strides = [1, 1]} : vector<8x96xf32> to vector<8x32xf32>
    %527 = arith.addf %526, %385 : vector<8x32xf32>
    %528 = arith.mulf %523, %527 : vector<8x32xf32>
    %529 = arith.addf %525, %528 : vector<8x32xf32>
    %530 = math.tanh %529 : vector<8x32xf32>
    %531 = arith.subf %491, %530 : vector<8x32xf32>
    %532 = arith.mulf %524, %531 : vector<8x32xf32>
    %533 = arith.addf %530, %532 : vector<8x32xf32>
    %c32_151 = arith.constant 32 : index
    %c128_152 = arith.constant 128 : index
    %534 = vector.load %arg15[%c32_151, %c128_152] : memref<64x256xf32, #tpu.memory_space<vmem>>, vector<8x96xf32>
    %cst_153 = arith.constant dense<0.000000e+00> : vector<8x96xf32>
    %535 = tpu.matmul %512, %384, %cst_153 {dimension_numbers = #tpu.dot_dimension_numbers<[1], [0], [0], [1], [0, 0, 1, 1], [], []>} : vector<8x32xf32>, vector<32x96xf32>, vector<8x96xf32> -> vector<8x96xf32>
    %536 = vector.extract_strided_slice %534 {offsets = [0, 0], sizes = [8, 64], strides = [1, 1]} : vector<8x96xf32> to vector<8x64xf32>
    %537 = vector.extract_strided_slice %535 {offsets = [0, 0], sizes = [8, 64], strides = [1, 1]} : vector<8x96xf32> to vector<8x64xf32>
    %538 = arith.addf %536, %537 : vector<8x64xf32>
    %539 = arith.negf %538 : vector<8x64xf32>
    %540 = math.exp %539 : vector<8x64xf32>
    %cst_154 = arith.constant 1.000000e+00 : f32
    %541 = vector.broadcast %cst_154 : f32 to vector<8x64xf32>
    %542 = arith.addf %541, %540 : vector<8x64xf32>
    %543 = arith.divf %541, %542 : vector<8x64xf32>
    %544 = vector.extract_strided_slice %543 {offsets = [0, 0], sizes = [8, 32], strides = [1, 1]} : vector<8x64xf32> to vector<8x32xf32>
    %545 = vector.extract_strided_slice %543 {offsets = [0, 32], sizes = [8, 32], strides = [1, 1]} : vector<8x64xf32> to vector<8x32xf32>
    %546 = vector.extract_strided_slice %534 {offsets = [0, 64], sizes = [8, 32], strides = [1, 1]} : vector<8x96xf32> to vector<8x32xf32>
    %547 = vector.extract_strided_slice %535 {offsets = [0, 64], sizes = [8, 32], strides = [1, 1]} : vector<8x96xf32> to vector<8x32xf32>
    %548 = arith.addf %547, %386 : vector<8x32xf32>
    %549 = arith.mulf %544, %548 : vector<8x32xf32>
    %550 = arith.addf %546, %549 : vector<8x32xf32>
    %551 = math.tanh %550 : vector<8x32xf32>
    %552 = arith.subf %512, %551 : vector<8x32xf32>
    %553 = arith.mulf %545, %552 : vector<8x32xf32>
    %554 = arith.addf %551, %553 : vector<8x32xf32>
    %c32_155 = arith.constant 32 : index
    %c0_156 = arith.constant 0 : index
    %555 = vector.load %arg15[%c32_155, %c0_156] : memref<64x256xf32, #tpu.memory_space<vmem>>, vector<8x96xf32>
    %cst_157 = arith.constant dense<0.000000e+00> : vector<8x96xf32>
    %556 = tpu.matmul %533, %383, %cst_157 {dimension_numbers = #tpu.dot_dimension_numbers<[1], [0], [0], [1], [0, 0, 1, 1], [], []>} : vector<8x32xf32>, vector<32x96xf32>, vector<8x96xf32> -> vector<8x96xf32>
    %557 = vector.extract_strided_slice %555 {offsets = [0, 0], sizes = [8, 64], strides = [1, 1]} : vector<8x96xf32> to vector<8x64xf32>
    %558 = vector.extract_strided_slice %556 {offsets = [0, 0], sizes = [8, 64], strides = [1, 1]} : vector<8x96xf32> to vector<8x64xf32>
    %559 = arith.addf %557, %558 : vector<8x64xf32>
    %560 = arith.negf %559 : vector<8x64xf32>
    %561 = math.exp %560 : vector<8x64xf32>
    %cst_158 = arith.constant 1.000000e+00 : f32
    %562 = vector.broadcast %cst_158 : f32 to vector<8x64xf32>
    %563 = arith.addf %562, %561 : vector<8x64xf32>
    %564 = arith.divf %562, %563 : vector<8x64xf32>
    %565 = vector.extract_strided_slice %564 {offsets = [0, 0], sizes = [8, 32], strides = [1, 1]} : vector<8x64xf32> to vector<8x32xf32>
    %566 = vector.extract_strided_slice %564 {offsets = [0, 32], sizes = [8, 32], strides = [1, 1]} : vector<8x64xf32> to vector<8x32xf32>
    %567 = vector.extract_strided_slice %555 {offsets = [0, 64], sizes = [8, 32], strides = [1, 1]} : vector<8x96xf32> to vector<8x32xf32>
    %568 = vector.extract_strided_slice %556 {offsets = [0, 64], sizes = [8, 32], strides = [1, 1]} : vector<8x96xf32> to vector<8x32xf32>
    %569 = arith.addf %568, %385 : vector<8x32xf32>
    %570 = arith.mulf %565, %569 : vector<8x32xf32>
    %571 = arith.addf %567, %570 : vector<8x32xf32>
    %572 = math.tanh %571 : vector<8x32xf32>
    %573 = arith.subf %533, %572 : vector<8x32xf32>
    %574 = arith.mulf %566, %573 : vector<8x32xf32>
    %575 = arith.addf %572, %574 : vector<8x32xf32>
    %c24_159 = arith.constant 24 : index
    %c128_160 = arith.constant 128 : index
    %576 = vector.load %arg15[%c24_159, %c128_160] : memref<64x256xf32, #tpu.memory_space<vmem>>, vector<8x96xf32>
    %cst_161 = arith.constant dense<0.000000e+00> : vector<8x96xf32>
    %577 = tpu.matmul %554, %384, %cst_161 {dimension_numbers = #tpu.dot_dimension_numbers<[1], [0], [0], [1], [0, 0, 1, 1], [], []>} : vector<8x32xf32>, vector<32x96xf32>, vector<8x96xf32> -> vector<8x96xf32>
    %578 = vector.extract_strided_slice %576 {offsets = [0, 0], sizes = [8, 64], strides = [1, 1]} : vector<8x96xf32> to vector<8x64xf32>
    %579 = vector.extract_strided_slice %577 {offsets = [0, 0], sizes = [8, 64], strides = [1, 1]} : vector<8x96xf32> to vector<8x64xf32>
    %580 = arith.addf %578, %579 : vector<8x64xf32>
    %581 = arith.negf %580 : vector<8x64xf32>
    %582 = math.exp %581 : vector<8x64xf32>
    %cst_162 = arith.constant 1.000000e+00 : f32
    %583 = vector.broadcast %cst_162 : f32 to vector<8x64xf32>
    %584 = arith.addf %583, %582 : vector<8x64xf32>
    %585 = arith.divf %583, %584 : vector<8x64xf32>
    %586 = vector.extract_strided_slice %585 {offsets = [0, 0], sizes = [8, 32], strides = [1, 1]} : vector<8x64xf32> to vector<8x32xf32>
    %587 = vector.extract_strided_slice %585 {offsets = [0, 32], sizes = [8, 32], strides = [1, 1]} : vector<8x64xf32> to vector<8x32xf32>
    %588 = vector.extract_strided_slice %576 {offsets = [0, 64], sizes = [8, 32], strides = [1, 1]} : vector<8x96xf32> to vector<8x32xf32>
    %589 = vector.extract_strided_slice %577 {offsets = [0, 64], sizes = [8, 32], strides = [1, 1]} : vector<8x96xf32> to vector<8x32xf32>
    %590 = arith.addf %589, %386 : vector<8x32xf32>
    %591 = arith.mulf %586, %590 : vector<8x32xf32>
    %592 = arith.addf %588, %591 : vector<8x32xf32>
    %593 = math.tanh %592 : vector<8x32xf32>
    %594 = arith.subf %554, %593 : vector<8x32xf32>
    %595 = arith.mulf %587, %594 : vector<8x32xf32>
    %596 = arith.addf %593, %595 : vector<8x32xf32>
    %c40_163 = arith.constant 40 : index
    %c0_164 = arith.constant 0 : index
    %597 = vector.load %arg15[%c40_163, %c0_164] : memref<64x256xf32, #tpu.memory_space<vmem>>, vector<8x96xf32>
    %cst_165 = arith.constant dense<0.000000e+00> : vector<8x96xf32>
    %598 = tpu.matmul %575, %383, %cst_165 {dimension_numbers = #tpu.dot_dimension_numbers<[1], [0], [0], [1], [0, 0, 1, 1], [], []>} : vector<8x32xf32>, vector<32x96xf32>, vector<8x96xf32> -> vector<8x96xf32>
    %599 = vector.extract_strided_slice %597 {offsets = [0, 0], sizes = [8, 64], strides = [1, 1]} : vector<8x96xf32> to vector<8x64xf32>
    %600 = vector.extract_strided_slice %598 {offsets = [0, 0], sizes = [8, 64], strides = [1, 1]} : vector<8x96xf32> to vector<8x64xf32>
    %601 = arith.addf %599, %600 : vector<8x64xf32>
    %602 = arith.negf %601 : vector<8x64xf32>
    %603 = math.exp %602 : vector<8x64xf32>
    %cst_166 = arith.constant 1.000000e+00 : f32
    %604 = vector.broadcast %cst_166 : f32 to vector<8x64xf32>
    %605 = arith.addf %604, %603 : vector<8x64xf32>
    %606 = arith.divf %604, %605 : vector<8x64xf32>
    %607 = vector.extract_strided_slice %606 {offsets = [0, 0], sizes = [8, 32], strides = [1, 1]} : vector<8x64xf32> to vector<8x32xf32>
    %608 = vector.extract_strided_slice %606 {offsets = [0, 32], sizes = [8, 32], strides = [1, 1]} : vector<8x64xf32> to vector<8x32xf32>
    %609 = vector.extract_strided_slice %597 {offsets = [0, 64], sizes = [8, 32], strides = [1, 1]} : vector<8x96xf32> to vector<8x32xf32>
    %610 = vector.extract_strided_slice %598 {offsets = [0, 64], sizes = [8, 32], strides = [1, 1]} : vector<8x96xf32> to vector<8x32xf32>
    %611 = arith.addf %610, %385 : vector<8x32xf32>
    %612 = arith.mulf %607, %611 : vector<8x32xf32>
    %613 = arith.addf %609, %612 : vector<8x32xf32>
    %614 = math.tanh %613 : vector<8x32xf32>
    %615 = arith.subf %575, %614 : vector<8x32xf32>
    %616 = arith.mulf %608, %615 : vector<8x32xf32>
    %617 = arith.addf %614, %616 : vector<8x32xf32>
    %c16_167 = arith.constant 16 : index
    %c128_168 = arith.constant 128 : index
    %618 = vector.load %arg15[%c16_167, %c128_168] : memref<64x256xf32, #tpu.memory_space<vmem>>, vector<8x96xf32>
    %cst_169 = arith.constant dense<0.000000e+00> : vector<8x96xf32>
    %619 = tpu.matmul %596, %384, %cst_169 {dimension_numbers = #tpu.dot_dimension_numbers<[1], [0], [0], [1], [0, 0, 1, 1], [], []>} : vector<8x32xf32>, vector<32x96xf32>, vector<8x96xf32> -> vector<8x96xf32>
    %620 = vector.extract_strided_slice %618 {offsets = [0, 0], sizes = [8, 64], strides = [1, 1]} : vector<8x96xf32> to vector<8x64xf32>
    %621 = vector.extract_strided_slice %619 {offsets = [0, 0], sizes = [8, 64], strides = [1, 1]} : vector<8x96xf32> to vector<8x64xf32>
    %622 = arith.addf %620, %621 : vector<8x64xf32>
    %623 = arith.negf %622 : vector<8x64xf32>
    %624 = math.exp %623 : vector<8x64xf32>
    %cst_170 = arith.constant 1.000000e+00 : f32
    %625 = vector.broadcast %cst_170 : f32 to vector<8x64xf32>
    %626 = arith.addf %625, %624 : vector<8x64xf32>
    %627 = arith.divf %625, %626 : vector<8x64xf32>
    %628 = vector.extract_strided_slice %627 {offsets = [0, 0], sizes = [8, 32], strides = [1, 1]} : vector<8x64xf32> to vector<8x32xf32>
    %629 = vector.extract_strided_slice %627 {offsets = [0, 32], sizes = [8, 32], strides = [1, 1]} : vector<8x64xf32> to vector<8x32xf32>
    %630 = vector.extract_strided_slice %618 {offsets = [0, 64], sizes = [8, 32], strides = [1, 1]} : vector<8x96xf32> to vector<8x32xf32>
    %631 = vector.extract_strided_slice %619 {offsets = [0, 64], sizes = [8, 32], strides = [1, 1]} : vector<8x96xf32> to vector<8x32xf32>
    %632 = arith.addf %631, %386 : vector<8x32xf32>
    %633 = arith.mulf %628, %632 : vector<8x32xf32>
    %634 = arith.addf %630, %633 : vector<8x32xf32>
    %635 = math.tanh %634 : vector<8x32xf32>
    %636 = arith.subf %596, %635 : vector<8x32xf32>
    %637 = arith.mulf %629, %636 : vector<8x32xf32>
    %638 = arith.addf %635, %637 : vector<8x32xf32>
    %c48_171 = arith.constant 48 : index
    %c0_172 = arith.constant 0 : index
    %639 = vector.load %arg15[%c48_171, %c0_172] : memref<64x256xf32, #tpu.memory_space<vmem>>, vector<8x96xf32>
    %cst_173 = arith.constant dense<0.000000e+00> : vector<8x96xf32>
    %640 = tpu.matmul %617, %383, %cst_173 {dimension_numbers = #tpu.dot_dimension_numbers<[1], [0], [0], [1], [0, 0, 1, 1], [], []>} : vector<8x32xf32>, vector<32x96xf32>, vector<8x96xf32> -> vector<8x96xf32>
    %641 = vector.extract_strided_slice %639 {offsets = [0, 0], sizes = [8, 64], strides = [1, 1]} : vector<8x96xf32> to vector<8x64xf32>
    %642 = vector.extract_strided_slice %640 {offsets = [0, 0], sizes = [8, 64], strides = [1, 1]} : vector<8x96xf32> to vector<8x64xf32>
    %643 = arith.addf %641, %642 : vector<8x64xf32>
    %644 = arith.negf %643 : vector<8x64xf32>
    %645 = math.exp %644 : vector<8x64xf32>
    %cst_174 = arith.constant 1.000000e+00 : f32
    %646 = vector.broadcast %cst_174 : f32 to vector<8x64xf32>
    %647 = arith.addf %646, %645 : vector<8x64xf32>
    %648 = arith.divf %646, %647 : vector<8x64xf32>
    %649 = vector.extract_strided_slice %648 {offsets = [0, 0], sizes = [8, 32], strides = [1, 1]} : vector<8x64xf32> to vector<8x32xf32>
    %650 = vector.extract_strided_slice %648 {offsets = [0, 32], sizes = [8, 32], strides = [1, 1]} : vector<8x64xf32> to vector<8x32xf32>
    %651 = vector.extract_strided_slice %639 {offsets = [0, 64], sizes = [8, 32], strides = [1, 1]} : vector<8x96xf32> to vector<8x32xf32>
    %652 = vector.extract_strided_slice %640 {offsets = [0, 64], sizes = [8, 32], strides = [1, 1]} : vector<8x96xf32> to vector<8x32xf32>
    %653 = arith.addf %652, %385 : vector<8x32xf32>
    %654 = arith.mulf %649, %653 : vector<8x32xf32>
    %655 = arith.addf %651, %654 : vector<8x32xf32>
    %656 = math.tanh %655 : vector<8x32xf32>
    %657 = arith.subf %617, %656 : vector<8x32xf32>
    %658 = arith.mulf %650, %657 : vector<8x32xf32>
    %659 = arith.addf %656, %658 : vector<8x32xf32>
    %c8_175 = arith.constant 8 : index
    %c128_176 = arith.constant 128 : index
    %660 = vector.load %arg15[%c8_175, %c128_176] : memref<64x256xf32, #tpu.memory_space<vmem>>, vector<8x96xf32>
    %cst_177 = arith.constant dense<0.000000e+00> : vector<8x96xf32>
    %661 = tpu.matmul %638, %384, %cst_177 {dimension_numbers = #tpu.dot_dimension_numbers<[1], [0], [0], [1], [0, 0, 1, 1], [], []>} : vector<8x32xf32>, vector<32x96xf32>, vector<8x96xf32> -> vector<8x96xf32>
    %662 = vector.extract_strided_slice %660 {offsets = [0, 0], sizes = [8, 64], strides = [1, 1]} : vector<8x96xf32> to vector<8x64xf32>
    %663 = vector.extract_strided_slice %661 {offsets = [0, 0], sizes = [8, 64], strides = [1, 1]} : vector<8x96xf32> to vector<8x64xf32>
    %664 = arith.addf %662, %663 : vector<8x64xf32>
    %665 = arith.negf %664 : vector<8x64xf32>
    %666 = math.exp %665 : vector<8x64xf32>
    %cst_178 = arith.constant 1.000000e+00 : f32
    %667 = vector.broadcast %cst_178 : f32 to vector<8x64xf32>
    %668 = arith.addf %667, %666 : vector<8x64xf32>
    %669 = arith.divf %667, %668 : vector<8x64xf32>
    %670 = vector.extract_strided_slice %669 {offsets = [0, 0], sizes = [8, 32], strides = [1, 1]} : vector<8x64xf32> to vector<8x32xf32>
    %671 = vector.extract_strided_slice %669 {offsets = [0, 32], sizes = [8, 32], strides = [1, 1]} : vector<8x64xf32> to vector<8x32xf32>
    %672 = vector.extract_strided_slice %660 {offsets = [0, 64], sizes = [8, 32], strides = [1, 1]} : vector<8x96xf32> to vector<8x32xf32>
    %673 = vector.extract_strided_slice %661 {offsets = [0, 64], sizes = [8, 32], strides = [1, 1]} : vector<8x96xf32> to vector<8x32xf32>
    %674 = arith.addf %673, %386 : vector<8x32xf32>
    %675 = arith.mulf %670, %674 : vector<8x32xf32>
    %676 = arith.addf %672, %675 : vector<8x32xf32>
    %677 = math.tanh %676 : vector<8x32xf32>
    %678 = arith.subf %638, %677 : vector<8x32xf32>
    %679 = arith.mulf %671, %678 : vector<8x32xf32>
    %680 = arith.addf %677, %679 : vector<8x32xf32>
    %c56_179 = arith.constant 56 : index
    %c0_180 = arith.constant 0 : index
    %681 = vector.load %arg15[%c56_179, %c0_180] : memref<64x256xf32, #tpu.memory_space<vmem>>, vector<8x96xf32>
    %cst_181 = arith.constant dense<0.000000e+00> : vector<8x96xf32>
    %682 = tpu.matmul %659, %383, %cst_181 {dimension_numbers = #tpu.dot_dimension_numbers<[1], [0], [0], [1], [0, 0, 1, 1], [], []>} : vector<8x32xf32>, vector<32x96xf32>, vector<8x96xf32> -> vector<8x96xf32>
    %683 = vector.extract_strided_slice %681 {offsets = [0, 0], sizes = [8, 64], strides = [1, 1]} : vector<8x96xf32> to vector<8x64xf32>
    %684 = vector.extract_strided_slice %682 {offsets = [0, 0], sizes = [8, 64], strides = [1, 1]} : vector<8x96xf32> to vector<8x64xf32>
    %685 = arith.addf %683, %684 : vector<8x64xf32>
    %686 = arith.negf %685 : vector<8x64xf32>
    %687 = math.exp %686 : vector<8x64xf32>
    %cst_182 = arith.constant 1.000000e+00 : f32
    %688 = vector.broadcast %cst_182 : f32 to vector<8x64xf32>
    %689 = arith.addf %688, %687 : vector<8x64xf32>
    %690 = arith.divf %688, %689 : vector<8x64xf32>
    %691 = vector.extract_strided_slice %690 {offsets = [0, 0], sizes = [8, 32], strides = [1, 1]} : vector<8x64xf32> to vector<8x32xf32>
    %692 = vector.extract_strided_slice %690 {offsets = [0, 32], sizes = [8, 32], strides = [1, 1]} : vector<8x64xf32> to vector<8x32xf32>
    %693 = vector.extract_strided_slice %681 {offsets = [0, 64], sizes = [8, 32], strides = [1, 1]} : vector<8x96xf32> to vector<8x32xf32>
    %694 = vector.extract_strided_slice %682 {offsets = [0, 64], sizes = [8, 32], strides = [1, 1]} : vector<8x96xf32> to vector<8x32xf32>
    %695 = arith.addf %694, %385 : vector<8x32xf32>
    %696 = arith.mulf %691, %695 : vector<8x32xf32>
    %697 = arith.addf %693, %696 : vector<8x32xf32>
    %698 = math.tanh %697 : vector<8x32xf32>
    %699 = arith.subf %659, %698 : vector<8x32xf32>
    %700 = arith.mulf %692, %699 : vector<8x32xf32>
    %701 = arith.addf %698, %700 : vector<8x32xf32>
    %c0_183 = arith.constant 0 : index
    %c128_184 = arith.constant 128 : index
    %702 = vector.load %arg15[%c0_183, %c128_184] : memref<64x256xf32, #tpu.memory_space<vmem>>, vector<8x96xf32>
    %cst_185 = arith.constant dense<0.000000e+00> : vector<8x96xf32>
    %703 = tpu.matmul %680, %384, %cst_185 {dimension_numbers = #tpu.dot_dimension_numbers<[1], [0], [0], [1], [0, 0, 1, 1], [], []>} : vector<8x32xf32>, vector<32x96xf32>, vector<8x96xf32> -> vector<8x96xf32>
    %704 = vector.extract_strided_slice %702 {offsets = [0, 0], sizes = [8, 64], strides = [1, 1]} : vector<8x96xf32> to vector<8x64xf32>
    %705 = vector.extract_strided_slice %703 {offsets = [0, 0], sizes = [8, 64], strides = [1, 1]} : vector<8x96xf32> to vector<8x64xf32>
    %706 = arith.addf %704, %705 : vector<8x64xf32>
    %707 = arith.negf %706 : vector<8x64xf32>
    %708 = math.exp %707 : vector<8x64xf32>
    %cst_186 = arith.constant 1.000000e+00 : f32
    %709 = vector.broadcast %cst_186 : f32 to vector<8x64xf32>
    %710 = arith.addf %709, %708 : vector<8x64xf32>
    %711 = arith.divf %709, %710 : vector<8x64xf32>
    %712 = vector.extract_strided_slice %711 {offsets = [0, 0], sizes = [8, 32], strides = [1, 1]} : vector<8x64xf32> to vector<8x32xf32>
    %713 = vector.extract_strided_slice %711 {offsets = [0, 32], sizes = [8, 32], strides = [1, 1]} : vector<8x64xf32> to vector<8x32xf32>
    %714 = vector.extract_strided_slice %702 {offsets = [0, 64], sizes = [8, 32], strides = [1, 1]} : vector<8x96xf32> to vector<8x32xf32>
    %715 = vector.extract_strided_slice %703 {offsets = [0, 64], sizes = [8, 32], strides = [1, 1]} : vector<8x96xf32> to vector<8x32xf32>
    %716 = arith.addf %715, %386 : vector<8x32xf32>
    %717 = arith.mulf %712, %716 : vector<8x32xf32>
    %718 = arith.addf %714, %717 : vector<8x32xf32>
    %719 = math.tanh %718 : vector<8x32xf32>
    %720 = arith.subf %680, %719 : vector<8x32xf32>
    %721 = arith.mulf %713, %720 : vector<8x32xf32>
    %722 = arith.addf %719, %721 : vector<8x32xf32>
    %723 = tpu.concatenate %722, %701, %369, %348 in 1 : vector<8x32xf32>, vector<8x32xf32>, vector<8x32xf32>, vector<8x32xf32> -> vector<8x128xf32>
    %c0_187 = arith.constant 0 : index
    %c0_188 = arith.constant 0 : index
    %724 = vector.load %arg12[%c0_187, %c0_188] : memref<128x32xf32, #tpu.memory_space<vmem>>, vector<128x32xf32>
    %cst_189 = arith.constant dense<0.000000e+00> : vector<8x32xf32>
    %725 = tpu.matmul %723, %724, %cst_189 {dimension_numbers = #tpu.dot_dimension_numbers<[1], [0], [0], [1], [0, 0, 1, 1], [], []>} : vector<8x128xf32>, vector<128x32xf32>, vector<8x32xf32> -> vector<8x32xf32>
    %c0_190 = arith.constant 0 : index
    %c0_191 = arith.constant 0 : index
    %726 = vector.load %arg13[%c0_190, %c0_191] : memref<1x32xf32, #tpu.memory_space<vmem>>, vector<1x32xf32>
    %727 = vector.broadcast %726 : vector<1x32xf32> to vector<8x32xf32>
    %728 = arith.addf %725, %727 : vector<8x32xf32>
    %cst_192 = arith.constant 0.000000e+00 : f32
    %729 = vector.broadcast %cst_192 : f32 to vector<8x32xf32>
    %730 = arith.maximumf %728, %729 : vector<8x32xf32>
    %c0_193 = arith.constant 0 : index
    %c0_194 = arith.constant 0 : index
    %731 = vector.load %arg14[%c0_193, %c0_194] : memref<8x32xf32, #tpu.memory_space<vmem>>, vector<8x32xf32>
    tpu.vector_store %arg14[%c0_193, %c0_194], %730 {strides = array<i32>} : memref<8x32xf32, #tpu.memory_space<vmem>>, vector<8x32xf32>,
    return
  }
}

</mosaic_0001>

<llo_original>
// kernel: encoder_forward.1
$region0: #{encoder_forward.1}
  #allocation0 [shape = 'u32[]', space=smem, size = 0x4, offset = 0x4, fixed_abs, tag = 'smem constant byte address 0x4 - core index']
  #allocation1 [shape = 'u32[72,128]{1,0:T(1,128)}', space=vmem, size = 0x9000, scoped, tag = 'internal scratch']
  #allocation2 [shape = 'f32[64,256]{1,0:T(8,128)}', space=vmem, size = 0x10000, scoped, tag = 'scratch operand']
  #allocation3 [shape = 'f32[64,32]{1,0:T(8,128)}', space=vmem, size = 0x8000, scoped, tag = 'scratch operand']
  #allocation4 [shape = 'f32[64,32]{1,0:T(8,128)}', space=vmem, size = 0x8000, scoped, tag = 'scratch operand']
  %s0 = inlined_call_operand.vmem [shape: s32[64,1], index: 0, kind: input, shape index: {}]
  %s1 = inlined_call_operand.vmem [shape: f32[128,32], index: 1, kind: input, shape index: {}]
  %s2 = inlined_call_operand.vmem [shape: f32[32,256], index: 2, kind: input, shape index: {}]
  %s3 = inlined_call_operand.vmem [shape: f32[1,256], index: 3, kind: input, shape index: {}]
  %s4 = inlined_call_operand.vmem [shape: f32[32,256], index: 4, kind: input, shape index: {}]
  %s5 = inlined_call_operand.vmem [shape: f32[32,256], index: 5, kind: input, shape index: {}]
  %s6 = inlined_call_operand.vmem [shape: f32[1,256], index: 6, kind: input, shape index: {}]
  %s7 = inlined_call_operand.vmem [shape: f32[32,96], index: 7, kind: input, shape index: {}]
  %s8 = inlined_call_operand.vmem [shape: f32[32,96], index: 8, kind: input, shape index: {}]
  %s9 = inlined_call_operand.vmem [shape: f32[32,96], index: 9, kind: input, shape index: {}]
  %s10 = inlined_call_operand.vmem [shape: f32[32,96], index: 10, kind: input, shape index: {}]
  %s11 = inlined_call_operand.vmem [shape: f32[8,128], index: 11, kind: input, shape index: {}]
  %s12 = inlined_call_operand.vmem [shape: f32[128,32], index: 12, kind: input, shape index: {}]
  %s13 = inlined_call_operand.vmem [shape: f32[1,32], index: 13, kind: input, shape index: {}]
  %s14 = inlined_call_operand.vmem [shape: f32[8,32], index: 14, kind: output, shape index: {}]
  %s15 = sld [smem:[#allocation0]]
  $region66: #{encoder_forward.1} parent=0
    _
  %s17 = ssub.s32 1, %s15
  %s18 = scalar_select 0, %s17, %s15
  // Predicated region
  $region2: #{encoder_forward.1} parent=0 // pred_check
    _
  $region3: #{encoder_forward.1} parent=0 // pred_check_branch
    %20 = sbr.rel (0) target = $region5
  $region4: #{encoder_forward.1} parent=0 // pred_region
    _
  $region5: #{encoder_forward.1} parent=0 // pred_fallthru
    _
  // Predicated region
  $region6: #{encoder_forward.1} parent=0 // pred_check
    _
  $region7: #{encoder_forward.1} parent=0 // pred_check_branch
    %22 = sbr.rel (0) target = $region9
  $region8: #{encoder_forward.1} parent=0 // pred_region
    _
  $region9: #{encoder_forward.1} parent=0 // pred_fallthru
    _
  // Predicated region
  $region10: #{encoder_forward.1} parent=0 // pred_check
    _
  $region11: #{encoder_forward.1} parent=0 // pred_check_branch
    %24 = sbr.rel (0) target = $region13
  $region12: #{encoder_forward.1} parent=0 // pred_region
    _
  $region13: #{encoder_forward.1} parent=0 // pred_fallthru
    _
  // Predicated region
  $region14: #{encoder_forward.1} parent=0 // pred_check
    _
  $region15: #{encoder_forward.1} parent=0 // pred_check_branch
    %26 = sbr.rel (0) target = $region17
  $region16: #{encoder_forward.1} parent=0 // pred_region
    _
  $region17: #{encoder_forward.1} parent=0 // pred_fallthru
    _
  // Predicated region
  $region18: #{encoder_forward.1} parent=0 // pred_check
    _
  $region19: #{encoder_forward.1} parent=0 // pred_check_branch
    %28 = sbr.rel (0) target = $region21
  $region20: #{encoder_forward.1} parent=0 // pred_region
    _
  $region21: #{encoder_forward.1} parent=0 // pred_fallthru
    _
  // Predicated region
  $region22: #{encoder_forward.1} parent=0 // pred_check
    _
  $region23: #{encoder_forward.1} parent=0 // pred_check_branch
    %30 = sbr.rel (0) target = $region25
  $region24: #{encoder_forward.1} parent=0 // pred_region
    _
  $region25: #{encoder_forward.1} parent=0 // pred_fallthru
    _
  // Predicated region
  $region26: #{encoder_forward.1} parent=0 // pred_check
    _
  $region27: #{encoder_forward.1} parent=0 // pred_check_branch
    %32 = sbr.rel (0) target = $region29
  $region28: #{encoder_forward.1} parent=0 // pred_region
    _
  $region29: #{encoder_forward.1} parent=0 // pred_fallthru
    _
  // Predicated region
  $region30: #{encoder_forward.1} parent=0 // pred_check
    _
  $region31: #{encoder_forward.1} parent=0 // pred_check_branch
    %34 = sbr.rel (0) target = $region33
  $region32: #{encoder_forward.1} parent=0 // pred_region
    _
  $region33: #{encoder_forward.1} parent=0 // pred_fallthru
    _
  // Predicated region
  $region34: #{encoder_forward.1} parent=0 // pred_check
    _
  $region35: #{encoder_forward.1} parent=0 // pred_check_branch
    %36 = sbr.rel (0) target = $region37
  $region36: #{encoder_forward.1} parent=0 // pred_region
    _
  $region37: #{encoder_forward.1} parent=0 // pred_fallthru
    _
  // Predicated region
  $region38: #{encoder_forward.1} parent=0 // pred_check
    _
  $region39: #{encoder_forward.1} parent=0 // pred_check_branch
    %38 = sbr.rel (0) target = $region41
  $region40: #{encoder_forward.1} parent=0 // pred_region
    _
  $region41: #{encoder_forward.1} parent=0 // pred_fallthru
    _
  // Predicated region
  $region42: #{encoder_forward.1} parent=0 // pred_check
    _
  $region43: #{encoder_forward.1} parent=0 // pred_check_branch
    %40 = sbr.rel (0) target = $region45
  $region44: #{encoder_forward.1} parent=0 // pred_region
    _
  $region45: #{encoder_forward.1} parent=0 // pred_fallthru
    _
  // Predicated region
  $region46: #{encoder_forward.1} parent=0 // pred_check
    _
  $region47: #{encoder_forward.1} parent=0 // pred_check_branch
    %42 = sbr.rel (0) target = $region49
  $region48: #{encoder_forward.1} parent=0 // pred_region
    _
  $region49: #{encoder_forward.1} parent=0 // pred_fallthru
    _
  // Predicated region
  $region50: #{encoder_forward.1} parent=0 // pred_check
    _
  $region51: #{encoder_forward.1} parent=0 // pred_check_branch
    %44 = sbr.rel (0) target = $region53
  $region52: #{encoder_forward.1} parent=0 // pred_region
    _
  $region53: #{encoder_forward.1} parent=0 // pred_fallthru
    _
  // Predicated region
  $region54: #{encoder_forward.1} parent=0 // pred_check
    _
  $region55: #{encoder_forward.1} parent=0 // pred_check_branch
    %46 = sbr.rel (0) target = $region57
  $region56: #{encoder_forward.1} parent=0 // pred_region
    _
  $region57: #{encoder_forward.1} parent=0 // pred_fallthru
    _
  %v47 = vld [vmem:[%s0] sm:$0xff]
  %v48 = vld [vmem:[%s0 + $0x8] sm:$0xff]
  %v49 = vld [vmem:[%s0 + $0x10] sm:$0xff]
  %v50 = vld [vmem:[%s0 + $0x18] sm:$0xff]
  %v51 = vld [vmem:[%s0 + $0x20] sm:$0xff]
  %v52 = vld [vmem:[%s0 + $0x28] sm:$0xff]
  %v53 = vld [vmem:[%s0 + $0x30] sm:$0xff]
  %v54 = vld [vmem:[%s0 + $0x38] sm:$0xff]
  %v55 = vlaneseq
  %v56 = vand.u32 %v55, 127
  %57 = vset.pattern.permute.xlu0 0
  %58 = vperm.xlu0 %57, %v47
  %v59 = vpop.permute.xlu0 %58
  %60 = vset.pattern.permute.xlu0 0
  %61 = vperm.xlu0 %60, %v48
  %v62 = vpop.permute.xlu0 %61
  %63 = vset.pattern.permute.xlu0 0
  %64 = vperm.xlu0 %63, %v49
  %v65 = vpop.permute.xlu0 %64
  %66 = vset.pattern.permute.xlu0 0
  %67 = vperm.xlu0 %66, %v50
  %v68 = vpop.permute.xlu0 %67
  %69 = vset.pattern.permute.xlu0 0
  %70 = vperm.xlu0 %69, %v51
  %v71 = vpop.permute.xlu0 %70
  %72 = vset.pattern.permute.xlu0 0
  %73 = vperm.xlu0 %72, %v52
  %v74 = vpop.permute.xlu0 %73
  %75 = vset.pattern.permute.xlu0 0
  %76 = vperm.xlu0 %75, %v53
  %v77 = vpop.permute.xlu0 %76
  %78 = vset.pattern.permute.xlu0 0
  %79 = vperm.xlu0 %78, %v54
  %v80 = vpop.permute.xlu0 %79
  %vm81 = vcmp.eq.s32.totalorder %v56, %v59
  %vm82 = vcmp.eq.s32.totalorder %v56, %v62
  %vm83 = vcmp.eq.s32.totalorder %v56, %v65
  %vm84 = vcmp.eq.s32.totalorder %v56, %v68
  %vm85 = vcmp.eq.s32.totalorder %v56, %v71
  %vm86 = vcmp.eq.s32.totalorder %v56, %v74
  %vm87 = vcmp.eq.s32.totalorder %v56, %v77
  %vm88 = vcmp.eq.s32.totalorder %v56, %v80
  %v89 = vsel %vm81, 1, 0
  %v90 = vsel %vm82, 1, 0
  %v91 = vsel %vm83, 1, 0
  %v92 = vsel %vm84, 1, 0
  %v93 = vsel %vm85, 1, 0
  %v94 = vsel %vm86, 1, 0
  %v95 = vsel %vm87, 1, 0
  %v96 = vsel %vm88, 1, 0
  %v97 = vcvt.s32.f32 %v89
  %v98 = vcvt.s32.f32 %v90
  %v99 = vcvt.s32.f32 %v91
  %v100 = vcvt.s32.f32 %v92
  %v101 = vcvt.s32.f32 %v93
  %v102 = vcvt.s32.f32 %v94
  %v103 = vcvt.s32.f32 %v95
  %v104 = vcvt.s32.f32 %v96
  %v105 = vld [vmem:[%s1] sm:$0xff]
  %v106 = vld [vmem:[%s1 + $0x8] sm:$0xff]
  %v107 = vld [vmem:[%s1 + $0x10] sm:$0xff]
  %v108 = vld [vmem:[%s1 + $0x18] sm:$0xff]
  %v109 = vld [vmem:[%s1 + $0x20] sm:$0xff]
  %v110 = vld [vmem:[%s1 + $0x28] sm:$0xff]
  %v111 = vld [vmem:[%s1 + $0x30] sm:$0xff]
  %v112 = vld [vmem:[%s1 + $0x38] sm:$0xff]
  %v113 = vld [vmem:[%s1 + $0x40] sm:$0xff]
  %v114 = vld [vmem:[%s1 + $0x48] sm:$0xff]
  %v115 = vld [vmem:[%s1 + $0x50] sm:$0xff]
  %v116 = vld [vmem:[%s1 + $0x58] sm:$0xff]
  %v117 = vld [vmem:[%s1 + $0x60] sm:$0xff]
  %v118 = vld [vmem:[%s1 + $0x68] sm:$0xff]
  %v119 = vld [vmem:[%s1 + $0x70] sm:$0xff]
  %v120 = vld [vmem:[%s1 + $0x78] sm:$0xff]
  %121 = vmatpush.msra.mxu0 %v120
  %122 = vmatpush.msra.mxu0 %v119
  %123 = vmatpush.msra.mxu0 %v118
  %124 = vmatpush.msra.mxu0 %v117
  %125 = vmatpush.msra.mxu0 %v116
  %126 = vmatpush.msra.mxu0 %v115
  %127 = vmatpush.msra.mxu0 %v114
  %128 = vmatpush.msra.mxu0 %v113
  %129 = vmatpush.msra.mxu0 %v112
  %130 = vmatpush.msra.mxu0 %v111
  %131 = vmatpush.msra.mxu0 %v110
  %132 = vmatpush.msra.mxu0 %v109
  %133 = vmatpush.msra.mxu0 %v108
  %134 = vmatpush.msra.mxu0 %v107
  %135 = vmatpush.msra.mxu0 %v106
  %136 = vmatpush.msra.mxu0 %v105
  %137 = vmatmul.f32.gmra.mxu0 %v97
  %v138 = vpop.f32.mrf.mxu0
  %v139 = vadd.f32 0.0, %v138
  %140 = vmatmul.f32.gmra.mxu0 %v98
  %v141 = vpop.f32.mrf.mxu0
  %v142 = vadd.f32 0.0, %v141
  %143 = vmatmul.f32.gmra.mxu0 %v99
  %v144 = vpop.f32.mrf.mxu0
  %v145 = vadd.f32 0.0, %v144
  %146 = vmatmul.f32.gmra.mxu0 %v100
  %v147 = vpop.f32.mrf.mxu0
  %v148 = vadd.f32 0.0, %v147
  %149 = vmatmul.f32.gmra.mxu0 %v101
  %v150 = vpop.f32.mrf.mxu0
  %v151 = vadd.f32 0.0, %v150
  %152 = vmatmul.f32.gmra.mxu0 %v102
  %v153 = vpop.f32.mrf.mxu0
  %v154 = vadd.f32 0.0, %v153
  %155 = vmatmul.f32.gmra.mxu0 %v103
  %v156 = vpop.f32.mrf.mxu0
  %v157 = vadd.f32 0.0, %v156
  %158 = vmatmul.f32.gmra.mxu0 %v104
  %v159 = vpop.f32.mrf.mxu0
  %v160 = vadd.f32 0.0, %v159
  %161 = vdwg.mxu0
  %v162 = vld [vmem:[%s11] sm:$0xff]
  %v163 = vld [vmem:[%s2] sm:$0xff]
  %v164 = vld [vmem:[%s2 + $0x8] sm:$0xff]
  %v165 = vld [vmem:[%s2 + $0x10] sm:$0xff]
  %v166 = vld [vmem:[%s2 + $0x18] sm:$0xff]
  %v167 = vld [vmem:[%s2 + $0x20] sm:$0xff]
  %v168 = vld [vmem:[%s2 + $0x28] sm:$0xff]
  %v169 = vld [vmem:[%s2 + $0x30] sm:$0xff]
  %v170 = vld [vmem:[%s2 + $0x38] sm:$0xff]
  %v171 = vld [vmem:[%s3] sm:$0x3]
  %v173 = vperm.slane %v171, 0
  %v174 = vperm.slane %v171, 1
  %vm177 = vcmask 261120
  %v179 = vsel %vm177, %v139, 0
  %v182 = vsel %vm177, %v142, 0
  %v185 = vsel %vm177, %v145, 0
  %v188 = vsel %vm177, %v148, 0
  %v191 = vsel %vm177, %v151, 0
  %v194 = vsel %vm177, %v154, 0
  %v197 = vsel %vm177, %v157, 0
  %v200 = vsel %vm177, %v160, 0
  %202 = vmatpush.msra.mxu0 0.0
  %203 = vmatpush.msra.mxu0 0.0
  %204 = vmatpush.msra.mxu0 0.0
  %205 = vmatpush.msra.mxu0 0.0
  %206 = vmatpush.msra.mxu0 0.0
  %207 = vmatpush.msra.mxu0 0.0
  %208 = vmatpush.msra.mxu0 0.0
  %209 = vmatpush.msra.mxu0 0.0
  %210 = vmatpush.msra.mxu0 0.0
  %211 = vmatpush.msra.mxu0 0.0
  %212 = vmatpush.msra.mxu0 0.0
  %213 = vmatpush.msra.mxu0 0.0
  %214 = vmatpush.msra.mxu0 %v169
  %215 = vmatpush.msra.mxu0 %v167
  %216 = vmatpush.msra.mxu0 %v165
  %217 = vmatpush.msra.mxu0 %v163
  %218 = vmatmul.f32.gmra.mxu0 %v179
  %v219 = vpop.f32.mrf.mxu0
  %v220 = vadd.f32 %v173, %v219
  %221 = vmatmul.f32.gmra.mxu0 %v182
  %v222 = vpop.f32.mrf.mxu0
  %v223 = vadd.f32 %v173, %v222
  %224 = vmatmul.f32.gmra.mxu0 %v185
  %v225 = vpop.f32.mrf.mxu0
  %v226 = vadd.f32 %v173, %v225
  %227 = vmatmul.f32.gmra.mxu0 %v188
  %v228 = vpop.f32.mrf.mxu0
  %v229 = vadd.f32 %v173, %v228
  %230 = vmatmul.f32.gmra.mxu0 %v191
  %v231 = vpop.f32.mrf.mxu0
  %v232 = vadd.f32 %v173, %v231
  %233 = vmatmul.f32.gmra.mxu0 %v194
  %v234 = vpop.f32.mrf.mxu0
  %v235 = vadd.f32 %v173, %v234
  %236 = vmatmul.f32.gmra.mxu0 %v197
  %v237 = vpop.f32.mrf.mxu0
  %v238 = vadd.f32 %v173, %v237
  %239 = vmatmul.f32.gmra.mxu0 %v200
  %v240 = vpop.f32.mrf.mxu0
  %v241 = vadd.f32 %v173, %v240
  %242 = vdwg.mxu0
  %243 = vmatpush.msra.mxu0 0.0
  %244 = vmatpush.msra.mxu0 0.0
  %245 = vmatpush.msra.mxu0 0.0
  %246 = vmatpush.msra.mxu0 0.0
  %247 = vmatpush.msra.mxu0 0.0
  %248 = vmatpush.msra.mxu0 0.0
  %249 = vmatpush.msra.mxu0 0.0
  %250 = vmatpush.msra.mxu0 0.0
  %251 = vmatpush.msra.mxu0 0.0
  %252 = vmatpush.msra.mxu0 0.0
  %253 = vmatpush.msra.mxu0 0.0
  %254 = vmatpush.msra.mxu0 0.0
  %255 = vmatpush.msra.mxu0 %v170
  %256 = vmatpush.msra.mxu0 %v168
  %257 = vmatpush.msra.mxu0 %v166
  %258 = vmatpush.msra.mxu0 %v164
  %259 = vmatmul.f32.gmra.mxu0 %v179
  %v260 = vpop.f32.mrf.mxu0
  %v261 = vadd.f32 %v174, %v260
  %262 = vmatmul.f32.gmra.mxu0 %v182
  %v263 = vpop.f32.mrf.mxu0
  %v264 = vadd.f32 %v174, %v263
  %265 = vmatmul.f32.gmra.mxu0 %v185
  %v266 = vpop.f32.mrf.mxu0
  %v267 = vadd.f32 %v174, %v266
  %268 = vmatmul.f32.gmra.mxu0 %v188
  %v269 = vpop.f32.mrf.mxu0
  %v270 = vadd.f32 %v174, %v269
  %271 = vmatmul.f32.gmra.mxu0 %v191
  %v272 = vpop.f32.mrf.mxu0
  %v273 = vadd.f32 %v174, %v272
  %274 = vmatmul.f32.gmra.mxu0 %v194
  %v275 = vpop.f32.mrf.mxu0
  %v276 = vadd.f32 %v174, %v275
  %277 = vmatmul.f32.gmra.mxu0 %v197
  %v278 = vpop.f32.mrf.mxu0
  %v279 = vadd.f32 %v174, %v278
  %280 = vmatmul.f32.gmra.mxu0 %v200
  %v281 = vpop.f32.mrf.mxu0
  %v282 = vadd.f32 %v174, %v281
  %283 = vdwg.mxu0
  %284 = vst [vmem:[#allocation2] sm:$0xff] %v220
  %285 = vst [vmem:[#allocation2 + $0x8] sm:$0xff] %v261
  %286 = vst [vmem:[#allocation2 + $0x10] sm:$0xff] %v223
  %287 = vst [vmem:[#allocation2 + $0x18] sm:$0xff] %v264
  %288 = vst [vmem:[#allocation2 + $0x20] sm:$0xff] %v226
  %289 = vst [vmem:[#allocation2 + $0x28] sm:$0xff] %v267
  %290 = vst [vmem:[#allocation2 + $0x30] sm:$0xff] %v229
  %291 = vst [vmem:[#allocation2 + $0x38] sm:$0xff] %v270
  %292 = vst [vmem:[#allocation2 + $0x40] sm:$0xff] %v232
  %293 = vst [vmem:[#allocation2 + $0x48] sm:$0xff] %v273
  %294 = vst [vmem:[#allocation2 + $0x50] sm:$0xff] %v235
  %295 = vst [vmem:[#allocation2 + $0x58] sm:$0xff] %v276
  %296 = vst [vmem:[#allocation2 + $0x60] sm:$0xff] %v238
  %297 = vst [vmem:[#allocation2 + $0x68] sm:$0xff] %v279
  %298 = vst [vmem:[#allocation2 + $0x70] sm:$0xff] %v241
  %299 = vst [vmem:[#allocation2 + $0x78] sm:$0xff] %v282
  %v300 = vld [vmem:[%s7] sm:$0xff]
  %v301 = vld [vmem:[%s7 + $0x8] sm:$0xff]
  %v302 = vld [vmem:[%s7 + $0x10] sm:$0xff]
  %v303 = vld [vmem:[%s7 + $0x18] sm:$0xff]
  %v304 = vld [vmem:[%s8] sm:$0xff]
  %v305 = vld [vmem:[%s8 + $0x8] sm:$0xff]
  %v306 = vld [vmem:[%s8 + $0x10] sm:$0xff]
  %v307 = vld [vmem:[%s8 + $0x18] sm:$0xff]
  %v308 = vld [vmem:[#allocation2] sm:$0xff]
  %v310 = vsel %vm177, 0.0, 0
  %312 = vmatpush.msra.mxu0 0.0
  %313 = vmatpush.msra.mxu0 0.0
  %314 = vmatpush.msra.mxu0 0.0
  %315 = vmatpush.msra.mxu0 0.0
  %316 = vmatpush.msra.mxu0 0.0
  %317 = vmatpush.msra.mxu0 0.0
  %318 = vmatpush.msra.mxu0 0.0
  %319 = vmatpush.msra.mxu0 0.0
  %320 = vmatpush.msra.mxu0 0.0
  %321 = vmatpush.msra.mxu0 0.0
  %322 = vmatpush.msra.mxu0 0.0
  %323 = vmatpush.msra.mxu0 0.0
  %324 = vmatpush.msra.mxu0 %v303
  %325 = vmatpush.msra.mxu0 %v302
  %326 = vmatpush.msra.mxu0 %v301
  %327 = vmatpush.msra.mxu0 %v300
  %328 = vmatmul.f32.gmra.mxu0 %v310
  %v329 = vpop.f32.mrf.mxu0
  %v330 = vadd.f32 0.0, %v329
  %331 = vdwg.mxu0
  %v332 = vadd.f32 %v308, %v330
  %v333 = vxor.u32 %v332, 2147483648
  %v334 = vmul.f32 %v333, 1.442695
  %v335 = vpow.pop %v334
  %v336 = vadd.f32 %v335, 1.0
  %v337 = vrcp.pop %v336
  %v338 = vmul.f32 %v336, %v337
  %v339 = vsub.f32 1.0, %v338
  %v340 = vmul.f32 %v337, %v339
  %v341 = vadd.f32 %v337, %v340
  %vm342 = vweird.f32 %v336
  %vm343 = vweird.f32 %v337
  %vm344 = vmor %vm342, %vm343
  %v345 = vsel %vm344, %v337, %v341
  %v346 = vand.u32 2147483647, %v336
  %vm347 = vcmp.eq.f32.partialorder %v346, 8.507059e+37
  %v348 = vand.u32 %v336, 2147483648
  %v349 = vor.u32 1.1754944e-38, %v348
  %v350 = vsel %vm347, %v349, %v345
  %v351 = vmul.f32 1.0, %v350
  %353 = vrot.lane.b32.xlu0 %v162, 64
  %v354 = vpop.permute.xlu0 %353
  %v356 = vadd.f32 %v330, %v354
  %358 = vrot.lane.b32.xlu0 %v356, 64
  %v359 = vpop.permute.xlu0 %358
  %v361 = vmul.f32 %v351, %v359
  %363 = vrot.lane.b32.xlu0 %v361, 64
  %v364 = vpop.permute.xlu0 %363
  %v366 = vadd.f32 %v308, %v364
  %v367 = vtanh.pop %v366
  %v368 = vsub.f32 0.0, %v367
  %370 = vrot.lane.b32.xlu0 %v368, 96
  %v371 = vpop.permute.xlu0 %370
  %v373 = vmul.f32 %v351, %v371
  %375 = vrot.lane.b32.xlu0 %v373, 32
  %v376 = vpop.permute.xlu0 %375
  %v378 = vadd.f32 %v367, %v376
  %v379 = vld [vmem:[#allocation2 + $0x78] sm:$0xff]
  %380 = vmatpush.msra.mxu0 0.0
  %381 = vmatpush.msra.mxu0 0.0
  %382 = vmatpush.msra.mxu0 0.0
  %383 = vmatpush.msra.mxu0 0.0
  %384 = vmatpush.msra.mxu0 0.0
  %385 = vmatpush.msra.mxu0 0.0
  %386 = vmatpush.msra.mxu0 0.0
  %387 = vmatpush.msra.mxu0 0.0
  %388 = vmatpush.msra.mxu0 0.0
  %389 = vmatpush.msra.mxu0 0.0
  %390 = vmatpush.msra.mxu0 0.0
  %391 = vmatpush.msra.mxu0 0.0
  %392 = vmatpush.msra.mxu0 %v307
  %393 = vmatpush.msra.mxu0 %v306
  %394 = vmatpush.msra.mxu0 %v305
  %395 = vmatpush.msra.mxu0 %v304
  %396 = vmatmul.f32.gmra.mxu0 %v310
  %v397 = vpop.f32.mrf.mxu0
  %v398 = vadd.f32 0.0, %v397
  %399 = vdwg.mxu0
  %v400 = vadd.f32 %v379, %v398
  %v401 = vxor.u32 %v400, 2147483648
  %v402 = vmul.f32 %v401, 1.442695
  %v403 = vpow.pop %v402
  %v404 = vadd.f32 %v403, 1.0
  %v405 = vrcp.pop %v404
  %v406 = vmul.f32 %v404, %v405
  %v407 = vsub.f32 1.0, %v406
  %v408 = vmul.f32 %v405, %v407
  %v409 = vadd.f32 %v405, %v408
  %vm410 = vweird.f32 %v404
  %vm411 = vweird.f32 %v405
  %vm412 = vmor %vm410, %vm411
  %v413 = vsel %vm412, %v405, %v409
  %v414 = vand.u32 2147483647, %v404
  %vm415 = vcmp.eq.f32.partialorder %v414, 8.507059e+37
  %v416 = vand.u32 %v404, 2147483648
  %v417 = vor.u32 1.1754944e-38, %v416
  %v418 = vsel %vm415, %v417, %v413
  %v419 = vmul.f32 1.0, %v418
  %420 = vrot.lane.b32.xlu0 %v162, 32
  %v421 = vpop.permute.xlu0 %420
  %v423 = vadd.f32 %v398, %v421
  %425 = vrot.lane.b32.xlu0 %v423, 64
  %v426 = vpop.permute.xlu0 %425
  %v428 = vmul.f32 %v419, %v426
  %430 = vrot.lane.b32.xlu0 %v428, 64
  %v431 = vpop.permute.xlu0 %430
  %v433 = vadd.f32 %v379, %v431
  %v434 = vtanh.pop %v433
  %v435 = vsub.f32 0.0, %v434
  %437 = vrot.lane.b32.xlu0 %v435, 96
  %v438 = vpop.permute.xlu0 %437
  %v440 = vmul.f32 %v419, %v438
  %442 = vrot.lane.b32.xlu0 %v440, 32
  %v443 = vpop.permute.xlu0 %442
  %v445 = vadd.f32 %v434, %v443
  %447 = vrot.lane.b32.xlu0 %v378, 64
  %v448 = vpop.permute.xlu0 %447
  %450 = vst.msk [vmem:[#allocation3] sm:$0xff] %vm177, %v448
  %452 = vrot.lane.b32.xlu0 %v445, 64
  %v453 = vpop.permute.xlu0 %452
  %455 = vst.msk [vmem:[#allocation4 + $0x38] sm:$0xff] %vm177, %v453
  %v456 = vld [vmem:[#allocation2 + $0x10] sm:$0xff]
  %v457 = vsel %vm177, %v448, 0
  %459 = vmatpush.msra.mxu0 0.0
  %460 = vmatpush.msra.mxu0 0.0
  %461 = vmatpush.msra.mxu0 0.0
  %462 = vmatpush.msra.mxu0 0.0
  %463 = vmatpush.msra.mxu0 0.0
  %464 = vmatpush.msra.mxu0 0.0
  %465 = vmatpush.msra.mxu0 0.0
  %466 = vmatpush.msra.mxu0 0.0
  %467 = vmatpush.msra.mxu0 0.0
  %468 = vmatpush.msra.mxu0 0.0
  %469 = vmatpush.msra.mxu0 0.0
  %470 = vmatpush.msra.mxu0 0.0
  %471 = vmatpush.msra.mxu0 %v303
  %472 = vmatpush.msra.mxu0 %v302
  %473 = vmatpush.msra.mxu0 %v301
  %474 = vmatpush.msra.mxu0 %v300
  %475 = vmatmul.f32.gmra.mxu0 %v457
  %v476 = vpop.f32.mrf.mxu0
  %v477 = vadd.f32 0.0, %v476
  %478 = vdwg.mxu0
  %v479 = vadd.f32 %v456, %v477
  %v480 = vxor.u32 %v479, 2147483648
  %v481 = vmul.f32 %v480, 1.442695
  %v482 = vpow.pop %v481
  %v483 = vadd.f32 %v482, 1.0
  %v484 = vrcp.pop %v483
  %v485 = vmul.f32 %v483, %v484
  %v486 = vsub.f32 1.0, %v485
  %v487 = vmul.f32 %v484, %v486
  %v488 = vadd.f32 %v484, %v487
  %vm489 = vweird.f32 %v483
  %vm490 = vweird.f32 %v484
  %vm491 = vmor %vm489, %vm490
  %v492 = vsel %vm491, %v484, %v488
  %v493 = vand.u32 2147483647, %v483
  %vm494 = vcmp.eq.f32.partialorder %v493, 8.507059e+37
  %v495 = vand.u32 %v483, 2147483648
  %v496 = vor.u32 1.1754944e-38, %v495
  %v497 = vsel %vm494, %v496, %v492
  %v498 = vmul.f32 1.0, %v497
  %v499 = vadd.f32 %v477, %v354
  %501 = vrot.lane.b32.xlu0 %v499, 64
  %v502 = vpop.permute.xlu0 %501
  %v504 = vmul.f32 %v498, %v502
  %506 = vrot.lane.b32.xlu0 %v504, 64
  %v507 = vpop.permute.xlu0 %506
  %v509 = vadd.f32 %v456, %v507
  %v510 = vtanh.pop %v509
  %v511 = vsub.f32 %v378, %v510
  %513 = vrot.lane.b32.xlu0 %v511, 96
  %v514 = vpop.permute.xlu0 %513
  %v516 = vmul.f32 %v498, %v514
  %518 = vrot.lane.b32.xlu0 %v516, 32
  %v519 = vpop.permute.xlu0 %518
  %v521 = vadd.f32 %v510, %v519
  %v522 = vld [vmem:[#allocation2 + $0x68] sm:$0xff]
  %v523 = vsel %vm177, %v453, 0
  %525 = vmatpush.msra.mxu0 0.0
  %526 = vmatpush.msra.mxu0 0.0
  %527 = vmatpush.msra.mxu0 0.0
  %528 = vmatpush.msra.mxu0 0.0
  %529 = vmatpush.msra.mxu0 0.0
  %530 = vmatpush.msra.mxu0 0.0
  %531 = vmatpush.msra.mxu0 0.0
  %532 = vmatpush.msra.mxu0 0.0
  %533 = vmatpush.msra.mxu0 0.0
  %534 = vmatpush.msra.mxu0 0.0
  %535 = vmatpush.msra.mxu0 0.0
  %536 = vmatpush.msra.mxu0 0.0
  %537 = vmatpush.msra.mxu0 %v307
  %538 = vmatpush.msra.mxu0 %v306
  %539 = vmatpush.msra.mxu0 %v305
  %540 = vmatpush.msra.mxu0 %v304
  %541 = vmatmul.f32.gmra.mxu0 %v523
  %v542 = vpop.f32.mrf.mxu0
  %v543 = vadd.f32 0.0, %v542
  %544 = vdwg.mxu0
  %v545 = vadd.f32 %v522, %v543
  %v546 = vxor.u32 %v545, 2147483648
  %v547 = vmul.f32 %v546, 1.442695
  %v548 = vpow.pop %v547
  %v549 = vadd.f32 %v548, 1.0
  %v550 = vrcp.pop %v549
  %v551 = vmul.f32 %v549, %v550
  %v552 = vsub.f32 1.0, %v551
  %v553 = vmul.f32 %v550, %v552
  %v554 = vadd.f32 %v550, %v553
  %vm555 = vweird.f32 %v549
  %vm556 = vweird.f32 %v550
  %vm557 = vmor %vm555, %vm556
  %v558 = vsel %vm557, %v550, %v554
  %v559 = vand.u32 2147483647, %v549
  %vm560 = vcmp.eq.f32.partialorder %v559, 8.507059e+37
  %v561 = vand.u32 %v549, 2147483648
  %v562 = vor.u32 1.1754944e-38, %v561
  %v563 = vsel %vm560, %v562, %v558
  %v564 = vmul.f32 1.0, %v563
  %v565 = vadd.f32 %v543, %v421
  %567 = vrot.lane.b32.xlu0 %v565, 64
  %v568 = vpop.permute.xlu0 %567
  %v570 = vmul.f32 %v564, %v568
  %572 = vrot.lane.b32.xlu0 %v570, 64
  %v573 = vpop.permute.xlu0 %572
  %v575 = vadd.f32 %v522, %v573
  %v576 = vtanh.pop %v575
  %v577 = vsub.f32 %v445, %v576
  %579 = vrot.lane.b32.xlu0 %v577, 96
  %v580 = vpop.permute.xlu0 %579
  %v582 = vmul.f32 %v564, %v580
  %584 = vrot.lane.b32.xlu0 %v582, 32
  %v585 = vpop.permute.xlu0 %584
  %v587 = vadd.f32 %v576, %v585
  %589 = vrot.lane.b32.xlu0 %v521, 64
  %v590 = vpop.permute.xlu0 %589
  %592 = vst.msk [vmem:[#allocation3 + $0x8] sm:$0xff] %vm177, %v590
  %594 = vrot.lane.b32.xlu0 %v587, 64
  %v595 = vpop.permute.xlu0 %594
  %597 = vst.msk [vmem:[#allocation4 + $0x30] sm:$0xff] %vm177, %v595
  %v598 = vld [vmem:[#allocation2 + $0x20] sm:$0xff]
  %v599 = vsel %vm177, %v590, 0
  %601 = vmatpush.msra.mxu0 0.0
  %602 = vmatpush.msra.mxu0 0.0
  %603 = vmatpush.msra.mxu0 0.0
  %604 = vmatpush.msra.mxu0 0.0
  %605 = vmatpush.msra.mxu0 0.0
  %606 = vmatpush.msra.mxu0 0.0
  %607 = vmatpush.msra.mxu0 0.0
  %608 = vmatpush.msra.mxu0 0.0
  %609 = vmatpush.msra.mxu0 0.0
  %610 = vmatpush.msra.mxu0 0.0
  %611 = vmatpush.msra.mxu0 0.0
  %612 = vmatpush.msra.mxu0 0.0
  %613 = vmatpush.msra.mxu0 %v303
  %614 = vmatpush.msra.mxu0 %v302
  %615 = vmatpush.msra.mxu0 %v301
  %616 = vmatpush.msra.mxu0 %v300
  %617 = vmatmul.f32.gmra.mxu0 %v599
  %v618 = vpop.f32.mrf.mxu0
  %v619 = vadd.f32 0.0, %v618
  %620 = vdwg.mxu0
  %v621 = vadd.f32 %v598, %v619
  %v622 = vxor.u32 %v621, 2147483648
  %v623 = vmul.f32 %v622, 1.442695
  %v624 = vpow.pop %v623
  %v625 = vadd.f32 %v624, 1.0
  %v626 = vrcp.pop %v625
  %v627 = vmul.f32 %v625, %v626
  %v628 = vsub.f32 1.0, %v627
  %v629 = vmul.f32 %v626, %v628
  %v630 = vadd.f32 %v626, %v629
  %vm631 = vweird.f32 %v625
  %vm632 = vweird.f32 %v626
  %vm633 = vmor %vm631, %vm632
  %v634 = vsel %vm633, %v626, %v630
  %v635 = vand.u32 2147483647, %v625
  %vm636 = vcmp.eq.f32.partialorder %v635, 8.507059e+37
  %v637 = vand.u32 %v625, 2147483648
  %v638 = vor.u32 1.1754944e-38, %v637
  %v639 = vsel %vm636, %v638, %v634
  %v640 = vmul.f32 1.0, %v639
  %v641 = vadd.f32 %v619, %v354
  %643 = vrot.lane.b32.xlu0 %v641, 64
  %v644 = vpop.permute.xlu0 %643
  %v646 = vmul.f32 %v640, %v644
  %648 = vrot.lane.b32.xlu0 %v646, 64
  %v649 = vpop.permute.xlu0 %648
  %v651 = vadd.f32 %v598, %v649
  %v652 = vtanh.pop %v651
  %v653 = vsub.f32 %v521, %v652
  %655 = vrot.lane.b32.xlu0 %v653, 96
  %v656 = vpop.permute.xlu0 %655
  %v658 = vmul.f32 %v640, %v656
  %660 = vrot.lane.b32.xlu0 %v658, 32
  %v661 = vpop.permute.xlu0 %660
  %v663 = vadd.f32 %v652, %v661
  %v664 = vld [vmem:[#allocation2 + $0x58] sm:$0xff]
  %v665 = vsel %vm177, %v595, 0
  %667 = vmatpush.msra.mxu0 0.0
  %668 = vmatpush.msra.mxu0 0.0
  %669 = vmatpush.msra.mxu0 0.0
  %670 = vmatpush.msra.mxu0 0.0
  %671 = vmatpush.msra.mxu0 0.0
  %672 = vmatpush.msra.mxu0 0.0
  %673 = vmatpush.msra.mxu0 0.0
  %674 = vmatpush.msra.mxu0 0.0
  %675 = vmatpush.msra.mxu0 0.0
  %676 = vmatpush.msra.mxu0 0.0
  %677 = vmatpush.msra.mxu0 0.0
  %678 = vmatpush.msra.mxu0 0.0
  %679 = vmatpush.msra.mxu0 %v307
  %680 = vmatpush.msra.mxu0 %v306
  %681 = vmatpush.msra.mxu0 %v305
  %682 = vmatpush.msra.mxu0 %v304
  %683 = vmatmul.f32.gmra.mxu0 %v665
  %v684 = vpop.f32.mrf.mxu0
  %v685 = vadd.f32 0.0, %v684
  %686 = vdwg.mxu0
  %v687 = vadd.f32 %v664, %v685
  %v688 = vxor.u32 %v687, 2147483648
  %v689 = vmul.f32 %v688, 1.442695
  %v690 = vpow.pop %v689
  %v691 = vadd.f32 %v690, 1.0
  %v692 = vrcp.pop %v691
  %v693 = vmul.f32 %v691, %v692
  %v694 = vsub.f32 1.0, %v693
  %v695 = vmul.f32 %v692, %v694
  %v696 = vadd.f32 %v692, %v695
  %vm697 = vweird.f32 %v691
  %vm698 = vweird.f32 %v692
  %vm699 = vmor %vm697, %vm698
  %v700 = vsel %vm699, %v692, %v696
  %v701 = vand.u32 2147483647, %v691
  %vm702 = vcmp.eq.f32.partialorder %v701, 8.507059e+37
  %v703 = vand.u32 %v691, 2147483648
  %v704 = vor.u32 1.1754944e-38, %v703
  %v705 = vsel %vm702, %v704, %v700
  %v706 = vmul.f32 1.0, %v705
  %v707 = vadd.f32 %v685, %v421
  %709 = vrot.lane.b32.xlu0 %v707, 64
  %v710 = vpop.permute.xlu0 %709
  %v712 = vmul.f32 %v706, %v710
  %714 = vrot.lane.b32.xlu0 %v712, 64
  %v715 = vpop.permute.xlu0 %714
  %v717 = vadd.f32 %v664, %v715
  %v718 = vtanh.pop %v717
  %v719 = vsub.f32 %v587, %v718
  %721 = vrot.lane.b32.xlu0 %v719, 96
  %v722 = vpop.permute.xlu0 %721
  %v724 = vmul.f32 %v706, %v722
  %726 = vrot.lane.b32.xlu0 %v724, 32
  %v727 = vpop.permute.xlu0 %726
  %v729 = vadd.f32 %v718, %v727
  %731 = vrot.lane.b32.xlu0 %v663, 64
  %v732 = vpop.permute.xlu0 %731
  %734 = vst.msk [vmem:[#allocation3 + $0x10] sm:$0xff] %vm177, %v732
  %736 = vrot.lane.b32.xlu0 %v729, 64
  %v737 = vpop.permute.xlu0 %736
  %739 = vst.msk [vmem:[#allocation4 + $0x28] sm:$0xff] %vm177, %v737
  %v740 = vld [vmem:[#allocation2 + $0x30] sm:$0xff]
  %v741 = vsel %vm177, %v732, 0
  %743 = vmatpush.msra.mxu0 0.0
  %744 = vmatpush.msra.mxu0 0.0
  %745 = vmatpush.msra.mxu0 0.0
  %746 = vmatpush.msra.mxu0 0.0
  %747 = vmatpush.msra.mxu0 0.0
  %748 = vmatpush.msra.mxu0 0.0
  %749 = vmatpush.msra.mxu0 0.0
  %750 = vmatpush.msra.mxu0 0.0
  %751 = vmatpush.msra.mxu0 0.0
  %752 = vmatpush.msra.mxu0 0.0
  %753 = vmatpush.msra.mxu0 0.0
  %754 = vmatpush.msra.mxu0 0.0
  %755 = vmatpush.msra.mxu0 %v303
  %756 = vmatpush.msra.mxu0 %v302
  %757 = vmatpush.msra.mxu0 %v301
  %758 = vmatpush.msra.mxu0 %v300
  %759 = vmatmul.f32.gmra.mxu0 %v741
  %v760 = vpop.f32.mrf.mxu0
  %v761 = vadd.f32 0.0, %v760
  %762 = vdwg.mxu0
  %v763 = vadd.f32 %v740, %v761
  %v764 = vxor.u32 %v763, 2147483648
  %v765 = vmul.f32 %v764, 1.442695
  %v766 = vpow.pop %v765
  %v767 = vadd.f32 %v766, 1.0
  %v768 = vrcp.pop %v767
  %v769 = vmul.f32 %v767, %v768
  %v770 = vsub.f32 1.0, %v769
  %v771 = vmul.f32 %v768, %v770
  %v772 = vadd.f32 %v768, %v771
  %vm773 = vweird.f32 %v767
  %vm774 = vweird.f32 %v768
  %vm775 = vmor %vm773, %vm774
  %v776 = vsel %vm775, %v768, %v772
  %v777 = vand.u32 2147483647, %v767
  %vm778 = vcmp.eq.f32.partialorder %v777, 8.507059e+37
  %v779 = vand.u32 %v767, 2147483648
  %v780 = vor.u32 1.1754944e-38, %v779
  %v781 = vsel %vm778, %v780, %v776
  %v782 = vmul.f32 1.0, %v781
  %v783 = vadd.f32 %v761, %v354
  %785 = vrot.lane.b32.xlu0 %v783, 64
  %v786 = vpop.permute.xlu0 %785
  %v788 = vmul.f32 %v782, %v786
  %790 = vrot.lane.b32.xlu0 %v788, 64
  %v791 = vpop.permute.xlu0 %790
  %v793 = vadd.f32 %v740, %v791
  %v794 = vtanh.pop %v793
  %v795 = vsub.f32 %v663, %v794
  %797 = vrot.lane.b32.xlu0 %v795, 96
  %v798 = vpop.permute.xlu0 %797
  %v800 = vmul.f32 %v782, %v798
  %802 = vrot.lane.b32.xlu0 %v800, 32
  %v803 = vpop.permute.xlu0 %802
  %v805 = vadd.f32 %v794, %v803
  %v806 = vld [vmem:[#allocation2 + $0x48] sm:$0xff]
  %v807 = vsel %vm177, %v737, 0
  %809 = vmatpush.msra.mxu0 0.0
  %810 = vmatpush.msra.mxu0 0.0
  %811 = vmatpush.msra.mxu0 0.0
  %812 = vmatpush.msra.mxu0 0.0
  %813 = vmatpush.msra.mxu0 0.0
  %814 = vmatpush.msra.mxu0 0.0
  %815 = vmatpush.msra.mxu0 0.0
  %816 = vmatpush.msra.mxu0 0.0
  %817 = vmatpush.msra.mxu0 0.0
  %818 = vmatpush.msra.mxu0 0.0
  %819 = vmatpush.msra.mxu0 0.0
  %820 = vmatpush.msra.mxu0 0.0
  %821 = vmatpush.msra.mxu0 %v307
  %822 = vmatpush.msra.mxu0 %v306
  %823 = vmatpush.msra.mxu0 %v305
  %824 = vmatpush.msra.mxu0 %v304
  %825 = vmatmul.f32.gmra.mxu0 %v807
  %v826 = vpop.f32.mrf.mxu0
  %v827 = vadd.f32 0.0, %v826
  %828 = vdwg.mxu0
  %v829 = vadd.f32 %v806, %v827
  %v830 = vxor.u32 %v829, 2147483648
  %v831 = vmul.f32 %v830, 1.442695
  %v832 = vpow.pop %v831
  %v833 = vadd.f32 %v832, 1.0
  %v834 = vrcp.pop %v833
  %v835 = vmul.f32 %v833, %v834
  %v836 = vsub.f32 1.0, %v835
  %v837 = vmul.f32 %v834, %v836
  %v838 = vadd.f32 %v834, %v837
  %vm839 = vweird.f32 %v833
  %vm840 = vweird.f32 %v834
  %vm841 = vmor %vm839, %vm840
  %v842 = vsel %vm841, %v834, %v838
  %v843 = vand.u32 2147483647, %v833
  %vm844 = vcmp.eq.f32.partialorder %v843, 8.507059e+37
  %v845 = vand.u32 %v833, 2147483648
  %v846 = vor.u32 1.1754944e-38, %v845
  %v847 = vsel %vm844, %v846, %v842
  %v848 = vmul.f32 1.0, %v847
  %v849 = vadd.f32 %v827, %v421
  %851 = vrot.lane.b32.xlu0 %v849, 64
  %v852 = vpop.permute.xlu0 %851
  %v854 = vmul.f32 %v848, %v852
  %856 = vrot.lane.b32.xlu0 %v854, 64
  %v857 = vpop.permute.xlu0 %856
  %v859 = vadd.f32 %v806, %v857
  %v860 = vtanh.pop %v859
  %v861 = vsub.f32 %v729, %v860
  %863 = vrot.lane.b32.xlu0 %v861, 96
  %v864 = vpop.permute.xlu0 %863
  %v866 = vmul.f32 %v848, %v864
  %868 = vrot.lane.b32.xlu0 %v866, 32
  %v869 = vpop.permute.xlu0 %868
  %v871 = vadd.f32 %v860, %v869
  %873 = vrot.lane.b32.xlu0 %v805, 64
  %v874 = vpop.permute.xlu0 %873
  %876 = vst.msk [vmem:[#allocation3 + $0x18] sm:$0xff] %vm177, %v874
  %878 = vrot.lane.b32.xlu0 %v871, 64
  %v879 = vpop.permute.xlu0 %878
  %881 = vst.msk [vmem:[#allocation4 + $0x20] sm:$0xff] %vm177, %v879
  %v882 = vld [vmem:[#allocation2 + $0x40] sm:$0xff]
  %v883 = vsel %vm177, %v874, 0
  %885 = vmatpush.msra.mxu0 0.0
  %886 = vmatpush.msra.mxu0 0.0
  %887 = vmatpush.msra.mxu0 0.0
  %888 = vmatpush.msra.mxu0 0.0
  %889 = vmatpush.msra.mxu0 0.0
  %890 = vmatpush.msra.mxu0 0.0
  %891 = vmatpush.msra.mxu0 0.0
  %892 = vmatpush.msra.mxu0 0.0
  %893 = vmatpush.msra.mxu0 0.0
  %894 = vmatpush.msra.mxu0 0.0
  %895 = vmatpush.msra.mxu0 0.0
  %896 = vmatpush.msra.mxu0 0.0
  %897 = vmatpush.msra.mxu0 %v303
  %898 = vmatpush.msra.mxu0 %v302
  %899 = vmatpush.msra.mxu0 %v301
  %900 = vmatpush.msra.mxu0 %v300
  %901 = vmatmul.f32.gmra.mxu0 %v883
  %v902 = vpop.f32.mrf.mxu0
  %v903 = vadd.f32 0.0, %v902
  %904 = vdwg.mxu0
  %v905 = vadd.f32 %v882, %v903
  %v906 = vxor.u32 %v905, 2147483648
  %v907 = vmul.f32 %v906, 1.442695
  %v908 = vpow.pop %v907
  %v909 = vadd.f32 %v908, 1.0
  %v910 = vrcp.pop %v909
  %v911 = vmul.f32 %v909, %v910
  %v912 = vsub.f32 1.0, %v911
  %v913 = vmul.f32 %v910, %v912
  %v914 = vadd.f32 %v910, %v913
  %vm915 = vweird.f32 %v909
  %vm916 = vweird.f32 %v910
  %vm917 = vmor %vm915, %vm916
  %v918 = vsel %vm917, %v910, %v914
  %v919 = vand.u32 2147483647, %v909
  %vm920 = vcmp.eq.f32.partialorder %v919, 8.507059e+37
  %v921 = vand.u32 %v909, 2147483648
  %v922 = vor.u32 1.1754944e-38, %v921
  %v923 = vsel %vm920, %v922, %v918
  %v924 = vmul.f32 1.0, %v923
  %v925 = vadd.f32 %v903, %v354
  %927 = vrot.lane.b32.xlu0 %v925, 64
  %v928 = vpop.permute.xlu0 %927
  %v930 = vmul.f32 %v924, %v928
  %932 = vrot.lane.b32.xlu0 %v930, 64
  %v933 = vpop.permute.xlu0 %932
  %v935 = vadd.f32 %v882, %v933
  %v936 = vtanh.pop %v935
  %v937 = vsub.f32 %v805, %v936
  %939 = vrot.lane.b32.xlu0 %v937, 96
  %v940 = vpop.permute.xlu0 %939
  %v942 = vmul.f32 %v924, %v940
  %944 = vrot.lane.b32.xlu0 %v942, 32
  %v945 = vpop.permute.xlu0 %944
  %v947 = vadd.f32 %v936, %v945
  %v948 = vld [vmem:[#allocation2 + $0x38] sm:$0xff]
  %v949 = vsel %vm177, %v879, 0
  %951 = vmatpush.msra.mxu0 0.0
  %952 = vmatpush.msra.mxu0 0.0
  %953 = vmatpush.msra.mxu0 0.0
  %954 = vmatpush.msra.mxu0 0.0
  %955 = vmatpush.msra.mxu0 0.0
  %956 = vmatpush.msra.mxu0 0.0
  %957 = vmatpush.msra.mxu0 0.0
  %958 = vmatpush.msra.mxu0 0.0
  %959 = vmatpush.msra.mxu0 0.0
  %960 = vmatpush.msra.mxu0 0.0
  %961 = vmatpush.msra.mxu0 0.0
  %962 = vmatpush.msra.mxu0 0.0
  %963 = vmatpush.msra.mxu0 %v307
  %964 = vmatpush.msra.mxu0 %v306
  %965 = vmatpush.msra.mxu0 %v305
  %966 = vmatpush.msra.mxu0 %v304
  %967 = vmatmul.f32.gmra.mxu0 %v949
  %v968 = vpop.f32.mrf.mxu0
  %v969 = vadd.f32 0.0, %v968
  %970 = vdwg.mxu0
  %v971 = vadd.f32 %v948, %v969
  %v972 = vxor.u32 %v971, 2147483648
  %v973 = vmul.f32 %v972, 1.442695
  %v974 = vpow.pop %v973
  %v975 = vadd.f32 %v974, 1.0
  %v976 = vrcp.pop %v975
  %v977 = vmul.f32 %v975, %v976
  %v978 = vsub.f32 1.0, %v977
  %v979 = vmul.f32 %v976, %v978
  %v980 = vadd.f32 %v976, %v979
  %vm981 = vweird.f32 %v975
  %vm982 = vweird.f32 %v976
  %vm983 = vmor %vm981, %vm982
  %v984 = vsel %vm983, %v976, %v980
  %v985 = vand.u32 2147483647, %v975
  %vm986 = vcmp.eq.f32.partialorder %v985, 8.507059e+37
  %v987 = vand.u32 %v975, 2147483648
  %v988 = vor.u32 1.1754944e-38, %v987
  %v989 = vsel %vm986, %v988, %v984
  %v990 = vmul.f32 1.0, %v989
  %v991 = vadd.f32 %v969, %v421
  %993 = vrot.lane.b32.xlu0 %v991, 64
  %v994 = vpop.permute.xlu0 %993
  %v996 = vmul.f32 %v990, %v994
  %998 = vrot.lane.b32.xlu0 %v996, 64
  %v999 = vpop.permute.xlu0 %998
  %v1001 = vadd.f32 %v948, %v999
  %v1002 = vtanh.pop %v1001
  %v1003 = vsub.f32 %v871, %v1002
  %1005 = vrot.lane.b32.xlu0 %v1003, 96
  %v1006 = vpop.permute.xlu0 %1005
  %v1008 = vmul.f32 %v990, %v1006
  %1010 = vrot.lane.b32.xlu0 %v1008, 32
  %v1011 = vpop.permute.xlu0 %1010
  %v1013 = vadd.f32 %v1002, %v1011
  %1015 = vrot.lane.b32.xlu0 %v947, 64
  %v1016 = vpop.permute.xlu0 %1015
  %1018 = vst.msk [vmem:[#allocation3 + $0x20] sm:$0xff] %vm177, %v1016
  %1020 = vrot.lane.b32.xlu0 %v1013, 64
  %v1021 = vpop.permute.xlu0 %1020
  %1023 = vst.msk [vmem:[#allocation4 + $0x18] sm:$0xff] %vm177, %v1021
  %v1024 = vld [vmem:[#allocation2 + $0x50] sm:$0xff]
  %v1025 = vsel %vm177, %v1016, 0
  %1027 = vmatpush.msra.mxu0 0.0
  %1028 = vmatpush.msra.mxu0 0.0
  %1029 = vmatpush.msra.mxu0 0.0
  %1030 = vmatpush.msra.mxu0 0.0
  %1031 = vmatpush.msra.mxu0 0.0
  %1032 = vmatpush.msra.mxu0 0.0
  %1033 = vmatpush.msra.mxu0 0.0
  %1034 = vmatpush.msra.mxu0 0.0
  %1035 = vmatpush.msra.mxu0 0.0
  %1036 = vmatpush.msra.mxu0 0.0
  %1037 = vmatpush.msra.mxu0 0.0
  %1038 = vmatpush.msra.mxu0 0.0
  %1039 = vmatpush.msra.mxu0 %v303
  %1040 = vmatpush.msra.mxu0 %v302
  %1041 = vmatpush.msra.mxu0 %v301
  %1042 = vmatpush.msra.mxu0 %v300
  %1043 = vmatmul.f32.gmra.mxu0 %v1025
  %v1044 = vpop.f32.mrf.mxu0
  %v1045 = vadd.f32 0.0, %v1044
  %1046 = vdwg.mxu0
  %v1047 = vadd.f32 %v1024, %v1045
  %v1048 = vxor.u32 %v1047, 2147483648
  %v1049 = vmul.f32 %v1048, 1.442695
  %v1050 = vpow.pop %v1049
  %v1051 = vadd.f32 %v1050, 1.0
  %v1052 = vrcp.pop %v1051
  %v1053 = vmul.f32 %v1051, %v1052
  %v1054 = vsub.f32 1.0, %v1053
  %v1055 = vmul.f32 %v1052, %v1054
  %v1056 = vadd.f32 %v1052, %v1055
  %vm1057 = vweird.f32 %v1051
  %vm1058 = vweird.f32 %v1052
  %vm1059 = vmor %vm1057, %vm1058
  %v1060 = vsel %vm1059, %v1052, %v1056
  %v1061 = vand.u32 2147483647, %v1051
  %vm1062 = vcmp.eq.f32.partialorder %v1061, 8.507059e+37
  %v1063 = vand.u32 %v1051, 2147483648
  %v1064 = vor.u32 1.1754944e-38, %v1063
  %v1065 = vsel %vm1062, %v1064, %v1060
  %v1066 = vmul.f32 1.0, %v1065
  %v1067 = vadd.f32 %v1045, %v354
  %1069 = vrot.lane.b32.xlu0 %v1067, 64
  %v1070 = vpop.permute.xlu0 %1069
  %v1072 = vmul.f32 %v1066, %v1070
  %1074 = vrot.lane.b32.xlu0 %v1072, 64
  %v1075 = vpop.permute.xlu0 %1074
  %v1077 = vadd.f32 %v1024, %v1075
  %v1078 = vtanh.pop %v1077
  %v1079 = vsub.f32 %v947, %v1078
  %1081 = vrot.lane.b32.xlu0 %v1079, 96
  %v1082 = vpop.permute.xlu0 %1081
  %v1084 = vmul.f32 %v1066, %v1082
  %1086 = vrot.lane.b32.xlu0 %v1084, 32
  %v1087 = vpop.permute.xlu0 %1086
  %v1089 = vadd.f32 %v1078, %v1087
  %v1090 = vld [vmem:[#allocation2 + $0x28] sm:$0xff]
  %v1091 = vsel %vm177, %v1021, 0
  %1093 = vmatpush.msra.mxu0 0.0
  %1094 = vmatpush.msra.mxu0 0.0
  %1095 = vmatpush.msra.mxu0 0.0
  %1096 = vmatpush.msra.mxu0 0.0
  %1097 = vmatpush.msra.mxu0 0.0
  %1098 = vmatpush.msra.mxu0 0.0
  %1099 = vmatpush.msra.mxu0 0.0
  %1100 = vmatpush.msra.mxu0 0.0
  %1101 = vmatpush.msra.mxu0 0.0
  %1102 = vmatpush.msra.mxu0 0.0
  %1103 = vmatpush.msra.mxu0 0.0
  %1104 = vmatpush.msra.mxu0 0.0
  %1105 = vmatpush.msra.mxu0 %v307
  %1106 = vmatpush.msra.mxu0 %v306
  %1107 = vmatpush.msra.mxu0 %v305
  %1108 = vmatpush.msra.mxu0 %v304
  %1109 = vmatmul.f32.gmra.mxu0 %v1091
  %v1110 = vpop.f32.mrf.mxu0
  %v1111 = vadd.f32 0.0, %v1110
  %1112 = vdwg.mxu0
  %v1113 = vadd.f32 %v1090, %v1111
  %v1114 = vxor.u32 %v1113, 2147483648
  %v1115 = vmul.f32 %v1114, 1.442695
  %v1116 = vpow.pop %v1115
  %v1117 = vadd.f32 %v1116, 1.0
  %v1118 = vrcp.pop %v1117
  %v1119 = vmul.f32 %v1117, %v1118
  %v1120 = vsub.f32 1.0, %v1119
  %v1121 = vmul.f32 %v1118, %v1120
  %v1122 = vadd.f32 %v1118, %v1121
  %vm1123 = vweird.f32 %v1117
  %vm1124 = vweird.f32 %v1118
  %vm1125 = vmor %vm1123, %vm1124
  %v1126 = vsel %vm1125, %v1118, %v1122
  %v1127 = vand.u32 2147483647, %v1117
  %vm1128 = vcmp.eq.f32.partialorder %v1127, 8.507059e+37
  %v1129 = vand.u32 %v1117, 2147483648
  %v1130 = vor.u32 1.1754944e-38, %v1129
  %v1131 = vsel %vm1128, %v1130, %v1126
  %v1132 = vmul.f32 1.0, %v1131
  %v1133 = vadd.f32 %v1111, %v421
  %1135 = vrot.lane.b32.xlu0 %v1133, 64
  %v1136 = vpop.permute.xlu0 %1135
  %v1138 = vmul.f32 %v1132, %v1136
  %1140 = vrot.lane.b32.xlu0 %v1138, 64
  %v1141 = vpop.permute.xlu0 %1140
  %v1143 = vadd.f32 %v1090, %v1141
  %v1144 = vtanh.pop %v1143
  %v1145 = vsub.f32 %v1013, %v1144
  %1147 = vrot.lane.b32.xlu0 %v1145, 96
  %v1148 = vpop.permute.xlu0 %1147
  %v1150 = vmul.f32 %v1132, %v1148
  %1152 = vrot.lane.b32.xlu0 %v1150, 32
  %v1153 = vpop.permute.xlu0 %1152
  %v1155 = vadd.f32 %v1144, %v1153
  %1157 = vrot.lane.b32.xlu0 %v1089, 64
  %v1158 = vpop.permute.xlu0 %1157
  %1160 = vst.msk [vmem:[#allocation3 + $0x28] sm:$0xff] %vm177, %v1158
  %1162 = vrot.lane.b32.xlu0 %v1155, 64
  %v1163 = vpop.permute.xlu0 %1162
  %1165 = vst.msk [vmem:[#allocation4 + $0x10] sm:$0xff] %vm177, %v1163
  %v1166 = vld [vmem:[#allocation2 + $0x60] sm:$0xff]
  %v1167 = vsel %vm177, %v1158, 0
  %1169 = vmatpush.msra.mxu0 0.0
  %1170 = vmatpush.msra.mxu0 0.0
  %1171 = vmatpush.msra.mxu0 0.0
  %1172 = vmatpush.msra.mxu0 0.0
  %1173 = vmatpush.msra.mxu0 0.0
  %1174 = vmatpush.msra.mxu0 0.0
  %1175 = vmatpush.msra.mxu0 0.0
  %1176 = vmatpush.msra.mxu0 0.0
  %1177 = vmatpush.msra.mxu0 0.0
  %1178 = vmatpush.msra.mxu0 0.0
  %1179 = vmatpush.msra.mxu0 0.0
  %1180 = vmatpush.msra.mxu0 0.0
  %1181 = vmatpush.msra.mxu0 %v303
  %1182 = vmatpush.msra.mxu0 %v302
  %1183 = vmatpush.msra.mxu0 %v301
  %1184 = vmatpush.msra.mxu0 %v300
  %1185 = vmatmul.f32.gmra.mxu0 %v1167
  %v1186 = vpop.f32.mrf.mxu0
  %v1187 = vadd.f32 0.0, %v1186
  %1188 = vdwg.mxu0
  %v1189 = vadd.f32 %v1166, %v1187
  %v1190 = vxor.u32 %v1189, 2147483648
  %v1191 = vmul.f32 %v1190, 1.442695
  %v1192 = vpow.pop %v1191
  %v1193 = vadd.f32 %v1192, 1.0
  %v1194 = vrcp.pop %v1193
  %v1195 = vmul.f32 %v1193, %v1194
  %v1196 = vsub.f32 1.0, %v1195
  %v1197 = vmul.f32 %v1194, %v1196
  %v1198 = vadd.f32 %v1194, %v1197
  %vm1199 = vweird.f32 %v1193
  %vm1200 = vweird.f32 %v1194
  %vm1201 = vmor %vm1199, %vm1200
  %v1202 = vsel %vm1201, %v1194, %v1198
  %v1203 = vand.u32 2147483647, %v1193
  %vm1204 = vcmp.eq.f32.partialorder %v1203, 8.507059e+37
  %v1205 = vand.u32 %v1193, 2147483648
  %v1206 = vor.u32 1.1754944e-38, %v1205
  %v1207 = vsel %vm1204, %v1206, %v1202
  %v1208 = vmul.f32 1.0, %v1207
  %v1209 = vadd.f32 %v1187, %v354
  %1211 = vrot.lane.b32.xlu0 %v1209, 64
  %v1212 = vpop.permute.xlu0 %1211
  %v1214 = vmul.f32 %v1208, %v1212
  %1216 = vrot.lane.b32.xlu0 %v1214, 64
  %v1217 = vpop.permute.xlu0 %1216
  %v1219 = vadd.f32 %v1166, %v1217
  %v1220 = vtanh.pop %v1219
  %v1221 = vsub.f32 %v1089, %v1220
  %1223 = vrot.lane.b32.xlu0 %v1221, 96
  %v1224 = vpop.permute.xlu0 %1223
  %v1226 = vmul.f32 %v1208, %v1224
  %1228 = vrot.lane.b32.xlu0 %v1226, 32
  %v1229 = vpop.permute.xlu0 %1228
  %v1231 = vadd.f32 %v1220, %v1229
  %v1232 = vld [vmem:[#allocation2 + $0x18] sm:$0xff]
  %v1233 = vsel %vm177, %v1163, 0
  %1235 = vmatpush.msra.mxu0 0.0
  %1236 = vmatpush.msra.mxu0 0.0
  %1237 = vmatpush.msra.mxu0 0.0
  %1238 = vmatpush.msra.mxu0 0.0
  %1239 = vmatpush.msra.mxu0 0.0
  %1240 = vmatpush.msra.mxu0 0.0
  %1241 = vmatpush.msra.mxu0 0.0
  %1242 = vmatpush.msra.mxu0 0.0
  %1243 = vmatpush.msra.mxu0 0.0
  %1244 = vmatpush.msra.mxu0 0.0
  %1245 = vmatpush.msra.mxu0 0.0
  %1246 = vmatpush.msra.mxu0 0.0
  %1247 = vmatpush.msra.mxu0 %v307
  %1248 = vmatpush.msra.mxu0 %v306
  %1249 = vmatpush.msra.mxu0 %v305
  %1250 = vmatpush.msra.mxu0 %v304
  %1251 = vmatmul.f32.gmra.mxu0 %v1233
  %v1252 = vpop.f32.mrf.mxu0
  %v1253 = vadd.f32 0.0, %v1252
  %1254 = vdwg.mxu0
  %v1255 = vadd.f32 %v1232, %v1253
  %v1256 = vxor.u32 %v1255, 2147483648
  %v1257 = vmul.f32 %v1256, 1.442695
  %v1258 = vpow.pop %v1257
  %v1259 = vadd.f32 %v1258, 1.0
  %v1260 = vrcp.pop %v1259
  %v1261 = vmul.f32 %v1259, %v1260
  %v1262 = vsub.f32 1.0, %v1261
  %v1263 = vmul.f32 %v1260, %v1262
  %v1264 = vadd.f32 %v1260, %v1263
  %vm1265 = vweird.f32 %v1259
  %vm1266 = vweird.f32 %v1260
  %vm1267 = vmor %vm1265, %vm1266
  %v1268 = vsel %vm1267, %v1260, %v1264
  %v1269 = vand.u32 2147483647, %v1259
  %vm1270 = vcmp.eq.f32.partialorder %v1269, 8.507059e+37
  %v1271 = vand.u32 %v1259, 2147483648
  %v1272 = vor.u32 1.1754944e-38, %v1271
  %v1273 = vsel %vm1270, %v1272, %v1268
  %v1274 = vmul.f32 1.0, %v1273
  %v1275 = vadd.f32 %v1253, %v421
  %1277 = vrot.lane.b32.xlu0 %v1275, 64
  %v1278 = vpop.permute.xlu0 %1277
  %v1280 = vmul.f32 %v1274, %v1278
  %1282 = vrot.lane.b32.xlu0 %v1280, 64
  %v1283 = vpop.permute.xlu0 %1282
  %v1285 = vadd.f32 %v1232, %v1283
  %v1286 = vtanh.pop %v1285
  %v1287 = vsub.f32 %v1155, %v1286
  %1289 = vrot.lane.b32.xlu0 %v1287, 96
  %v1290 = vpop.permute.xlu0 %1289
  %v1292 = vmul.f32 %v1274, %v1290
  %1294 = vrot.lane.b32.xlu0 %v1292, 32
  %v1295 = vpop.permute.xlu0 %1294
  %v1297 = vadd.f32 %v1286, %v1295
  %1299 = vrot.lane.b32.xlu0 %v1231, 64
  %v1300 = vpop.permute.xlu0 %1299
  %1302 = vst.msk [vmem:[#allocation3 + $0x30] sm:$0xff] %vm177, %v1300
  %1304 = vrot.lane.b32.xlu0 %v1297, 64
  %v1305 = vpop.permute.xlu0 %1304
  %1307 = vst.msk [vmem:[#allocation4 + $0x8] sm:$0xff] %vm177, %v1305
  %v1308 = vld [vmem:[#allocation2 + $0x70] sm:$0xff]
  %v1309 = vsel %vm177, %v1300, 0
  %1311 = vmatpush.msra.mxu0 0.0
  %1312 = vmatpush.msra.mxu0 0.0
  %1313 = vmatpush.msra.mxu0 0.0
  %1314 = vmatpush.msra.mxu0 0.0
  %1315 = vmatpush.msra.mxu0 0.0
  %1316 = vmatpush.msra.mxu0 0.0
  %1317 = vmatpush.msra.mxu0 0.0
  %1318 = vmatpush.msra.mxu0 0.0
  %1319 = vmatpush.msra.mxu0 0.0
  %1320 = vmatpush.msra.mxu0 0.0
  %1321 = vmatpush.msra.mxu0 0.0
  %1322 = vmatpush.msra.mxu0 0.0
  %1323 = vmatpush.msra.mxu0 %v303
  %1324 = vmatpush.msra.mxu0 %v302
  %1325 = vmatpush.msra.mxu0 %v301
  %1326 = vmatpush.msra.mxu0 %v300
  %1327 = vmatmul.f32.gmra.mxu0 %v1309
  %v1328 = vpop.f32.mrf.mxu0
  %v1329 = vadd.f32 0.0, %v1328
  %1330 = vdwg.mxu0
  %v1331 = vadd.f32 %v1308, %v1329
  %v1332 = vxor.u32 %v1331, 2147483648
  %v1333 = vmul.f32 %v1332, 1.442695
  %v1334 = vpow.pop %v1333
  %v1335 = vadd.f32 %v1334, 1.0
  %v1336 = vrcp.pop %v1335
  %v1337 = vmul.f32 %v1335, %v1336
  %v1338 = vsub.f32 1.0, %v1337
  %v1339 = vmul.f32 %v1336, %v1338
  %v1340 = vadd.f32 %v1336, %v1339
  %vm1341 = vweird.f32 %v1335
  %vm1342 = vweird.f32 %v1336
  %vm1343 = vmor %vm1341, %vm1342
  %v1344 = vsel %vm1343, %v1336, %v1340
  %v1345 = vand.u32 2147483647, %v1335
  %vm1346 = vcmp.eq.f32.partialorder %v1345, 8.507059e+37
  %v1347 = vand.u32 %v1335, 2147483648
  %v1348 = vor.u32 1.1754944e-38, %v1347
  %v1349 = vsel %vm1346, %v1348, %v1344
  %v1350 = vmul.f32 1.0, %v1349
  %v1351 = vadd.f32 %v1329, %v354
  %1353 = vrot.lane.b32.xlu0 %v1351, 64
  %v1354 = vpop.permute.xlu0 %1353
  %v1356 = vmul.f32 %v1350, %v1354
  %1358 = vrot.lane.b32.xlu0 %v1356, 64
  %v1359 = vpop.permute.xlu0 %1358
  %v1361 = vadd.f32 %v1308, %v1359
  %v1362 = vtanh.pop %v1361
  %v1363 = vsub.f32 %v1231, %v1362
  %1365 = vrot.lane.b32.xlu0 %v1363, 96
  %v1366 = vpop.permute.xlu0 %1365
  %v1368 = vmul.f32 %v1350, %v1366
  %1370 = vrot.lane.b32.xlu0 %v1368, 32
  %v1371 = vpop.permute.xlu0 %1370
  %v1373 = vadd.f32 %v1362, %v1371
  %v1374 = vld [vmem:[#allocation2 + $0x8] sm:$0xff]
  %v1375 = vsel %vm177, %v1305, 0
  %1377 = vmatpush.msra.mxu0 0.0
  %1378 = vmatpush.msra.mxu0 0.0
  %1379 = vmatpush.msra.mxu0 0.0
  %1380 = vmatpush.msra.mxu0 0.0
  %1381 = vmatpush.msra.mxu0 0.0
  %1382 = vmatpush.msra.mxu0 0.0
  %1383 = vmatpush.msra.mxu0 0.0
  %1384 = vmatpush.msra.mxu0 0.0
  %1385 = vmatpush.msra.mxu0 0.0
  %1386 = vmatpush.msra.mxu0 0.0
  %1387 = vmatpush.msra.mxu0 0.0
  %1388 = vmatpush.msra.mxu0 0.0
  %1389 = vmatpush.msra.mxu0 %v307
  %1390 = vmatpush.msra.mxu0 %v306
  %1391 = vmatpush.msra.mxu0 %v305
  %1392 = vmatpush.msra.mxu0 %v304
  %1393 = vmatmul.f32.gmra.mxu0 %v1375
  %v1394 = vpop.f32.mrf.mxu0
  %v1395 = vadd.f32 0.0, %v1394
  %1396 = vdwg.mxu0
  %v1397 = vadd.f32 %v1374, %v1395
  %v1398 = vxor.u32 %v1397, 2147483648
  %v1399 = vmul.f32 %v1398, 1.442695
  %v1400 = vpow.pop %v1399
  %v1401 = vadd.f32 %v1400, 1.0
  %v1402 = vrcp.pop %v1401
  %v1403 = vmul.f32 %v1401, %v1402
  %v1404 = vsub.f32 1.0, %v1403
  %v1405 = vmul.f32 %v1402, %v1404
  %v1406 = vadd.f32 %v1402, %v1405
  %vm1407 = vweird.f32 %v1401
  %vm1408 = vweird.f32 %v1402
  %vm1409 = vmor %vm1407, %vm1408
  %v1410 = vsel %vm1409, %v1402, %v1406
  %v1411 = vand.u32 2147483647, %v1401
  %vm1412 = vcmp.eq.f32.partialorder %v1411, 8.507059e+37
  %v1413 = vand.u32 %v1401, 2147483648
  %v1414 = vor.u32 1.1754944e-38, %v1413
  %v1415 = vsel %vm1412, %v1414, %v1410
  %v1416 = vmul.f32 1.0, %v1415
  %v1417 = vadd.f32 %v1395, %v421
  %1419 = vrot.lane.b32.xlu0 %v1417, 64
  %v1420 = vpop.permute.xlu0 %1419
  %v1422 = vmul.f32 %v1416, %v1420
  %1424 = vrot.lane.b32.xlu0 %v1422, 64
  %v1425 = vpop.permute.xlu0 %1424
  %v1427 = vadd.f32 %v1374, %v1425
  %v1428 = vtanh.pop %v1427
  %v1429 = vsub.f32 %v1297, %v1428
  %1431 = vrot.lane.b32.xlu0 %v1429, 96
  %v1432 = vpop.permute.xlu0 %1431
  %v1434 = vmul.f32 %v1416, %v1432
  %1436 = vrot.lane.b32.xlu0 %v1434, 32
  %v1437 = vpop.permute.xlu0 %1436
  %v1439 = vadd.f32 %v1428, %v1437
  %1441 = vrot.lane.b32.xlu0 %v1373, 64
  %v1442 = vpop.permute.xlu0 %1441
  %1444 = vst.msk [vmem:[#allocation3 + $0x38] sm:$0xff] %vm177, %v1442
  %1446 = vrot.lane.b32.xlu0 %v1439, 64
  %v1447 = vpop.permute.xlu0 %1446
  %1449 = vst.msk [vmem:[#allocation4] sm:$0xff] %vm177, %v1447
  %v1450 = vld [vmem:[#allocation3] sm:$0xff]
  %v1451 = vld [vmem:[#allocation3 + $0x8] sm:$0xff]
  %v1452 = vld [vmem:[#allocation3 + $0x10] sm:$0xff]
  %v1453 = vld [vmem:[#allocation3 + $0x18] sm:$0xff]
  %v1454 = vld [vmem:[#allocation3 + $0x20] sm:$0xff]
  %v1455 = vld [vmem:[#allocation3 + $0x28] sm:$0xff]
  %v1456 = vld [vmem:[#allocation3 + $0x30] sm:$0xff]
  %v1457 = vld [vmem:[#allocation3 + $0x38] sm:$0xff]
  %v1458 = vld [vmem:[%s4] sm:$0xff]
  %v1459 = vld [vmem:[%s4 + $0x8] sm:$0xff]
  %v1460 = vld [vmem:[%s4 + $0x10] sm:$0xff]
  %v1461 = vld [vmem:[%s4 + $0x18] sm:$0xff]
  %v1462 = vld [vmem:[%s4 + $0x20] sm:$0xff]
  %v1463 = vld [vmem:[%s4 + $0x28] sm:$0xff]
  %v1464 = vld [vmem:[%s4 + $0x30] sm:$0xff]
  %v1465 = vld [vmem:[%s4 + $0x38] sm:$0xff]
  %v1466 = vld [vmem:[#allocation4] sm:$0xff]
  %v1467 = vld [vmem:[#allocation4 + $0x8] sm:$0xff]
  %v1468 = vld [vmem:[#allocation4 + $0x10] sm:$0xff]
  %v1469 = vld [vmem:[#allocation4 + $0x18] sm:$0xff]
  %v1470 = vld [vmem:[#allocation4 + $0x20] sm:$0xff]
  %v1471 = vld [vmem:[#allocation4 + $0x28] sm:$0xff]
  %v1472 = vld [vmem:[#allocation4 + $0x30] sm:$0xff]
  %v1473 = vld [vmem:[#allocation4 + $0x38] sm:$0xff]
  %v1474 = vld [vmem:[%s5] sm:$0xff]
  %v1475 = vld [vmem:[%s5 + $0x8] sm:$0xff]
  %v1476 = vld [vmem:[%s5 + $0x10] sm:$0xff]
  %v1477 = vld [vmem:[%s5 + $0x18] sm:$0xff]
  %v1478 = vld [vmem:[%s5 + $0x20] sm:$0xff]
  %v1479 = vld [vmem:[%s5 + $0x28] sm:$0xff]
  %v1480 = vld [vmem:[%s5 + $0x30] sm:$0xff]
  %v1481 = vld [vmem:[%s5 + $0x38] sm:$0xff]
  %v1483 = vsel %vm177, %v1466, 0
  %v1486 = vsel %vm177, %v1467, 0
  %v1489 = vsel %vm177, %v1468, 0
  %v1492 = vsel %vm177, %v1469, 0
  %v1495 = vsel %vm177, %v1470, 0
  %v1498 = vsel %vm177, %v1471, 0
  %v1501 = vsel %vm177, %v1472, 0
  %v1504 = vsel %vm177, %v1473, 0
  %1506 = vmatpush.msra.mxu0 0.0
  %1507 = vmatpush.msra.mxu0 0.0
  %1508 = vmatpush.msra.mxu0 0.0
  %1509 = vmatpush.msra.mxu0 0.0
  %1510 = vmatpush.msra.mxu0 0.0
  %1511 = vmatpush.msra.mxu0 0.0
  %1512 = vmatpush.msra.mxu0 0.0
  %1513 = vmatpush.msra.mxu0 0.0
  %1514 = vmatpush.msra.mxu0 0.0
  %1515 = vmatpush.msra.mxu0 0.0
  %1516 = vmatpush.msra.mxu0 0.0
  %1517 = vmatpush.msra.mxu0 0.0
  %1518 = vmatpush.msra.mxu0 %v1480
  %1519 = vmatpush.msra.mxu0 %v1478
  %1520 = vmatpush.msra.mxu0 %v1476
  %1521 = vmatpush.msra.mxu0 %v1474
  %1522 = vmatmul.f32.gmra.mxu0 %v1483
  %v1523 = vpop.f32.mrf.mxu0
  %v1524 = vadd.f32 0.0, %v1523
  %1525 = vmatmul.f32.gmra.mxu0 %v1486
  %v1526 = vpop.f32.mrf.mxu0
  %v1527 = vadd.f32 0.0, %v1526
  %1528 = vmatmul.f32.gmra.mxu0 %v1489
  %v1529 = vpop.f32.mrf.mxu0
  %v1530 = vadd.f32 0.0, %v1529
  %1531 = vmatmul.f32.gmra.mxu0 %v1492
  %v1532 = vpop.f32.mrf.mxu0
  %v1533 = vadd.f32 0.0, %v1532
  %1534 = vmatmul.f32.gmra.mxu0 %v1495
  %v1535 = vpop.f32.mrf.mxu0
  %v1536 = vadd.f32 0.0, %v1535
  %1537 = vmatmul.f32.gmra.mxu0 %v1498
  %v1538 = vpop.f32.mrf.mxu0
  %v1539 = vadd.f32 0.0, %v1538
  %1540 = vmatmul.f32.gmra.mxu0 %v1501
  %v1541 = vpop.f32.mrf.mxu0
  %v1542 = vadd.f32 0.0, %v1541
  %1543 = vmatmul.f32.gmra.mxu0 %v1504
  %v1544 = vpop.f32.mrf.mxu0
  %v1545 = vadd.f32 0.0, %v1544
  %1546 = vdwg.mxu0
  %1547 = vmatpush.msra.mxu0 0.0
  %1548 = vmatpush.msra.mxu0 0.0
  %1549 = vmatpush.msra.mxu0 0.0
  %1550 = vmatpush.msra.mxu0 0.0
  %1551 = vmatpush.msra.mxu0 0.0
  %1552 = vmatpush.msra.mxu0 0.0
  %1553 = vmatpush.msra.mxu0 0.0
  %1554 = vmatpush.msra.mxu0 0.0
  %1555 = vmatpush.msra.mxu0 0.0
  %1556 = vmatpush.msra.mxu0 0.0
  %1557 = vmatpush.msra.mxu0 0.0
  %1558 = vmatpush.msra.mxu0 0.0
  %1559 = vmatpush.msra.mxu0 %v1481
  %1560 = vmatpush.msra.mxu0 %v1479
  %1561 = vmatpush.msra.mxu0 %v1477
  %1562 = vmatpush.msra.mxu0 %v1475
  %1563 = vmatmul.f32.gmra.mxu0 %v1483
  %v1564 = vpop.f32.mrf.mxu0
  %v1565 = vadd.f32 0.0, %v1564
  %1566 = vmatmul.f32.gmra.mxu0 %v1486
  %v1567 = vpop.f32.mrf.mxu0
  %v1568 = vadd.f32 0.0, %v1567
  %1569 = vmatmul.f32.gmra.mxu0 %v1489
  %v1570 = vpop.f32.mrf.mxu0
  %v1571 = vadd.f32 0.0, %v1570
  %1572 = vmatmul.f32.gmra.mxu0 %v1492
  %v1573 = vpop.f32.mrf.mxu0
  %v1574 = vadd.f32 0.0, %v1573
  %1575 = vmatmul.f32.gmra.mxu0 %v1495
  %v1576 = vpop.f32.mrf.mxu0
  %v1577 = vadd.f32 0.0, %v1576
  %1578 = vmatmul.f32.gmra.mxu0 %v1498
  %v1579 = vpop.f32.mrf.mxu0
  %v1580 = vadd.f32 0.0, %v1579
  %1581 = vmatmul.f32.gmra.mxu0 %v1501
  %v1582 = vpop.f32.mrf.mxu0
  %v1583 = vadd.f32 0.0, %v1582
  %1584 = vmatmul.f32.gmra.mxu0 %v1504
  %v1585 = vpop.f32.mrf.mxu0
  %v1586 = vadd.f32 0.0, %v1585
  %1587 = vdwg.mxu0
  %v1589 = vsel %vm177, %v1450, 0
  %v1592 = vsel %vm177, %v1451, 0
  %v1595 = vsel %vm177, %v1452, 0
  %v1598 = vsel %vm177, %v1453, 0
  %v1601 = vsel %vm177, %v1454, 0
  %v1604 = vsel %vm177, %v1455, 0
  %v1607 = vsel %vm177, %v1456, 0
  %v1610 = vsel %vm177, %v1457, 0
  %1612 = vmatpush.msra.mxu0 0.0
  %1613 = vmatpush.msra.mxu0 0.0
  %1614 = vmatpush.msra.mxu0 0.0
  %1615 = vmatpush.msra.mxu0 0.0
  %1616 = vmatpush.msra.mxu0 0.0
  %1617 = vmatpush.msra.mxu0 0.0
  %1618 = vmatpush.msra.mxu0 0.0
  %1619 = vmatpush.msra.mxu0 0.0
  %1620 = vmatpush.msra.mxu0 0.0
  %1621 = vmatpush.msra.mxu0 0.0
  %1622 = vmatpush.msra.mxu0 0.0
  %1623 = vmatpush.msra.mxu0 0.0
  %1624 = vmatpush.msra.mxu0 %v1464
  %1625 = vmatpush.msra.mxu0 %v1462
  %1626 = vmatpush.msra.mxu0 %v1460
  %1627 = vmatpush.msra.mxu0 %v1458
  %1628 = vmatmul.f32.gmra.mxu0 %v1589
  %v1629 = vpop.f32.mrf.mxu0
  %v1630 = vadd.f32 %v1524, %v1629
  %1631 = vmatmul.f32.gmra.mxu0 %v1592
  %v1632 = vpop.f32.mrf.mxu0
  %v1633 = vadd.f32 %v1527, %v1632
  %1634 = vmatmul.f32.gmra.mxu0 %v1595
  %v1635 = vpop.f32.mrf.mxu0
  %v1636 = vadd.f32 %v1530, %v1635
  %1637 = vmatmul.f32.gmra.mxu0 %v1598
  %v1638 = vpop.f32.mrf.mxu0
  %v1639 = vadd.f32 %v1533, %v1638
  %1640 = vmatmul.f32.gmra.mxu0 %v1601
  %v1641 = vpop.f32.mrf.mxu0
  %v1642 = vadd.f32 %v1536, %v1641
  %1643 = vmatmul.f32.gmra.mxu0 %v1604
  %v1644 = vpop.f32.mrf.mxu0
  %v1645 = vadd.f32 %v1539, %v1644
  %1646 = vmatmul.f32.gmra.mxu0 %v1607
  %v1647 = vpop.f32.mrf.mxu0
  %v1648 = vadd.f32 %v1542, %v1647
  %1649 = vmatmul.f32.gmra.mxu0 %v1610
  %v1650 = vpop.f32.mrf.mxu0
  %v1651 = vadd.f32 %v1545, %v1650
  %1652 = vdwg.mxu0
  %1653 = vmatpush.msra.mxu0 0.0
  %1654 = vmatpush.msra.mxu0 0.0
  %1655 = vmatpush.msra.mxu0 0.0
  %1656 = vmatpush.msra.mxu0 0.0
  %1657 = vmatpush.msra.mxu0 0.0
  %1658 = vmatpush.msra.mxu0 0.0
  %1659 = vmatpush.msra.mxu0 0.0
  %1660 = vmatpush.msra.mxu0 0.0
  %1661 = vmatpush.msra.mxu0 0.0
  %1662 = vmatpush.msra.mxu0 0.0
  %1663 = vmatpush.msra.mxu0 0.0
  %1664 = vmatpush.msra.mxu0 0.0
  %1665 = vmatpush.msra.mxu0 %v1465
  %1666 = vmatpush.msra.mxu0 %v1463
  %1667 = vmatpush.msra.mxu0 %v1461
  %1668 = vmatpush.msra.mxu0 %v1459
  %1669 = vmatmul.f32.gmra.mxu0 %v1589
  %v1670 = vpop.f32.mrf.mxu0
  %v1671 = vadd.f32 %v1565, %v1670
  %1672 = vmatmul.f32.gmra.mxu0 %v1592
  %v1673 = vpop.f32.mrf.mxu0
  %v1674 = vadd.f32 %v1568, %v1673
  %1675 = vmatmul.f32.gmra.mxu0 %v1595
  %v1676 = vpop.f32.mrf.mxu0
  %v1677 = vadd.f32 %v1571, %v1676
  %1678 = vmatmul.f32.gmra.mxu0 %v1598
  %v1679 = vpop.f32.mrf.mxu0
  %v1680 = vadd.f32 %v1574, %v1679
  %1681 = vmatmul.f32.gmra.mxu0 %v1601
  %v1682 = vpop.f32.mrf.mxu0
  %v1683 = vadd.f32 %v1577, %v1682
  %1684 = vmatmul.f32.gmra.mxu0 %v1604
  %v1685 = vpop.f32.mrf.mxu0
  %v1686 = vadd.f32 %v1580, %v1685
  %1687 = vmatmul.f32.gmra.mxu0 %v1607
  %v1688 = vpop.f32.mrf.mxu0
  %v1689 = vadd.f32 %v1583, %v1688
  %1690 = vmatmul.f32.gmra.mxu0 %v1610
  %v1691 = vpop.f32.mrf.mxu0
  %v1692 = vadd.f32 %v1586, %v1691
  %1693 = vdwg.mxu0
  %v1694 = vld [vmem:[%s6] sm:$0x3]
  %v1696 = vperm.slane %v1694, 0
  %v1697 = vperm.slane %v1694, 1
  %v1700 = vadd.f32 %v1630, %v1696
  %v1701 = vadd.f32 %v1671, %v1697
  %v1702 = vadd.f32 %v1633, %v1696
  %v1703 = vadd.f32 %v1674, %v1697
  %v1704 = vadd.f32 %v1636, %v1696
  %v1705 = vadd.f32 %v1677, %v1697
  %v1706 = vadd.f32 %v1639, %v1696
  %v1707 = vadd.f32 %v1680, %v1697
  %v1708 = vadd.f32 %v1642, %v1696
  %v1709 = vadd.f32 %v1683, %v1697
  %v1710 = vadd.f32 %v1645, %v1696
  %v1711 = vadd.f32 %v1686, %v1697
  %v1712 = vadd.f32 %v1648, %v1696
  %v1713 = vadd.f32 %v1689, %v1697
  %v1714 = vadd.f32 %v1651, %v1696
  %v1715 = vadd.f32 %v1692, %v1697
  %1716 = vst [vmem:[#allocation2] sm:$0xff] %v1700
  %1717 = vst [vmem:[#allocation2 + $0x8] sm:$0xff] %v1701
  %1718 = vst [vmem:[#allocation2 + $0x10] sm:$0xff] %v1702
  %1719 = vst [vmem:[#allocation2 + $0x18] sm:$0xff] %v1703
  %1720 = vst [vmem:[#allocation2 + $0x20] sm:$0xff] %v1704
  %1721 = vst [vmem:[#allocation2 + $0x28] sm:$0xff] %v1705
  %1722 = vst [vmem:[#allocation2 + $0x30] sm:$0xff] %v1706
  %1723 = vst [vmem:[#allocation2 + $0x38] sm:$0xff] %v1707
  %1724 = vst [vmem:[#allocation2 + $0x40] sm:$0xff] %v1708
  %1725 = vst [vmem:[#allocation2 + $0x48] sm:$0xff] %v1709
  %1726 = vst [vmem:[#allocation2 + $0x50] sm:$0xff] %v1710
  %1727 = vst [vmem:[#allocation2 + $0x58] sm:$0xff] %v1711
  %1728 = vst [vmem:[#allocation2 + $0x60] sm:$0xff] %v1712
  %1729 = vst [vmem:[#allocation2 + $0x68] sm:$0xff] %v1713
  %1730 = vst [vmem:[#allocation2 + $0x70] sm:$0xff] %v1714
  %1731 = vst [vmem:[#allocation2 + $0x78] sm:$0xff] %v1715
  %v1732 = vld [vmem:[%s9] sm:$0xff]
  %v1733 = vld [vmem:[%s9 + $0x8] sm:$0xff]
  %v1734 = vld [vmem:[%s9 + $0x10] sm:$0xff]
  %v1735 = vld [vmem:[%s9 + $0x18] sm:$0xff]
  %v1736 = vld [vmem:[%s10] sm:$0xff]
  %v1737 = vld [vmem:[%s10 + $0x8] sm:$0xff]
  %v1738 = vld [vmem:[%s10 + $0x10] sm:$0xff]
  %v1739 = vld [vmem:[%s10 + $0x18] sm:$0xff]
  %v1740 = vld [vmem:[#allocation2] sm:$0xff]
  %1741 = vmatpush.msra.mxu0 0.0
  %1742 = vmatpush.msra.mxu0 0.0
  %1743 = vmatpush.msra.mxu0 0.0
  %1744 = vmatpush.msra.mxu0 0.0
  %1745 = vmatpush.msra.mxu0 0.0
  %1746 = vmatpush.msra.mxu0 0.0
  %1747 = vmatpush.msra.mxu0 0.0
  %1748 = vmatpush.msra.mxu0 0.0
  %1749 = vmatpush.msra.mxu0 0.0
  %1750 = vmatpush.msra.mxu0 0.0
  %1751 = vmatpush.msra.mxu0 0.0
  %1752 = vmatpush.msra.mxu0 0.0
  %1753 = vmatpush.msra.mxu0 %v1735
  %1754 = vmatpush.msra.mxu0 %v1734
  %1755 = vmatpush.msra.mxu0 %v1733
  %1756 = vmatpush.msra.mxu0 %v1732
  %1757 = vmatmul.f32.gmra.mxu0 %v310
  %v1758 = vpop.f32.mrf.mxu0
  %v1759 = vadd.f32 0.0, %v1758
  %1760 = vdwg.mxu0
  %v1761 = vadd.f32 %v1740, %v1759
  %v1762 = vxor.u32 %v1761, 2147483648
  %v1763 = vmul.f32 %v1762, 1.442695
  %v1764 = vpow.pop %v1763
  %v1765 = vadd.f32 %v1764, 1.0
  %v1766 = vrcp.pop %v1765
  %v1767 = vmul.f32 %v1765, %v1766
  %v1768 = vsub.f32 1.0, %v1767
  %v1769 = vmul.f32 %v1766, %v1768
  %v1770 = vadd.f32 %v1766, %v1769
  %vm1771 = vweird.f32 %v1765
  %vm1772 = vweird.f32 %v1766
  %vm1773 = vmor %vm1771, %vm1772
  %v1774 = vsel %vm1773, %v1766, %v1770
  %v1775 = vand.u32 2147483647, %v1765
  %vm1776 = vcmp.eq.f32.partialorder %v1775, 8.507059e+37
  %v1777 = vand.u32 %v1765, 2147483648
  %v1778 = vor.u32 1.1754944e-38, %v1777
  %v1779 = vsel %vm1776, %v1778, %v1774
  %v1780 = vmul.f32 1.0, %v1779
  %v1781 = vadd.f32 %v1759, %v162
  %1783 = vrot.lane.b32.xlu0 %v1781, 64
  %v1784 = vpop.permute.xlu0 %1783
  %v1786 = vmul.f32 %v1780, %v1784
  %1788 = vrot.lane.b32.xlu0 %v1786, 64
  %v1789 = vpop.permute.xlu0 %1788
  %v1791 = vadd.f32 %v1740, %v1789
  %v1792 = vtanh.pop %v1791
  %v1793 = vsub.f32 0.0, %v1792
  %1795 = vrot.lane.b32.xlu0 %v1793, 96
  %v1796 = vpop.permute.xlu0 %1795
  %v1798 = vmul.f32 %v1780, %v1796
  %1800 = vrot.lane.b32.xlu0 %v1798, 32
  %v1801 = vpop.permute.xlu0 %1800
  %v1803 = vadd.f32 %v1792, %v1801
  %v1804 = vld [vmem:[#allocation2 + $0x78] sm:$0xff]
  %1805 = vmatpush.msra.mxu0 0.0
  %1806 = vmatpush.msra.mxu0 0.0
  %1807 = vmatpush.msra.mxu0 0.0
  %1808 = vmatpush.msra.mxu0 0.0
  %1809 = vmatpush.msra.mxu0 0.0
  %1810 = vmatpush.msra.mxu0 0.0
  %1811 = vmatpush.msra.mxu0 0.0
  %1812 = vmatpush.msra.mxu0 0.0
  %1813 = vmatpush.msra.mxu0 0.0
  %1814 = vmatpush.msra.mxu0 0.0
  %1815 = vmatpush.msra.mxu0 0.0
  %1816 = vmatpush.msra.mxu0 0.0
  %1817 = vmatpush.msra.mxu0 %v1739
  %1818 = vmatpush.msra.mxu0 %v1738
  %1819 = vmatpush.msra.mxu0 %v1737
  %1820 = vmatpush.msra.mxu0 %v1736
  %1821 = vmatmul.f32.gmra.mxu0 %v310
  %v1822 = vpop.f32.mrf.mxu0
  %v1823 = vadd.f32 0.0, %v1822
  %1824 = vdwg.mxu0
  %v1825 = vadd.f32 %v1804, %v1823
  %v1826 = vxor.u32 %v1825, 2147483648
  %v1827 = vmul.f32 %v1826, 1.442695
  %v1828 = vpow.pop %v1827
  %v1829 = vadd.f32 %v1828, 1.0
  %v1830 = vrcp.pop %v1829
  %v1831 = vmul.f32 %v1829, %v1830
  %v1832 = vsub.f32 1.0, %v1831
  %v1833 = vmul.f32 %v1830, %v1832
  %v1834 = vadd.f32 %v1830, %v1833
  %vm1835 = vweird.f32 %v1829
  %vm1836 = vweird.f32 %v1830
  %vm1837 = vmor %vm1835, %vm1836
  %v1838 = vsel %vm1837, %v1830, %v1834
  %v1839 = vand.u32 2147483647, %v1829
  %vm1840 = vcmp.eq.f32.partialorder %v1839, 8.507059e+37
  %v1841 = vand.u32 %v1829, 2147483648
  %v1842 = vor.u32 1.1754944e-38, %v1841
  %v1843 = vsel %vm1840, %v1842, %v1838
  %v1844 = vmul.f32 1.0, %v1843
  %1845 = vrot.lane.b32.xlu0 %v162, 96
  %v1846 = vpop.permute.xlu0 %1845
  %v1848 = vadd.f32 %v1823, %v1846
  %1850 = vrot.lane.b32.xlu0 %v1848, 64
  %v1851 = vpop.permute.xlu0 %1850
  %v1853 = vmul.f32 %v1844, %v1851
  %1855 = vrot.lane.b32.xlu0 %v1853, 64
  %v1856 = vpop.permute.xlu0 %1855
  %v1858 = vadd.f32 %v1804, %v1856
  %v1859 = vtanh.pop %v1858
  %v1860 = vsub.f32 0.0, %v1859
  %1862 = vrot.lane.b32.xlu0 %v1860, 96
  %v1863 = vpop.permute.xlu0 %1862
  %v1865 = vmul.f32 %v1844, %v1863
  %1867 = vrot.lane.b32.xlu0 %v1865, 32
  %v1868 = vpop.permute.xlu0 %1867
  %v1870 = vadd.f32 %v1859, %v1868
  %v1871 = vld [vmem:[#allocation2 + $0x10] sm:$0xff]
  %1873 = vrot.lane.b32.xlu0 %v1803, 64
  %v1874 = vpop.permute.xlu0 %1873
  %v1875 = vsel %vm177, %v1874, 0
  %1877 = vmatpush.msra.mxu0 0.0
  %1878 = vmatpush.msra.mxu0 0.0
  %1879 = vmatpush.msra.mxu0 0.0
  %1880 = vmatpush.msra.mxu0 0.0
  %1881 = vmatpush.msra.mxu0 0.0
  %1882 = vmatpush.msra.mxu0 0.0
  %1883 = vmatpush.msra.mxu0 0.0
  %1884 = vmatpush.msra.mxu0 0.0
  %1885 = vmatpush.msra.mxu0 0.0
  %1886 = vmatpush.msra.mxu0 0.0
  %1887 = vmatpush.msra.mxu0 0.0
  %1888 = vmatpush.msra.mxu0 0.0
  %1889 = vmatpush.msra.mxu0 %v1735
  %1890 = vmatpush.msra.mxu0 %v1734
  %1891 = vmatpush.msra.mxu0 %v1733
  %1892 = vmatpush.msra.mxu0 %v1732
  %1893 = vmatmul.f32.gmra.mxu0 %v1875
  %v1894 = vpop.f32.mrf.mxu0
  %v1895 = vadd.f32 0.0, %v1894
  %1896 = vdwg.mxu0
  %v1897 = vadd.f32 %v1871, %v1895
  %v1898 = vxor.u32 %v1897, 2147483648
  %v1899 = vmul.f32 %v1898, 1.442695
  %v1900 = vpow.pop %v1899
  %v1901 = vadd.f32 %v1900, 1.0
  %v1902 = vrcp.pop %v1901
  %v1903 = vmul.f32 %v1901, %v1902
  %v1904 = vsub.f32 1.0, %v1903
  %v1905 = vmul.f32 %v1902, %v1904
  %v1906 = vadd.f32 %v1902, %v1905
  %vm1907 = vweird.f32 %v1901
  %vm1908 = vweird.f32 %v1902
  %vm1909 = vmor %vm1907, %vm1908
  %v1910 = vsel %vm1909, %v1902, %v1906
  %v1911 = vand.u32 2147483647, %v1901
  %vm1912 = vcmp.eq.f32.partialorder %v1911, 8.507059e+37
  %v1913 = vand.u32 %v1901, 2147483648
  %v1914 = vor.u32 1.1754944e-38, %v1913
  %v1915 = vsel %vm1912, %v1914, %v1910
  %v1916 = vmul.f32 1.0, %v1915
  %v1917 = vadd.f32 %v1895, %v162
  %1919 = vrot.lane.b32.xlu0 %v1917, 64
  %v1920 = vpop.permute.xlu0 %1919
  %v1922 = vmul.f32 %v1916, %v1920
  %1924 = vrot.lane.b32.xlu0 %v1922, 64
  %v1925 = vpop.permute.xlu0 %1924
  %v1927 = vadd.f32 %v1871, %v1925
  %v1928 = vtanh.pop %v1927
  %v1929 = vsub.f32 %v1803, %v1928
  %1931 = vrot.lane.b32.xlu0 %v1929, 96
  %v1932 = vpop.permute.xlu0 %1931
  %v1934 = vmul.f32 %v1916, %v1932
  %1936 = vrot.lane.b32.xlu0 %v1934, 32
  %v1937 = vpop.permute.xlu0 %1936
  %v1939 = vadd.f32 %v1928, %v1937
  %v1940 = vld [vmem:[#allocation2 + $0x68] sm:$0xff]
  %1942 = vrot.lane.b32.xlu0 %v1870, 64
  %v1943 = vpop.permute.xlu0 %1942
  %v1944 = vsel %vm177, %v1943, 0
  %1946 = vmatpush.msra.mxu0 0.0
  %1947 = vmatpush.msra.mxu0 0.0
  %1948 = vmatpush.msra.mxu0 0.0
  %1949 = vmatpush.msra.mxu0 0.0
  %1950 = vmatpush.msra.mxu0 0.0
  %1951 = vmatpush.msra.mxu0 0.0
  %1952 = vmatpush.msra.mxu0 0.0
  %1953 = vmatpush.msra.mxu0 0.0
  %1954 = vmatpush.msra.mxu0 0.0
  %1955 = vmatpush.msra.mxu0 0.0
  %1956 = vmatpush.msra.mxu0 0.0
  %1957 = vmatpush.msra.mxu0 0.0
  %1958 = vmatpush.msra.mxu0 %v1739
  %1959 = vmatpush.msra.mxu0 %v1738
  %1960 = vmatpush.msra.mxu0 %v1737
  %1961 = vmatpush.msra.mxu0 %v1736
  %1962 = vmatmul.f32.gmra.mxu0 %v1944
  %v1963 = vpop.f32.mrf.mxu0
  %v1964 = vadd.f32 0.0, %v1963
  %1965 = vdwg.mxu0
  %v1966 = vadd.f32 %v1940, %v1964
  %v1967 = vxor.u32 %v1966, 2147483648
  %v1968 = vmul.f32 %v1967, 1.442695
  %v1969 = vpow.pop %v1968
  %v1970 = vadd.f32 %v1969, 1.0
  %v1971 = vrcp.pop %v1970
  %v1972 = vmul.f32 %v1970, %v1971
  %v1973 = vsub.f32 1.0, %v1972
  %v1974 = vmul.f32 %v1971, %v1973
  %v1975 = vadd.f32 %v1971, %v1974
  %vm1976 = vweird.f32 %v1970
  %vm1977 = vweird.f32 %v1971
  %vm1978 = vmor %vm1976, %vm1977
  %v1979 = vsel %vm1978, %v1971, %v1975
  %v1980 = vand.u32 2147483647, %v1970
  %vm1981 = vcmp.eq.f32.partialorder %v1980, 8.507059e+37
  %v1982 = vand.u32 %v1970, 2147483648
  %v1983 = vor.u32 1.1754944e-38, %v1982
  %v1984 = vsel %vm1981, %v1983, %v1979
  %v1985 = vmul.f32 1.0, %v1984
  %v1986 = vadd.f32 %v1964, %v1846
  %1988 = vrot.lane.b32.xlu0 %v1986, 64
  %v1989 = vpop.permute.xlu0 %1988
  %v1991 = vmul.f32 %v1985, %v1989
  %1993 = vrot.lane.b32.xlu0 %v1991, 64
  %v1994 = vpop.permute.xlu0 %1993
  %v1996 = vadd.f32 %v1940, %v1994
  %v1997 = vtanh.pop %v1996
  %v1998 = vsub.f32 %v1870, %v1997
  %2000 = vrot.lane.b32.xlu0 %v1998, 96
  %v2001 = vpop.permute.xlu0 %2000
  %v2003 = vmul.f32 %v1985, %v2001
  %2005 = vrot.lane.b32.xlu0 %v2003, 32
  %v2006 = vpop.permute.xlu0 %2005
  %v2008 = vadd.f32 %v1997, %v2006
  %v2009 = vld [vmem:[#allocation2 + $0x20] sm:$0xff]
  %2011 = vrot.lane.b32.xlu0 %v1939, 64
  %v2012 = vpop.permute.xlu0 %2011
  %v2013 = vsel %vm177, %v2012, 0
  %2015 = vmatpush.msra.mxu0 0.0
  %2016 = vmatpush.msra.mxu0 0.0
  %2017 = vmatpush.msra.mxu0 0.0
  %2018 = vmatpush.msra.mxu0 0.0
  %2019 = vmatpush.msra.mxu0 0.0
  %2020 = vmatpush.msra.mxu0 0.0
  %2021 = vmatpush.msra.mxu0 0.0
  %2022 = vmatpush.msra.mxu0 0.0
  %2023 = vmatpush.msra.mxu0 0.0
  %2024 = vmatpush.msra.mxu0 0.0
  %2025 = vmatpush.msra.mxu0 0.0
  %2026 = vmatpush.msra.mxu0 0.0
  %2027 = vmatpush.msra.mxu0 %v1735
  %2028 = vmatpush.msra.mxu0 %v1734
  %2029 = vmatpush.msra.mxu0 %v1733
  %2030 = vmatpush.msra.mxu0 %v1732
  %2031 = vmatmul.f32.gmra.mxu0 %v2013
  %v2032 = vpop.f32.mrf.mxu0
  %v2033 = vadd.f32 0.0, %v2032
  %2034 = vdwg.mxu0
  %v2035 = vadd.f32 %v2009, %v2033
  %v2036 = vxor.u32 %v2035, 2147483648
  %v2037 = vmul.f32 %v2036, 1.442695
  %v2038 = vpow.pop %v2037
  %v2039 = vadd.f32 %v2038, 1.0
  %v2040 = vrcp.pop %v2039
  %v2041 = vmul.f32 %v2039, %v2040
  %v2042 = vsub.f32 1.0, %v2041
  %v2043 = vmul.f32 %v2040, %v2042
  %v2044 = vadd.f32 %v2040, %v2043
  %vm2045 = vweird.f32 %v2039
  %vm2046 = vweird.f32 %v2040
  %vm2047 = vmor %vm2045, %vm2046
  %v2048 = vsel %vm2047, %v2040, %v2044
  %v2049 = vand.u32 2147483647, %v2039
  %vm2050 = vcmp.eq.f32.partialorder %v2049, 8.507059e+37
  %v2051 = vand.u32 %v2039, 2147483648
  %v2052 = vor.u32 1.1754944e-38, %v2051
  %v2053 = vsel %vm2050, %v2052, %v2048
  %v2054 = vmul.f32 1.0, %v2053
  %v2055 = vadd.f32 %v2033, %v162
  %2057 = vrot.lane.b32.xlu0 %v2055, 64
  %v2058 = vpop.permute.xlu0 %2057
  %v2060 = vmul.f32 %v2054, %v2058
  %2062 = vrot.lane.b32.xlu0 %v2060, 64
  %v2063 = vpop.permute.xlu0 %2062
  %v2065 = vadd.f32 %v2009, %v2063
  %v2066 = vtanh.pop %v2065
  %v2067 = vsub.f32 %v1939, %v2066
  %2069 = vrot.lane.b32.xlu0 %v2067, 96
  %v2070 = vpop.permute.xlu0 %2069
  %v2072 = vmul.f32 %v2054, %v2070
  %2074 = vrot.lane.b32.xlu0 %v2072, 32
  %v2075 = vpop.permute.xlu0 %2074
  %v2077 = vadd.f32 %v2066, %v2075
  %v2078 = vld [vmem:[#allocation2 + $0x58] sm:$0xff]
  %2080 = vrot.lane.b32.xlu0 %v2008, 64
  %v2081 = vpop.permute.xlu0 %2080
  %v2082 = vsel %vm177, %v2081, 0
  %2084 = vmatpush.msra.mxu0 0.0
  %2085 = vmatpush.msra.mxu0 0.0
  %2086 = vmatpush.msra.mxu0 0.0
  %2087 = vmatpush.msra.mxu0 0.0
  %2088 = vmatpush.msra.mxu0 0.0
  %2089 = vmatpush.msra.mxu0 0.0
  %2090 = vmatpush.msra.mxu0 0.0
  %2091 = vmatpush.msra.mxu0 0.0
  %2092 = vmatpush.msra.mxu0 0.0
  %2093 = vmatpush.msra.mxu0 0.0
  %2094 = vmatpush.msra.mxu0 0.0
  %2095 = vmatpush.msra.mxu0 0.0
  %2096 = vmatpush.msra.mxu0 %v1739
  %2097 = vmatpush.msra.mxu0 %v1738
  %2098 = vmatpush.msra.mxu0 %v1737
  %2099 = vmatpush.msra.mxu0 %v1736
  %2100 = vmatmul.f32.gmra.mxu0 %v2082
  %v2101 = vpop.f32.mrf.mxu0
  %v2102 = vadd.f32 0.0, %v2101
  %2103 = vdwg.mxu0
  %v2104 = vadd.f32 %v2078, %v2102
  %v2105 = vxor.u32 %v2104, 2147483648
  %v2106 = vmul.f32 %v2105, 1.442695
  %v2107 = vpow.pop %v2106
  %v2108 = vadd.f32 %v2107, 1.0
  %v2109 = vrcp.pop %v2108
  %v2110 = vmul.f32 %v2108, %v2109
  %v2111 = vsub.f32 1.0, %v2110
  %v2112 = vmul.f32 %v2109, %v2111
  %v2113 = vadd.f32 %v2109, %v2112
  %vm2114 = vweird.f32 %v2108
  %vm2115 = vweird.f32 %v2109
  %vm2116 = vmor %vm2114, %vm2115
  %v2117 = vsel %vm2116, %v2109, %v2113
  %v2118 = vand.u32 2147483647, %v2108
  %vm2119 = vcmp.eq.f32.partialorder %v2118, 8.507059e+37
  %v2120 = vand.u32 %v2108, 2147483648
  %v2121 = vor.u32 1.1754944e-38, %v2120
  %v2122 = vsel %vm2119, %v2121, %v2117
  %v2123 = vmul.f32 1.0, %v2122
  %v2124 = vadd.f32 %v2102, %v1846
  %2126 = vrot.lane.b32.xlu0 %v2124, 64
  %v2127 = vpop.permute.xlu0 %2126
  %v2129 = vmul.f32 %v2123, %v2127
  %2131 = vrot.lane.b32.xlu0 %v2129, 64
  %v2132 = vpop.permute.xlu0 %2131
  %v2134 = vadd.f32 %v2078, %v2132
  %v2135 = vtanh.pop %v2134
  %v2136 = vsub.f32 %v2008, %v2135
  %2138 = vrot.lane.b32.xlu0 %v2136, 96
  %v2139 = vpop.permute.xlu0 %2138
  %v2141 = vmul.f32 %v2123, %v2139
  %2143 = vrot.lane.b32.xlu0 %v2141, 32
  %v2144 = vpop.permute.xlu0 %2143
  %v2146 = vadd.f32 %v2135, %v2144
  %v2147 = vld [vmem:[#allocation2 + $0x30] sm:$0xff]
  %2149 = vrot.lane.b32.xlu0 %v2077, 64
  %v2150 = vpop.permute.xlu0 %2149
  %v2151 = vsel %vm177, %v2150, 0
  %2153 = vmatpush.msra.mxu0 0.0
  %2154 = vmatpush.msra.mxu0 0.0
  %2155 = vmatpush.msra.mxu0 0.0
  %2156 = vmatpush.msra.mxu0 0.0
  %2157 = vmatpush.msra.mxu0 0.0
  %2158 = vmatpush.msra.mxu0 0.0
  %2159 = vmatpush.msra.mxu0 0.0
  %2160 = vmatpush.msra.mxu0 0.0
  %2161 = vmatpush.msra.mxu0 0.0
  %2162 = vmatpush.msra.mxu0 0.0
  %2163 = vmatpush.msra.mxu0 0.0
  %2164 = vmatpush.msra.mxu0 0.0
  %2165 = vmatpush.msra.mxu0 %v1735
  %2166 = vmatpush.msra.mxu0 %v1734
  %2167 = vmatpush.msra.mxu0 %v1733
  %2168 = vmatpush.msra.mxu0 %v1732
  %2169 = vmatmul.f32.gmra.mxu0 %v2151
  %v2170 = vpop.f32.mrf.mxu0
  %v2171 = vadd.f32 0.0, %v2170
  %2172 = vdwg.mxu0
  %v2173 = vadd.f32 %v2147, %v2171
  %v2174 = vxor.u32 %v2173, 2147483648
  %v2175 = vmul.f32 %v2174, 1.442695
  %v2176 = vpow.pop %v2175
  %v2177 = vadd.f32 %v2176, 1.0
  %v2178 = vrcp.pop %v2177
  %v2179 = vmul.f32 %v2177, %v2178
  %v2180 = vsub.f32 1.0, %v2179
  %v2181 = vmul.f32 %v2178, %v2180
  %v2182 = vadd.f32 %v2178, %v2181
  %vm2183 = vweird.f32 %v2177
  %vm2184 = vweird.f32 %v2178
  %vm2185 = vmor %vm2183, %vm2184
  %v2186 = vsel %vm2185, %v2178, %v2182
  %v2187 = vand.u32 2147483647, %v2177
  %vm2188 = vcmp.eq.f32.partialorder %v2187, 8.507059e+37
  %v2189 = vand.u32 %v2177, 2147483648
  %v2190 = vor.u32 1.1754944e-38, %v2189
  %v2191 = vsel %vm2188, %v2190, %v2186
  %v2192 = vmul.f32 1.0, %v2191
  %v2193 = vadd.f32 %v2171, %v162
  %2195 = vrot.lane.b32.xlu0 %v2193, 64
  %v2196 = vpop.permute.xlu0 %2195
  %v2198 = vmul.f32 %v2192, %v2196
  %2200 = vrot.lane.b32.xlu0 %v2198, 64
  %v2201 = vpop.permute.xlu0 %2200
  %v2203 = vadd.f32 %v2147, %v2201
  %v2204 = vtanh.pop %v2203
  %v2205 = vsub.f32 %v2077, %v2204
  %2207 = vrot.lane.b32.xlu0 %v2205, 96
  %v2208 = vpop.permute.xlu0 %2207
  %v2210 = vmul.f32 %v2192, %v2208
  %2212 = vrot.lane.b32.xlu0 %v2210, 32
  %v2213 = vpop.permute.xlu0 %2212
  %v2215 = vadd.f32 %v2204, %v2213
  %v2216 = vld [vmem:[#allocation2 + $0x48] sm:$0xff]
  %2218 = vrot.lane.b32.xlu0 %v2146, 64
  %v2219 = vpop.permute.xlu0 %2218
  %v2220 = vsel %vm177, %v2219, 0
  %2222 = vmatpush.msra.mxu0 0.0
  %2223 = vmatpush.msra.mxu0 0.0
  %2224 = vmatpush.msra.mxu0 0.0
  %2225 = vmatpush.msra.mxu0 0.0
  %2226 = vmatpush.msra.mxu0 0.0
  %2227 = vmatpush.msra.mxu0 0.0
  %2228 = vmatpush.msra.mxu0 0.0
  %2229 = vmatpush.msra.mxu0 0.0
  %2230 = vmatpush.msra.mxu0 0.0
  %2231 = vmatpush.msra.mxu0 0.0
  %2232 = vmatpush.msra.mxu0 0.0
  %2233 = vmatpush.msra.mxu0 0.0
  %2234 = vmatpush.msra.mxu0 %v1739
  %2235 = vmatpush.msra.mxu0 %v1738
  %2236 = vmatpush.msra.mxu0 %v1737
  %2237 = vmatpush.msra.mxu0 %v1736
  %2238 = vmatmul.f32.gmra.mxu0 %v2220
  %v2239 = vpop.f32.mrf.mxu0
  %v2240 = vadd.f32 0.0, %v2239
  %2241 = vdwg.mxu0
  %v2242 = vadd.f32 %v2216, %v2240
  %v2243 = vxor.u32 %v2242, 2147483648
  %v2244 = vmul.f32 %v2243, 1.442695
  %v2245 = vpow.pop %v2244
  %v2246 = vadd.f32 %v2245, 1.0
  %v2247 = vrcp.pop %v2246
  %v2248 = vmul.f32 %v2246, %v2247
  %v2249 = vsub.f32 1.0, %v2248
  %v2250 = vmul.f32 %v2247, %v2249
  %v2251 = vadd.f32 %v2247, %v2250
  %vm2252 = vweird.f32 %v2246
  %vm2253 = vweird.f32 %v2247
  %vm2254 = vmor %vm2252, %vm2253
  %v2255 = vsel %vm2254, %v2247, %v2251
  %v2256 = vand.u32 2147483647, %v2246
  %vm2257 = vcmp.eq.f32.partialorder %v2256, 8.507059e+37
  %v2258 = vand.u32 %v2246, 2147483648
  %v2259 = vor.u32 1.1754944e-38, %v2258
  %v2260 = vsel %vm2257, %v2259, %v2255
  %v2261 = vmul.f32 1.0, %v2260
  %v2262 = vadd.f32 %v2240, %v1846
  %2264 = vrot.lane.b32.xlu0 %v2262, 64
  %v2265 = vpop.permute.xlu0 %2264
  %v2267 = vmul.f32 %v2261, %v2265
  %2269 = vrot.lane.b32.xlu0 %v2267, 64
  %v2270 = vpop.permute.xlu0 %2269
  %v2272 = vadd.f32 %v2216, %v2270
  %v2273 = vtanh.pop %v2272
  %v2274 = vsub.f32 %v2146, %v2273
  %2276 = vrot.lane.b32.xlu0 %v2274, 96
  %v2277 = vpop.permute.xlu0 %2276
  %v2279 = vmul.f32 %v2261, %v2277
  %2281 = vrot.lane.b32.xlu0 %v2279, 32
  %v2282 = vpop.permute.xlu0 %2281
  %v2284 = vadd.f32 %v2273, %v2282
  %v2285 = vld [vmem:[#allocation2 + $0x40] sm:$0xff]
  %2287 = vrot.lane.b32.xlu0 %v2215, 64
  %v2288 = vpop.permute.xlu0 %2287
  %v2289 = vsel %vm177, %v2288, 0
  %2291 = vmatpush.msra.mxu0 0.0
  %2292 = vmatpush.msra.mxu0 0.0
  %2293 = vmatpush.msra.mxu0 0.0
  %2294 = vmatpush.msra.mxu0 0.0
  %2295 = vmatpush.msra.mxu0 0.0
  %2296 = vmatpush.msra.mxu0 0.0
  %2297 = vmatpush.msra.mxu0 0.0
  %2298 = vmatpush.msra.mxu0 0.0
  %2299 = vmatpush.msra.mxu0 0.0
  %2300 = vmatpush.msra.mxu0 0.0
  %2301 = vmatpush.msra.mxu0 0.0
  %2302 = vmatpush.msra.mxu0 0.0
  %2303 = vmatpush.msra.mxu0 %v1735
  %2304 = vmatpush.msra.mxu0 %v1734
  %2305 = vmatpush.msra.mxu0 %v1733
  %2306 = vmatpush.msra.mxu0 %v1732
  %2307 = vmatmul.f32.gmra.mxu0 %v2289
  %v2308 = vpop.f32.mrf.mxu0
  %v2309 = vadd.f32 0.0, %v2308
  %2310 = vdwg.mxu0
  %v2311 = vadd.f32 %v2285, %v2309
  %v2312 = vxor.u32 %v2311, 2147483648
  %v2313 = vmul.f32 %v2312, 1.442695
  %v2314 = vpow.pop %v2313
  %v2315 = vadd.f32 %v2314, 1.0
  %v2316 = vrcp.pop %v2315
  %v2317 = vmul.f32 %v2315, %v2316
  %v2318 = vsub.f32 1.0, %v2317
  %v2319 = vmul.f32 %v2316, %v2318
  %v2320 = vadd.f32 %v2316, %v2319
  %vm2321 = vweird.f32 %v2315
  %vm2322 = vweird.f32 %v2316
  %vm2323 = vmor %vm2321, %vm2322
  %v2324 = vsel %vm2323, %v2316, %v2320
  %v2325 = vand.u32 2147483647, %v2315
  %vm2326 = vcmp.eq.f32.partialorder %v2325, 8.507059e+37
  %v2327 = vand.u32 %v2315, 2147483648
  %v2328 = vor.u32 1.1754944e-38, %v2327
  %v2329 = vsel %vm2326, %v2328, %v2324
  %v2330 = vmul.f32 1.0, %v2329
  %v2331 = vadd.f32 %v2309, %v162
  %2333 = vrot.lane.b32.xlu0 %v2331, 64
  %v2334 = vpop.permute.xlu0 %2333
  %v2336 = vmul.f32 %v2330, %v2334
  %2338 = vrot.lane.b32.xlu0 %v2336, 64
  %v2339 = vpop.permute.xlu0 %2338
  %v2341 = vadd.f32 %v2285, %v2339
  %v2342 = vtanh.pop %v2341
  %v2343 = vsub.f32 %v2215, %v2342
  %2345 = vrot.lane.b32.xlu0 %v2343, 96
  %v2346 = vpop.permute.xlu0 %2345
  %v2348 = vmul.f32 %v2330, %v2346
  %2350 = vrot.lane.b32.xlu0 %v2348, 32
  %v2351 = vpop.permute.xlu0 %2350
  %v2353 = vadd.f32 %v2342, %v2351
  %v2354 = vld [vmem:[#allocation2 + $0x38] sm:$0xff]
  %2356 = vrot.lane.b32.xlu0 %v2284, 64
  %v2357 = vpop.permute.xlu0 %2356
  %v2358 = vsel %vm177, %v2357, 0
  %2360 = vmatpush.msra.mxu0 0.0
  %2361 = vmatpush.msra.mxu0 0.0
  %2362 = vmatpush.msra.mxu0 0.0
  %2363 = vmatpush.msra.mxu0 0.0
  %2364 = vmatpush.msra.mxu0 0.0
  %2365 = vmatpush.msra.mxu0 0.0
  %2366 = vmatpush.msra.mxu0 0.0
  %2367 = vmatpush.msra.mxu0 0.0
  %2368 = vmatpush.msra.mxu0 0.0
  %2369 = vmatpush.msra.mxu0 0.0
  %2370 = vmatpush.msra.mxu0 0.0
  %2371 = vmatpush.msra.mxu0 0.0
  %2372 = vmatpush.msra.mxu0 %v1739
  %2373 = vmatpush.msra.mxu0 %v1738
  %2374 = vmatpush.msra.mxu0 %v1737
  %2375 = vmatpush.msra.mxu0 %v1736
  %2376 = vmatmul.f32.gmra.mxu0 %v2358
  %v2377 = vpop.f32.mrf.mxu0
  %v2378 = vadd.f32 0.0, %v2377
  %2379 = vdwg.mxu0
  %v2380 = vadd.f32 %v2354, %v2378
  %v2381 = vxor.u32 %v2380, 2147483648
  %v2382 = vmul.f32 %v2381, 1.442695
  %v2383 = vpow.pop %v2382
  %v2384 = vadd.f32 %v2383, 1.0
  %v2385 = vrcp.pop %v2384
  %v2386 = vmul.f32 %v2384, %v2385
  %v2387 = vsub.f32 1.0, %v2386
  %v2388 = vmul.f32 %v2385, %v2387
  %v2389 = vadd.f32 %v2385, %v2388
  %vm2390 = vweird.f32 %v2384
  %vm2391 = vweird.f32 %v2385
  %vm2392 = vmor %vm2390, %vm2391
  %v2393 = vsel %vm2392, %v2385, %v2389
  %v2394 = vand.u32 2147483647, %v2384
  %vm2395 = vcmp.eq.f32.partialorder %v2394, 8.507059e+37
  %v2396 = vand.u32 %v2384, 2147483648
  %v2397 = vor.u32 1.1754944e-38, %v2396
  %v2398 = vsel %vm2395, %v2397, %v2393
  %v2399 = vmul.f32 1.0, %v2398
  %v2400 = vadd.f32 %v2378, %v1846
  %2402 = vrot.lane.b32.xlu0 %v2400, 64
  %v2403 = vpop.permute.xlu0 %2402
  %v2405 = vmul.f32 %v2399, %v2403
  %2407 = vrot.lane.b32.xlu0 %v2405, 64
  %v2408 = vpop.permute.xlu0 %2407
  %v2410 = vadd.f32 %v2354, %v2408
  %v2411 = vtanh.pop %v2410
  %v2412 = vsub.f32 %v2284, %v2411
  %2414 = vrot.lane.b32.xlu0 %v2412, 96
  %v2415 = vpop.permute.xlu0 %2414
  %v2417 = vmul.f32 %v2399, %v2415
  %2419 = vrot.lane.b32.xlu0 %v2417, 32
  %v2420 = vpop.permute.xlu0 %2419
  %v2422 = vadd.f32 %v2411, %v2420
  %v2423 = vld [vmem:[#allocation2 + $0x50] sm:$0xff]
  %2425 = vrot.lane.b32.xlu0 %v2353, 64
  %v2426 = vpop.permute.xlu0 %2425
  %v2427 = vsel %vm177, %v2426, 0
  %2429 = vmatpush.msra.mxu0 0.0
  %2430 = vmatpush.msra.mxu0 0.0
  %2431 = vmatpush.msra.mxu0 0.0
  %2432 = vmatpush.msra.mxu0 0.0
  %2433 = vmatpush.msra.mxu0 0.0
  %2434 = vmatpush.msra.mxu0 0.0
  %2435 = vmatpush.msra.mxu0 0.0
  %2436 = vmatpush.msra.mxu0 0.0
  %2437 = vmatpush.msra.mxu0 0.0
  %2438 = vmatpush.msra.mxu0 0.0
  %2439 = vmatpush.msra.mxu0 0.0
  %2440 = vmatpush.msra.mxu0 0.0
  %2441 = vmatpush.msra.mxu0 %v1735
  %2442 = vmatpush.msra.mxu0 %v1734
  %2443 = vmatpush.msra.mxu0 %v1733
  %2444 = vmatpush.msra.mxu0 %v1732
  %2445 = vmatmul.f32.gmra.mxu0 %v2427
  %v2446 = vpop.f32.mrf.mxu0
  %v2447 = vadd.f32 0.0, %v2446
  %2448 = vdwg.mxu0
  %v2449 = vadd.f32 %v2423, %v2447
  %v2450 = vxor.u32 %v2449, 2147483648
  %v2451 = vmul.f32 %v2450, 1.442695
  %v2452 = vpow.pop %v2451
  %v2453 = vadd.f32 %v2452, 1.0
  %v2454 = vrcp.pop %v2453
  %v2455 = vmul.f32 %v2453, %v2454
  %v2456 = vsub.f32 1.0, %v2455
  %v2457 = vmul.f32 %v2454, %v2456
  %v2458 = vadd.f32 %v2454, %v2457
  %vm2459 = vweird.f32 %v2453
  %vm2460 = vweird.f32 %v2454
  %vm2461 = vmor %vm2459, %vm2460
  %v2462 = vsel %vm2461, %v2454, %v2458
  %v2463 = vand.u32 2147483647, %v2453
  %vm2464 = vcmp.eq.f32.partialorder %v2463, 8.507059e+37
  %v2465 = vand.u32 %v2453, 2147483648
  %v2466 = vor.u32 1.1754944e-38, %v2465
  %v2467 = vsel %vm2464, %v2466, %v2462
  %v2468 = vmul.f32 1.0, %v2467
  %v2469 = vadd.f32 %v2447, %v162
  %2471 = vrot.lane.b32.xlu0 %v2469, 64
  %v2472 = vpop.permute.xlu0 %2471
  %v2474 = vmul.f32 %v2468, %v2472
  %2476 = vrot.lane.b32.xlu0 %v2474, 64
  %v2477 = vpop.permute.xlu0 %2476
  %v2479 = vadd.f32 %v2423, %v2477
  %v2480 = vtanh.pop %v2479
  %v2481 = vsub.f32 %v2353, %v2480
  %2483 = vrot.lane.b32.xlu0 %v2481, 96
  %v2484 = vpop.permute.xlu0 %2483
  %v2486 = vmul.f32 %v2468, %v2484
  %2488 = vrot.lane.b32.xlu0 %v2486, 32
  %v2489 = vpop.permute.xlu0 %2488
  %v2491 = vadd.f32 %v2480, %v2489
  %v2492 = vld [vmem:[#allocation2 + $0x28] sm:$0xff]
  %2494 = vrot.lane.b32.xlu0 %v2422, 64
  %v2495 = vpop.permute.xlu0 %2494
  %v2496 = vsel %vm177, %v2495, 0
  %2498 = vmatpush.msra.mxu0 0.0
  %2499 = vmatpush.msra.mxu0 0.0
  %2500 = vmatpush.msra.mxu0 0.0
  %2501 = vmatpush.msra.mxu0 0.0
  %2502 = vmatpush.msra.mxu0 0.0
  %2503 = vmatpush.msra.mxu0 0.0
  %2504 = vmatpush.msra.mxu0 0.0
  %2505 = vmatpush.msra.mxu0 0.0
  %2506 = vmatpush.msra.mxu0 0.0
  %2507 = vmatpush.msra.mxu0 0.0
  %2508 = vmatpush.msra.mxu0 0.0
  %2509 = vmatpush.msra.mxu0 0.0
  %2510 = vmatpush.msra.mxu0 %v1739
  %2511 = vmatpush.msra.mxu0 %v1738
  %2512 = vmatpush.msra.mxu0 %v1737
  %2513 = vmatpush.msra.mxu0 %v1736
  %2514 = vmatmul.f32.gmra.mxu0 %v2496
  %v2515 = vpop.f32.mrf.mxu0
  %v2516 = vadd.f32 0.0, %v2515
  %2517 = vdwg.mxu0
  %v2518 = vadd.f32 %v2492, %v2516
  %v2519 = vxor.u32 %v2518, 2147483648
  %v2520 = vmul.f32 %v2519, 1.442695
  %v2521 = vpow.pop %v2520
  %v2522 = vadd.f32 %v2521, 1.0
  %v2523 = vrcp.pop %v2522
  %v2524 = vmul.f32 %v2522, %v2523
  %v2525 = vsub.f32 1.0, %v2524
  %v2526 = vmul.f32 %v2523, %v2525
  %v2527 = vadd.f32 %v2523, %v2526
  %vm2528 = vweird.f32 %v2522
  %vm2529 = vweird.f32 %v2523
  %vm2530 = vmor %vm2528, %vm2529
  %v2531 = vsel %vm2530, %v2523, %v2527
  %v2532 = vand.u32 2147483647, %v2522
  %vm2533 = vcmp.eq.f32.partialorder %v2532, 8.507059e+37
  %v2534 = vand.u32 %v2522, 2147483648
  %v2535 = vor.u32 1.1754944e-38, %v2534
  %v2536 = vsel %vm2533, %v2535, %v2531
  %v2537 = vmul.f32 1.0, %v2536
  %v2538 = vadd.f32 %v2516, %v1846
  %2540 = vrot.lane.b32.xlu0 %v2538, 64
  %v2541 = vpop.permute.xlu0 %2540
  %v2543 = vmul.f32 %v2537, %v2541
  %2545 = vrot.lane.b32.xlu0 %v2543, 64
  %v2546 = vpop.permute.xlu0 %2545
  %v2548 = vadd.f32 %v2492, %v2546
  %v2549 = vtanh.pop %v2548
  %v2550 = vsub.f32 %v2422, %v2549
  %2552 = vrot.lane.b32.xlu0 %v2550, 96
  %v2553 = vpop.permute.xlu0 %2552
  %v2555 = vmul.f32 %v2537, %v2553
  %2557 = vrot.lane.b32.xlu0 %v2555, 32
  %v2558 = vpop.permute.xlu0 %2557
  %v2560 = vadd.f32 %v2549, %v2558
  %v2561 = vld [vmem:[#allocation2 + $0x60] sm:$0xff]
  %2563 = vrot.lane.b32.xlu0 %v2491, 64
  %v2564 = vpop.permute.xlu0 %2563
  %v2565 = vsel %vm177, %v2564, 0
  %2567 = vmatpush.msra.mxu0 0.0
  %2568 = vmatpush.msra.mxu0 0.0
  %2569 = vmatpush.msra.mxu0 0.0
  %2570 = vmatpush.msra.mxu0 0.0
  %2571 = vmatpush.msra.mxu0 0.0
  %2572 = vmatpush.msra.mxu0 0.0
  %2573 = vmatpush.msra.mxu0 0.0
  %2574 = vmatpush.msra.mxu0 0.0
  %2575 = vmatpush.msra.mxu0 0.0
  %2576 = vmatpush.msra.mxu0 0.0
  %2577 = vmatpush.msra.mxu0 0.0
  %2578 = vmatpush.msra.mxu0 0.0
  %2579 = vmatpush.msra.mxu0 %v1735
  %2580 = vmatpush.msra.mxu0 %v1734
  %2581 = vmatpush.msra.mxu0 %v1733
  %2582 = vmatpush.msra.mxu0 %v1732
  %2583 = vmatmul.f32.gmra.mxu0 %v2565
  %v2584 = vpop.f32.mrf.mxu0
  %v2585 = vadd.f32 0.0, %v2584
  %2586 = vdwg.mxu0
  %v2587 = vadd.f32 %v2561, %v2585
  %v2588 = vxor.u32 %v2587, 2147483648
  %v2589 = vmul.f32 %v2588, 1.442695
  %v2590 = vpow.pop %v2589
  %v2591 = vadd.f32 %v2590, 1.0
  %v2592 = vrcp.pop %v2591
  %v2593 = vmul.f32 %v2591, %v2592
  %v2594 = vsub.f32 1.0, %v2593
  %v2595 = vmul.f32 %v2592, %v2594
  %v2596 = vadd.f32 %v2592, %v2595
  %vm2597 = vweird.f32 %v2591
  %vm2598 = vweird.f32 %v2592
  %vm2599 = vmor %vm2597, %vm2598
  %v2600 = vsel %vm2599, %v2592, %v2596
  %v2601 = vand.u32 2147483647, %v2591
  %vm2602 = vcmp.eq.f32.partialorder %v2601, 8.507059e+37
  %v2603 = vand.u32 %v2591, 2147483648
  %v2604 = vor.u32 1.1754944e-38, %v2603
  %v2605 = vsel %vm2602, %v2604, %v2600
  %v2606 = vmul.f32 1.0, %v2605
  %v2607 = vadd.f32 %v2585, %v162
  %2609 = vrot.lane.b32.xlu0 %v2607, 64
  %v2610 = vpop.permute.xlu0 %2609
  %v2612 = vmul.f32 %v2606, %v2610
  %2614 = vrot.lane.b32.xlu0 %v2612, 64
  %v2615 = vpop.permute.xlu0 %2614
  %v2617 = vadd.f32 %v2561, %v2615
  %v2618 = vtanh.pop %v2617
  %v2619 = vsub.f32 %v2491, %v2618
  %2621 = vrot.lane.b32.xlu0 %v2619, 96
  %v2622 = vpop.permute.xlu0 %2621
  %v2624 = vmul.f32 %v2606, %v2622
  %2626 = vrot.lane.b32.xlu0 %v2624, 32
  %v2627 = vpop.permute.xlu0 %2626
  %v2629 = vadd.f32 %v2618, %v2627
  %v2630 = vld [vmem:[#allocation2 + $0x18] sm:$0xff]
  %2632 = vrot.lane.b32.xlu0 %v2560, 64
  %v2633 = vpop.permute.xlu0 %2632
  %v2634 = vsel %vm177, %v2633, 0
  %2636 = vmatpush.msra.mxu0 0.0
  %2637 = vmatpush.msra.mxu0 0.0
  %2638 = vmatpush.msra.mxu0 0.0
  %2639 = vmatpush.msra.mxu0 0.0
  %2640 = vmatpush.msra.mxu0 0.0
  %2641 = vmatpush.msra.mxu0 0.0
  %2642 = vmatpush.msra.mxu0 0.0
  %2643 = vmatpush.msra.mxu0 0.0
  %2644 = vmatpush.msra.mxu0 0.0
  %2645 = vmatpush.msra.mxu0 0.0
  %2646 = vmatpush.msra.mxu0 0.0
  %2647 = vmatpush.msra.mxu0 0.0
  %2648 = vmatpush.msra.mxu0 %v1739
  %2649 = vmatpush.msra.mxu0 %v1738
  %2650 = vmatpush.msra.mxu0 %v1737
  %2651 = vmatpush.msra.mxu0 %v1736
  %2652 = vmatmul.f32.gmra.mxu0 %v2634
  %v2653 = vpop.f32.mrf.mxu0
  %v2654 = vadd.f32 0.0, %v2653
  %2655 = vdwg.mxu0
  %v2656 = vadd.f32 %v2630, %v2654
  %v2657 = vxor.u32 %v2656, 2147483648
  %v2658 = vmul.f32 %v2657, 1.442695
  %v2659 = vpow.pop %v2658
  %v2660 = vadd.f32 %v2659, 1.0
  %v2661 = vrcp.pop %v2660
  %v2662 = vmul.f32 %v2660, %v2661
  %v2663 = vsub.f32 1.0, %v2662
  %v2664 = vmul.f32 %v2661, %v2663
  %v2665 = vadd.f32 %v2661, %v2664
  %vm2666 = vweird.f32 %v2660
  %vm2667 = vweird.f32 %v2661
  %vm2668 = vmor %vm2666, %vm2667
  %v2669 = vsel %vm2668, %v2661, %v2665
  %v2670 = vand.u32 2147483647, %v2660
  %vm2671 = vcmp.eq.f32.partialorder %v2670, 8.507059e+37
  %v2672 = vand.u32 %v2660, 2147483648
  %v2673 = vor.u32 1.1754944e-38, %v2672
  %v2674 = vsel %vm2671, %v2673, %v2669
  %v2675 = vmul.f32 1.0, %v2674
  %v2676 = vadd.f32 %v2654, %v1846
  %2678 = vrot.lane.b32.xlu0 %v2676, 64
  %v2679 = vpop.permute.xlu0 %2678
  %v2681 = vmul.f32 %v2675, %v2679
  %2683 = vrot.lane.b32.xlu0 %v2681, 64
  %v2684 = vpop.permute.xlu0 %2683
  %v2686 = vadd.f32 %v2630, %v2684
  %v2687 = vtanh.pop %v2686
  %v2688 = vsub.f32 %v2560, %v2687
  %2690 = vrot.lane.b32.xlu0 %v2688, 96
  %v2691 = vpop.permute.xlu0 %2690
  %v2693 = vmul.f32 %v2675, %v2691
  %2695 = vrot.lane.b32.xlu0 %v2693, 32
  %v2696 = vpop.permute.xlu0 %2695
  %v2698 = vadd.f32 %v2687, %v2696
  %v2699 = vld [vmem:[#allocation2 + $0x70] sm:$0xff]
  %2701 = vrot.lane.b32.xlu0 %v2629, 64
  %v2702 = vpop.permute.xlu0 %2701
  %v2703 = vsel %vm177, %v2702, 0
  %2705 = vmatpush.msra.mxu0 0.0
  %2706 = vmatpush.msra.mxu0 0.0
  %2707 = vmatpush.msra.mxu0 0.0
  %2708 = vmatpush.msra.mxu0 0.0
  %2709 = vmatpush.msra.mxu0 0.0
  %2710 = vmatpush.msra.mxu0 0.0
  %2711 = vmatpush.msra.mxu0 0.0
  %2712 = vmatpush.msra.mxu0 0.0
  %2713 = vmatpush.msra.mxu0 0.0
  %2714 = vmatpush.msra.mxu0 0.0
  %2715 = vmatpush.msra.mxu0 0.0
  %2716 = vmatpush.msra.mxu0 0.0
  %2717 = vmatpush.msra.mxu0 %v1735
  %2718 = vmatpush.msra.mxu0 %v1734
  %2719 = vmatpush.msra.mxu0 %v1733
  %2720 = vmatpush.msra.mxu0 %v1732
  %2721 = vmatmul.f32.gmra.mxu0 %v2703
  %v2722 = vpop.f32.mrf.mxu0
  %v2723 = vadd.f32 0.0, %v2722
  %2724 = vdwg.mxu0
  %v2725 = vadd.f32 %v2699, %v2723
  %v2726 = vxor.u32 %v2725, 2147483648
  %v2727 = vmul.f32 %v2726, 1.442695
  %v2728 = vpow.pop %v2727
  %v2729 = vadd.f32 %v2728, 1.0
  %v2730 = vrcp.pop %v2729
  %v2731 = vmul.f32 %v2729, %v2730
  %v2732 = vsub.f32 1.0, %v2731
  %v2733 = vmul.f32 %v2730, %v2732
  %v2734 = vadd.f32 %v2730, %v2733
  %vm2735 = vweird.f32 %v2729
  %vm2736 = vweird.f32 %v2730
  %vm2737 = vmor %vm2735, %vm2736
  %v2738 = vsel %vm2737, %v2730, %v2734
  %v2739 = vand.u32 2147483647, %v2729
  %vm2740 = vcmp.eq.f32.partialorder %v2739, 8.507059e+37
  %v2741 = vand.u32 %v2729, 2147483648
  %v2742 = vor.u32 1.1754944e-38, %v2741
  %v2743 = vsel %vm2740, %v2742, %v2738
  %v2744 = vmul.f32 1.0, %v2743
  %v2745 = vadd.f32 %v2723, %v162
  %2747 = vrot.lane.b32.xlu0 %v2745, 64
  %v2748 = vpop.permute.xlu0 %2747
  %v2750 = vmul.f32 %v2744, %v2748
  %2752 = vrot.lane.b32.xlu0 %v2750, 64
  %v2753 = vpop.permute.xlu0 %2752
  %v2755 = vadd.f32 %v2699, %v2753
  %v2756 = vtanh.pop %v2755
  %v2757 = vsub.f32 %v2629, %v2756
  %2759 = vrot.lane.b32.xlu0 %v2757, 96
  %v2760 = vpop.permute.xlu0 %2759
  %v2762 = vmul.f32 %v2744, %v2760
  %2764 = vrot.lane.b32.xlu0 %v2762, 32
  %v2765 = vpop.permute.xlu0 %2764
  %v2767 = vadd.f32 %v2756, %v2765
  %v2768 = vld [vmem:[#allocation2 + $0x8] sm:$0xff]
  %2770 = vrot.lane.b32.xlu0 %v2698, 64
  %v2771 = vpop.permute.xlu0 %2770
  %v2772 = vsel %vm177, %v2771, 0
  %2774 = vmatpush.msra.mxu0 0.0
  %2775 = vmatpush.msra.mxu0 0.0
  %2776 = vmatpush.msra.mxu0 0.0
  %2777 = vmatpush.msra.mxu0 0.0
  %2778 = vmatpush.msra.mxu0 0.0
  %2779 = vmatpush.msra.mxu0 0.0
  %2780 = vmatpush.msra.mxu0 0.0
  %2781 = vmatpush.msra.mxu0 0.0
  %2782 = vmatpush.msra.mxu0 0.0
  %2783 = vmatpush.msra.mxu0 0.0
  %2784 = vmatpush.msra.mxu0 0.0
  %2785 = vmatpush.msra.mxu0 0.0
  %2786 = vmatpush.msra.mxu0 %v1739
  %2787 = vmatpush.msra.mxu0 %v1738
  %2788 = vmatpush.msra.mxu0 %v1737
  %2789 = vmatpush.msra.mxu0 %v1736
  %2790 = vmatmul.f32.gmra.mxu0 %v2772
  %v2791 = vpop.f32.mrf.mxu0
  %v2792 = vadd.f32 0.0, %v2791
  %2793 = vdwg.mxu0
  %v2794 = vadd.f32 %v2768, %v2792
  %v2795 = vxor.u32 %v2794, 2147483648
  %v2796 = vmul.f32 %v2795, 1.442695
  %v2797 = vpow.pop %v2796
  %v2798 = vadd.f32 %v2797, 1.0
  %v2799 = vrcp.pop %v2798
  %v2800 = vmul.f32 %v2798, %v2799
  %v2801 = vsub.f32 1.0, %v2800
  %v2802 = vmul.f32 %v2799, %v2801
  %v2803 = vadd.f32 %v2799, %v2802
  %vm2804 = vweird.f32 %v2798
  %vm2805 = vweird.f32 %v2799
  %vm2806 = vmor %vm2804, %vm2805
  %v2807 = vsel %vm2806, %v2799, %v2803
  %v2808 = vand.u32 2147483647, %v2798
  %vm2809 = vcmp.eq.f32.partialorder %v2808, 8.507059e+37
  %v2810 = vand.u32 %v2798, 2147483648
  %v2811 = vor.u32 1.1754944e-38, %v2810
  %v2812 = vsel %vm2809, %v2811, %v2807
  %v2813 = vmul.f32 1.0, %v2812
  %v2814 = vadd.f32 %v2792, %v1846
  %2816 = vrot.lane.b32.xlu0 %v2814, 64
  %v2817 = vpop.permute.xlu0 %2816
  %v2819 = vmul.f32 %v2813, %v2817
  %2821 = vrot.lane.b32.xlu0 %v2819, 64
  %v2822 = vpop.permute.xlu0 %2821
  %v2824 = vadd.f32 %v2768, %v2822
  %v2825 = vtanh.pop %v2824
  %v2826 = vsub.f32 %v2698, %v2825
  %2828 = vrot.lane.b32.xlu0 %v2826, 96
  %v2829 = vpop.permute.xlu0 %2828
  %v2831 = vmul.f32 %v2813, %v2829
  %2833 = vrot.lane.b32.xlu0 %v2831, 32
  %v2834 = vpop.permute.xlu0 %2833
  %v2836 = vadd.f32 %v2825, %v2834
  %2838 = vrot.lane.b32.xlu0 %v2836, 64
  %v2839 = vpop.permute.xlu0 %2838
  %2842 = vrot.lane.b32.xlu0 %v2767, 96
  %v2843 = vpop.permute.xlu0 %2842
  %2845 = vrot.lane.b32.xlu0 %v1373, 32
  %v2846 = vpop.permute.xlu0 %2845
  %v2848 = vsel %vm177, %v2839, %v2843
  %vm2849 = vcmask 523264
  %v2850 = vsel %vm2849, %v2848, %v1439
  %vm2851 = vcmask 785408
  %v2852 = vsel %vm2851, %v2850, %v2846
  %v2853 = vld [vmem:[%s12] sm:$0xff]
  %v2854 = vld [vmem:[%s12 + $0x8] sm:$0xff]
  %v2855 = vld [vmem:[%s12 + $0x10] sm:$0xff]
  %v2856 = vld [vmem:[%s12 + $0x18] sm:$0xff]
  %v2857 = vld [vmem:[%s12 + $0x20] sm:$0xff]
  %v2858 = vld [vmem:[%s12 + $0x28] sm:$0xff]
  %v2859 = vld [vmem:[%s12 + $0x30] sm:$0xff]
  %v2860 = vld [vmem:[%s12 + $0x38] sm:$0xff]
  %v2861 = vld [vmem:[%s12 + $0x40] sm:$0xff]
  %v2862 = vld [vmem:[%s12 + $0x48] sm:$0xff]
  %v2863 = vld [vmem:[%s12 + $0x50] sm:$0xff]
  %v2864 = vld [vmem:[%s12 + $0x58] sm:$0xff]
  %v2865 = vld [vmem:[%s12 + $0x60] sm:$0xff]
  %v2866 = vld [vmem:[%s12 + $0x68] sm:$0xff]
  %v2867 = vld [vmem:[%s12 + $0x70] sm:$0xff]
  %v2868 = vld [vmem:[%s12 + $0x78] sm:$0xff]
  %v2869 = vld [vmem:[%s13] sm:$0x1]
  %v2871 = vperm.slane %v2869, 0
  %2873 = vmatpush.msra.mxu0 %v2868
  %2874 = vmatpush.msra.mxu0 %v2867
  %2875 = vmatpush.msra.mxu0 %v2866
  %2876 = vmatpush.msra.mxu0 %v2865
  %2877 = vmatpush.msra.mxu0 %v2864
  %2878 = vmatpush.msra.mxu0 %v2863
  %2879 = vmatpush.msra.mxu0 %v2862
  %2880 = vmatpush.msra.mxu0 %v2861
  %2881 = vmatpush.msra.mxu0 %v2860
  %2882 = vmatpush.msra.mxu0 %v2859
  %2883 = vmatpush.msra.mxu0 %v2858
  %2884 = vmatpush.msra.mxu0 %v2857
  %2885 = vmatpush.msra.mxu0 %v2856
  %2886 = vmatpush.msra.mxu0 %v2855
  %2887 = vmatpush.msra.mxu0 %v2854
  %2888 = vmatpush.msra.mxu0 %v2853
  %2889 = vmatmul.f32.gmra.mxu0 %v2852
  %v2890 = vpop.f32.mrf.mxu0
  %v2891 = vadd.f32 %v2871, %v2890
  %2892 = vdwg.mxu0
  %v2893 = vmax.f32 %v2891, 0.0
  %2894 = vst.msk [vmem:[%s14] sm:$0xff] %vm177, %v2893
  // Predicated region
  $region58: #{encoder_forward.1} parent=0 // pred_check
    _
  $region59: #{encoder_forward.1} parent=0 // pred_check_branch
    %2896 = sbr.rel (0) target = $region61
  $region60: #{encoder_forward.1} parent=0 // pred_region
    _
  $region61: #{encoder_forward.1} parent=0 // pred_fallthru
    _
  // Predicated region
  $region62: #{encoder_forward.1} parent=0 // pred_check
    _
  $region63: #{encoder_forward.1} parent=0 // pred_check_branch
    %2898 = sbr.rel (0) target = $region65
  $region64: #{encoder_forward.1} parent=0 // pred_region
    _
  $region65: #{encoder_forward.1} parent=0 // pred_fallthru
    _

</llo_original>
